<compile_context>
chip_gen: v7x
topology: tpu7x:2x2x1
jax: 0.10.0
libtpu: 0.0.40
codegen_flags: <defaults>
</compile_context>

<pallas_src>
import functools

import jax
import jax.numpy as jnp
from jax.experimental import pallas as pl
from jax.experimental.pallas import tpu as pltpu

# (name, Cin, Cout, maxpool_before_conv) — exactly the VGG19 "features" slices
# used by the PyTorch module (conv3x3 pad=1 + ReLU, with 2x2/2 max-pools).
LAYERS = [
    ("relu1_1",   3,  64, False),
    ("relu1_2",  64,  64, False),
    ("relu2_1",  64, 128, True),
    ("relu2_2", 128, 128, False),
    ("relu3_1", 128, 256, True),
    ("relu3_2", 256, 256, False),
    ("relu3_3", 256, 256, False),
    ("relu3_4", 256, 256, False),
    ("relu4_1", 256, 512, True),
    ("relu4_2", 512, 512, False),
    ("relu4_3", 512, 512, False),
    ("relu4_4", 512, 512, False),
    ("relu5_1", 512, 512, True),
    ("relu5_2", 512, 512, False),
    ("relu5_3", 512, 512, False),
    ("relu5_4", 512, 512, False),
]

_CB_MAX = 256   # Cout tile (lane) width: 256 for the 2x256x256 MXU on v6e/v7x.
_BQ_CAP = 512   # flattened spatial positions (GEMM rows) per tile.


def _round_up(x, m):
    return ((x + m - 1) // m) * m


# ----------------------------- Pallas kernels ------------------------------

def _conv3x3_kernel(xa_ref, xb_ref, w_ref, b_ref, o_ref, *, tap_offsets, cin, bq):
    """9-tap accumulated conv-as-GEMM on one (row-block, cout-block) tile.

    xa_ref: (1, bq, Cin)   current block of padded+flattened activations (bf16)
    xb_ref: (1, bq, Cin)   next block (supplies the 2-row halo)          (bf16)
    w_ref : (9*Cin, cb)    weights, rows ordered tap-major               (bf16)
    b_ref : (1, cb)        bias                                          (f32)
    o_ref : (1, bq, cb)    output tile                                   (bf16)
    """
    x2 = jnp.concatenate([xa_ref[0], xb_ref[0]], axis=0)       # (2*bq, Cin)
    w = w_ref[...]                                             # (9*Cin, cb)
    cb = o_ref.shape[2]
    acc = jnp.zeros((bq, cb), jnp.float32)
    for t, off in enumerate(tap_offsets):                      # 9 static taps
        lhs = jax.lax.slice(x2, (off, 0), (off + bq, cin))     # (bq, Cin)
        rhs = jax.lax.slice(w, (t * cin, 0), ((t + 1) * cin, cb))
        acc = acc + jnp.dot(lhs, rhs, preferred_element_type=jnp.float32)
    o_ref[0] = jnp.maximum(acc + b_ref[...], 0.0).astype(o_ref.dtype)


def _max4_kernel(a_ref, b_ref, c_ref, d_ref, o_ref):
    """2x2 max-pool hot path: elementwise max over the four window taps."""
    o_ref[...] = jnp.maximum(jnp.maximum(a_ref[...], b_ref[...]),
                             jnp.maximum(c_ref[...], d_ref[...]))


# ------------------------------ wrappers -----------------------------------

def conv3x3_relu(x_nhwc, wmat, bias):
    """3x3 pad=1 conv + bias + ReLU.  x: (N,H,W,Cin) bf16, wmat: (9*Cin,Cout) bf16."""
    N, H, W, cin = x_nhwc.shape
    cout = wmat.shape[1]
    Hp, Wp = H + 2, W + 2
    l_out = H * Wp                    # flat output coords p = h*Wp + w (2 junk cols/row)
    halo = 2 * Wp + 2                 # largest tap offset

    bq = min(_BQ_CAP, _round_up(l_out, 8))
    bq = max(bq, _round_up(halo, 8))  # each tap must fit inside the 2-block window
    nq = -(-l_out // bq)
    l_in = (nq + 1) * bq              # extra block so the "+1" halo block always exists

    cb = min(_CB_MAX, cout)           # NOTE: on v5e (4x128 MXU) 128 would be enough.
    nj = cout // cb

    # Zero-pad spatially, flatten (h, w) into one padded row axis, zero-fill tail.
    xp = jnp.pad(x_nhwc, ((0, 0), (1, 1), (1, 1), (0, 0)))
    xf = xp.reshape(N, Hp * Wp, cin)
    xf = jnp.pad(xf, ((0, 0), (0, l_in - Hp * Wp), (0, 0)))

    tap_offsets = tuple(dy * Wp + dx for dy in range(3) for dx in range(3))
    kernel = functools.partial(_conv3x3_kernel,
                               tap_offsets=tap_offsets, cin=cin, bq=bq)

    flops = 2 * N * nq * bq * 9 * cin * cout
    bytes_accessed = (2 * N * l_in * cin * 2            # activations (cur + halo pass)
                      + N * nq * 9 * cin * cout * 2     # weights re-read per row block
                      + N * nq * bq * cout * 2)         # output
    cost = pl.CostEstimate(flops=flops, transcendentals=0,
                           bytes_accessed=int(bytes_accessed))

    z = pl.pallas_call(
        kernel,
        out_shape=jax.ShapeDtypeStruct((N, nq * bq, cout), jnp.bfloat16),
        grid=(N, nq, nj),
        in_specs=[
            pl.BlockSpec((1, bq, cin), lambda n, q, j: (n, q, 0)),
            pl.BlockSpec((1, bq, cin), lambda n, q, j: (n, q + 1, 0)),   # halo block
            pl.BlockSpec((9 * cin, cb), lambda n, q, j: (0, j)),
            pl.BlockSpec((1, cb), lambda n, q, j: (0, j)),
        ],
        out_specs=pl.BlockSpec((1, bq, cb), lambda n, q, j: (n, q, j)),
        compiler_params=pltpu.CompilerParams(
            dimension_semantics=("parallel", "parallel", "parallel")),
        cost_estimate=cost,
    )(xf, xf, wmat, bias)

    # Drop the padded/junk positions: p = h*Wp + w, keep h<H, w<W.
    return z[:, :l_out, :].reshape(N, H, Wp, cout)[:, :, :W, :]


def maxpool2x2(x_nhwc):
    """2x2 stride-2 max pool on NHWC (floor mode, matches PyTorch default)."""
    # TODO(synk): the 4 strided views are one extra HBM copy of the tensor; fusing
    # the pool into the next conv's padded-flatten prep would remove it.
    N, H, W, C = x_nhwc.shape
    Ho, Wo = H // 2, W // 2
    rows = N * Ho * Wo
    views = [x_nhwc[:, dy::2, dx::2, :].reshape(rows, C)
             for dy in range(2) for dx in range(2)]

    rb = rows
    for cand in (1024, 512, 256, 128, 64, 32, 16, 8):
        if rows % cand == 0:
            rb = cand
            break

    out = pl.pallas_call(
        _max4_kernel,
        out_shape=jax.ShapeDtypeStruct((rows, C), x_nhwc.dtype),
        grid=(rows // rb,),
        in_specs=[pl.BlockSpec((rb, C), lambda i: (i, 0))] * 4,
        out_specs=pl.BlockSpec((rb, C), lambda i: (i, 0)),
        compiler_params=pltpu.CompilerParams(dimension_semantics=("parallel",)),
    )(*views)
    return out.reshape(N, Ho, Wo, C)


def init_params(key):
    """Deterministic synthetic VGG19 conv params (He-style scaled normals).

    w rows are tap-major: row index = (dy*3 + dx)*Cin + c  (dy, dx in 0..2).
    """
    # TODO(synk): the PyTorch module uses torchvision's pretrained weights;
    # real weights would be laid out as w.transpose(2,3,1,0)-style into (9*Cin, Cout).
    params = {}
    for name, cin, cout, _pool in LAYERS:
        key, kw, kb = jax.random.split(key, 3)
        scale = (2.0 / (9 * cin)) ** 0.5
        params[name] = {
            "w": (jax.random.normal(kw, (9 * cin, cout), jnp.float32) * scale
                  ).astype(jnp.bfloat16),
            "b": jax.random.normal(kb, (1, cout), jnp.float32) * 0.01,
        }
    return params


def vgg19_features(x_nchw, params):
    """Reproduces VGG19.forward: dict of the 16 relu*_* activations (NCHW f32)."""
    x = jnp.transpose(x_nchw, (0, 2, 3, 1)).astype(jnp.bfloat16)   # NCHW -> NHWC bf16
    feats = {}
    for name, _cin, _cout, pool in LAYERS:
        if pool:
            x = maxpool2x2(x)
        x = conv3x3_relu(x, params[name]["w"], params[name]["b"])
        feats[name] = x                                            # stay NHWC/bf16
    # One layout conversion per returned activation, outside the conv hot path.
    return {k: jnp.transpose(v, (0, 3, 1, 2)).astype(jnp.float32)
            for k, v in feats.items()}


# ------------------------------ references ---------------------------------

def _conv_ref(x_nhwc, wmat, bias):
    cin, cout = x_nhwc.shape[-1], wmat.shape[1]
    wk = wmat.astype(jnp.float32).reshape(3, 3, cin, cout)
    y = jax.lax.conv_general_dilated(
        x_nhwc.astype(jnp.float32), wk, window_strides=(1, 1),
        padding=((1, 1), (1, 1)), dimension_numbers=("NHWC", "HWIO", "NHWC"))
    return jnp.maximum(y + bias.reshape(1, 1, 1, cout), 0.0)


def _pool_ref(x_nhwc):
    N, H, W, C = x_nhwc.shape
    return x_nhwc.reshape(N, H // 2, 2, W // 2, 2, C).max(axis=(2, 4))


if __name__ == "__main__":
    key = jax.random.PRNGKey(0)
    kx, kp, kt = jax.random.split(key, 3)

    # Small input consistent with the module: NCHW, 3 input channels.
    x = jax.random.normal(kx, (2, 3, 16, 16), jnp.float32)
    params = init_params(kp)

    # --- unit sanity: one conv layer and one pool against XLA references ---
    x_nhwc = jnp.transpose(x, (0, 2, 3, 1)).astype(jnp.bfloat16)
    y_k = conv3x3_relu(x_nhwc, params["relu1_1"]["w"], params["relu1_1"]["b"])
    y_r = _conv_ref(x_nhwc, params["relu1_1"]["w"], params["relu1_1"]["b"])
    assert y_k.shape == (2, 16, 16, 64)
    assert jnp.allclose(y_k.astype(jnp.float32), y_r, rtol=5e-2, atol=5e-2)

    xt = jax.random.normal(kt, (2, 8, 8, 64), jnp.float32).astype(jnp.bfloat16)
    assert jnp.array_equal(maxpool2x2(xt), _pool_ref(xt))

    # --- full forward ---
    fwd = jax.jit(vgg19_features)
    out = jax.block_until_ready(fwd(x, params))

    # Sanity: shapes follow the VGG19 feature pyramid (16 -> 8 -> 4 -> 2 -> 1).
    assert out["relu1_1"].shape == (2, 64, 16, 16)
    assert out["relu2_2"].shape == (2, 128, 8, 8)
    assert out["relu3_4"].shape == (2, 256, 4, 4)
    assert out["relu4_4"].shape == (2, 512, 2, 2)
    assert out["relu5_4"].shape == (2, 512, 1, 1)
    assert len(out) == 16
    assert all(bool(jnp.all(jnp.isfinite(v))) for v in out.values())

    print("KERNEL_OK")
</pallas_src>

<mosaic_0001>
module attributes {stable_mosaic.version = 11 : i64} {
  func.func @_conv3x3_kernel(%arg0: i32, %arg1: i32, %arg2: i32, %arg3: memref<1x288x3xbf16, #tpu.memory_space<vmem>>, %arg4: memref<1x288x3xbf16, #tpu.memory_space<vmem>>, %arg5: memref<27x64xbf16, #tpu.memory_space<vmem>>, %arg6: memref<1x64xf32, #tpu.memory_space<vmem>>, %arg7: memref<1x288x64xbf16, #tpu.memory_space<vmem>>) attributes {dimension_semantics = [#tpu.dimension_semantics<parallel>, #tpu.dimension_semantics<parallel>, #tpu.dimension_semantics<parallel>], iteration_bounds = array<i64: 2, 1, 1>, scalar_prefetch = 0 : i64, scratch_operands = 0 : i64, tpu.core_type = #tpu.core_type<tc>, window_params = [{transform_indices = @transform_0, window_bounds = array<i64: 1, 288, 3>}, {transform_indices = @transform_1, window_bounds = array<i64: 1, 288, 3>}, {transform_indices = @transform_2, window_bounds = array<i64: 27, 64>}, {transform_indices = @transform_3, window_bounds = array<i64: 1, 64>}, {transform_indices = @transform_4, window_bounds = array<i64: 1, 288, 64>}]} {
    %c0 = arith.constant 0 : index
    %c0_0 = arith.constant 0 : index
    %c0_1 = arith.constant 0 : index
    %0 = vector.load %arg3[%c0, %c0_0, %c0_1] : memref<1x288x3xbf16, #tpu.memory_space<vmem>>, vector<1x288x3xbf16>
    %1 = vector.shape_cast %0 : vector<1x288x3xbf16> to vector<288x3xbf16>
    %c0_2 = arith.constant 0 : index
    %c0_3 = arith.constant 0 : index
    %c0_4 = arith.constant 0 : index
    %2 = vector.load %arg4[%c0_2, %c0_3, %c0_4] : memref<1x288x3xbf16, #tpu.memory_space<vmem>>, vector<1x288x3xbf16>
    %3 = vector.shape_cast %2 : vector<1x288x3xbf16> to vector<288x3xbf16>
    %4 = tpu.concatenate %1, %3 in 0 : vector<288x3xbf16>, vector<288x3xbf16> -> vector<576x3xbf16>
    %c0_5 = arith.constant 0 : index
    %c0_6 = arith.constant 0 : index
    %5 = vector.load %arg5[%c0_5, %c0_6] : memref<27x64xbf16, #tpu.memory_space<vmem>>, vector<27x64xbf16>
    %cst = arith.constant 0.000000e+00 : f32
    %6 = vector.broadcast %cst : f32 to vector<288x64xf32>
    %7 = vector.extract_strided_slice %4 {offsets = [0, 0], sizes = [288, 3], strides = [1, 1]} : vector<576x3xbf16> to vector<288x3xbf16>
    %8 = vector.extract_strided_slice %5 {offsets = [0, 0], sizes = [3, 64], strides = [1, 1]} : vector<27x64xbf16> to vector<3x64xbf16>
    %cst_7 = arith.constant dense<0.000000e+00> : vector<288x64xf32>
    %9 = tpu.matmul %7, %8, %cst_7 {dimension_numbers = #tpu.dot_dimension_numbers<[1], [0], [0], [1], [0, 0, 1, 1], [], []>} : vector<288x3xbf16>, vector<3x64xbf16>, vector<288x64xf32> -> vector<288x64xf32>
    %10 = arith.addf %6, %9 : vector<288x64xf32>
    %11 = vector.extract_strided_slice %4 {offsets = [1, 0], sizes = [288, 3], strides = [1, 1]} : vector<576x3xbf16> to vector<288x3xbf16>
    %12 = vector.extract_strided_slice %5 {offsets = [3, 0], sizes = [3, 64], strides = [1, 1]} : vector<27x64xbf16> to vector<3x64xbf16>
    %cst_8 = arith.constant dense<0.000000e+00> : vector<288x64xf32>
    %13 = tpu.matmul %11, %12, %cst_8 {dimension_numbers = #tpu.dot_dimension_numbers<[1], [0], [0], [1], [0, 0, 1, 1], [], []>} : vector<288x3xbf16>, vector<3x64xbf16>, vector<288x64xf32> -> vector<288x64xf32>
    %14 = arith.addf %10, %13 : vector<288x64xf32>
    %15 = vector.extract_strided_slice %4 {offsets = [2, 0], sizes = [288, 3], strides = [1, 1]} : vector<576x3xbf16> to vector<288x3xbf16>
    %16 = vector.extract_strided_slice %5 {offsets = [6, 0], sizes = [3, 64], strides = [1, 1]} : vector<27x64xbf16> to vector<3x64xbf16>
    %cst_9 = arith.constant dense<0.000000e+00> : vector<288x64xf32>
    %17 = tpu.matmul %15, %16, %cst_9 {dimension_numbers = #tpu.dot_dimension_numbers<[1], [0], [0], [1], [0, 0, 1, 1], [], []>} : vector<288x3xbf16>, vector<3x64xbf16>, vector<288x64xf32> -> vector<288x64xf32>
    %18 = arith.addf %14, %17 : vector<288x64xf32>
    %19 = vector.extract_strided_slice %4 {offsets = [18, 0], sizes = [288, 3], strides = [1, 1]} : vector<576x3xbf16> to vector<288x3xbf16>
    %20 = vector.extract_strided_slice %5 {offsets = [9, 0], sizes = [3, 64], strides = [1, 1]} : vector<27x64xbf16> to vector<3x64xbf16>
    %cst_10 = arith.constant dense<0.000000e+00> : vector<288x64xf32>
    %21 = tpu.matmul %19, %20, %cst_10 {dimension_numbers = #tpu.dot_dimension_numbers<[1], [0], [0], [1], [0, 0, 1, 1], [], []>} : vector<288x3xbf16>, vector<3x64xbf16>, vector<288x64xf32> -> vector<288x64xf32>
    %22 = arith.addf %18, %21 : vector<288x64xf32>
    %23 = vector.extract_strided_slice %4 {offsets = [19, 0], sizes = [288, 3], strides = [1, 1]} : vector<576x3xbf16> to vector<288x3xbf16>
    %24 = vector.extract_strided_slice %5 {offsets = [12, 0], sizes = [3, 64], strides = [1, 1]} : vector<27x64xbf16> to vector<3x64xbf16>
    %cst_11 = arith.constant dense<0.000000e+00> : vector<288x64xf32>
    %25 = tpu.matmul %23, %24, %cst_11 {dimension_numbers = #tpu.dot_dimension_numbers<[1], [0], [0], [1], [0, 0, 1, 1], [], []>} : vector<288x3xbf16>, vector<3x64xbf16>, vector<288x64xf32> -> vector<288x64xf32>
    %26 = arith.addf %22, %25 : vector<288x64xf32>
    %27 = vector.extract_strided_slice %4 {offsets = [20, 0], sizes = [288, 3], strides = [1, 1]} : vector<576x3xbf16> to vector<288x3xbf16>
    %28 = vector.extract_strided_slice %5 {offsets = [15, 0], sizes = [3, 64], strides = [1, 1]} : vector<27x64xbf16> to vector<3x64xbf16>
    %cst_12 = arith.constant dense<0.000000e+00> : vector<288x64xf32>
    %29 = tpu.matmul %27, %28, %cst_12 {dimension_numbers = #tpu.dot_dimension_numbers<[1], [0], [0], [1], [0, 0, 1, 1], [], []>} : vector<288x3xbf16>, vector<3x64xbf16>, vector<288x64xf32> -> vector<288x64xf32>
    %30 = arith.addf %26, %29 : vector<288x64xf32>
    %31 = vector.extract_strided_slice %4 {offsets = [36, 0], sizes = [288, 3], strides = [1, 1]} : vector<576x3xbf16> to vector<288x3xbf16>
    %32 = vector.extract_strided_slice %5 {offsets = [18, 0], sizes = [3, 64], strides = [1, 1]} : vector<27x64xbf16> to vector<3x64xbf16>
    %cst_13 = arith.constant dense<0.000000e+00> : vector<288x64xf32>
    %33 = tpu.matmul %31, %32, %cst_13 {dimension_numbers = #tpu.dot_dimension_numbers<[1], [0], [0], [1], [0, 0, 1, 1], [], []>} : vector<288x3xbf16>, vector<3x64xbf16>, vector<288x64xf32> -> vector<288x64xf32>
    %34 = arith.addf %30, %33 : vector<288x64xf32>
    %35 = vector.extract_strided_slice %4 {offsets = [37, 0], sizes = [288, 3], strides = [1, 1]} : vector<576x3xbf16> to vector<288x3xbf16>
    %36 = vector.extract_strided_slice %5 {offsets = [21, 0], sizes = [3, 64], strides = [1, 1]} : vector<27x64xbf16> to vector<3x64xbf16>
    %cst_14 = arith.constant dense<0.000000e+00> : vector<288x64xf32>
    %37 = tpu.matmul %35, %36, %cst_14 {dimension_numbers = #tpu.dot_dimension_numbers<[1], [0], [0], [1], [0, 0, 1, 1], [], []>} : vector<288x3xbf16>, vector<3x64xbf16>, vector<288x64xf32> -> vector<288x64xf32>
    %38 = arith.addf %34, %37 : vector<288x64xf32>
    %39 = vector.extract_strided_slice %4 {offsets = [38, 0], sizes = [288, 3], strides = [1, 1]} : vector<576x3xbf16> to vector<288x3xbf16>
    %40 = vector.extract_strided_slice %5 {offsets = [24, 0], sizes = [3, 64], strides = [1, 1]} : vector<27x64xbf16> to vector<3x64xbf16>
    %cst_15 = arith.constant dense<0.000000e+00> : vector<288x64xf32>
    %41 = tpu.matmul %39, %40, %cst_15 {dimension_numbers = #tpu.dot_dimension_numbers<[1], [0], [0], [1], [0, 0, 1, 1], [], []>} : vector<288x3xbf16>, vector<3x64xbf16>, vector<288x64xf32> -> vector<288x64xf32>
    %42 = arith.addf %38, %41 : vector<288x64xf32>
    %c0_16 = arith.constant 0 : index
    %c0_17 = arith.constant 0 : index
    %43 = vector.load %arg6[%c0_16, %c0_17] : memref<1x64xf32, #tpu.memory_space<vmem>>, vector<1x64xf32>
    %44 = vector.broadcast %43 : vector<1x64xf32> to vector<288x64xf32>
    %45 = arith.addf %42, %44 : vector<288x64xf32>
    %cst_18 = arith.constant 0.000000e+00 : f32
    %46 = vector.broadcast %cst_18 : f32 to vector<288x64xf32>
    %47 = arith.maximumf %45, %46 : vector<288x64xf32>
    %48 = arith.truncf %47 : vector<288x64xf32> to vector<288x64xbf16>
    %c0_19 = arith.constant 0 : index
    %c0_20 = arith.constant 0 : index
    %c0_21 = arith.constant 0 : index
    %49 = vector.load %arg7[%c0_19, %c0_20, %c0_21] : memref<1x288x64xbf16, #tpu.memory_space<vmem>>, vector<1x288x64xbf16>
    %50 = vector.shape_cast %49 : vector<1x288x64xbf16> to vector<288x64xbf16>
    %51 = vector.shape_cast %48 : vector<288x64xbf16> to vector<1x288x64xbf16>
    tpu.vector_store %arg7[%c0_19, %c0_20, %c0_21], %51 {strides = array<i32>} : memref<1x288x64xbf16, #tpu.memory_space<vmem>>, vector<1x288x64xbf16>,
    return
  }
  func.func @transform_0(%arg0: i32, %arg1: i32, %arg2: i32) -> (i32, i32, i32) {
    %c0_i32 = arith.constant 0 : i32
    %c0_i32_0 = arith.constant 0 : i32
    return %arg0, %arg1, %c0_i32 : i32, i32, i32
  }
  func.func @transform_1(%arg0: i32, %arg1: i32, %arg2: i32) -> (i32, i32, i32) {
    %c1_i32 = arith.constant 1 : i32
    %0 = arith.addi %arg1, %c1_i32 : i32
    %c0_i32 = arith.constant 0 : i32
    %c0_i32_0 = arith.constant 0 : i32
    return %arg0, %0, %c0_i32 : i32, i32, i32
  }
  func.func @transform_2(%arg0: i32, %arg1: i32, %arg2: i32) -> (i32, i32) {
    %c0_i32 = arith.constant 0 : i32
    %c0_i32_0 = arith.constant 0 : i32
    return %c0_i32, %arg2 : i32, i32
  }
  func.func @transform_3(%arg0: i32, %arg1: i32, %arg2: i32) -> (i32, i32) {
    %c0_i32 = arith.constant 0 : i32
    %c0_i32_0 = arith.constant 0 : i32
    return %c0_i32, %arg2 : i32, i32
  }
  func.func @transform_4(%arg0: i32, %arg1: i32, %arg2: i32) -> (i32, i32, i32) {
    %c0_i32 = arith.constant 0 : i32
    return %arg0, %arg1, %arg2 : i32, i32, i32
  }
}

</mosaic_0001>

<llo_original>
// kernel: tpu_custom_call.1
$region0: #{tpu_custom_call.1}
  #allocation0 [shape = 'u32[]', space=smem, size = 0x4, offset = 0x4, fixed_abs, tag = 'smem constant byte address 0x4 - core index']
  #allocation1 [shape = 'u32[144,128]{1,0:T(1,128)}', space=vmem, size = 0x12000, scoped, tag = 'internal scratch']
  %s0 = inlined_call_operand.vmem [shape: bf16[2,576,3], index: 0, kind: input, shape index: {}]
  %s1 = inlined_call_operand.vmem [shape: bf16[2,576,3], index: 1, kind: input, shape index: {}]
  %s2 = inlined_call_operand.vmem [shape: bf16[27,64], index: 2, kind: input, shape index: {}]
  %s3 = inlined_call_operand.vmem [shape: f32[1,64], index: 3, kind: input, shape index: {}]
  %s4 = inlined_call_operand.vmem [shape: bf16[2,288,64], index: 4, kind: output, shape index: {}]
  %s5 = sld [smem:[#allocation0]]
  $region49: #{tpu_custom_call.1} parent=0
    _
  %s7 = ssub.s32 1, %s5
  %s8 = scalar_select 0, %s7, %s5
  loop: start=0, step=1, limit=4
  $region2: #{tpu_custom_call.1} parent=0 // loop_pre_header
    _
  $region3: #{tpu_custom_call.1} parent=0 // loop_header
    %s10 = sphi 0, %s14
    %p11 = scmp.ge.s32.totalorder %s10, 4
    %s17 = sphi 0, %s36
    %s18 = sphi 0, %s32
    %s19 = sphi 0, %s28
    %s20 = sphi 0, %s17
    %s21 = sphi 0, %s18
    %s22 = sphi 0, %s19
    %s23 = sphi 0, %s20
    %s24 = sphi 0, %s21
    %s25 = sphi 0, %s22
    %s41 = sphi 0, %s43
    %s44 = sphi 0, %s41
    %s45 = sphi 0, %s44
    %s61 = sphi 0, %s45
    %s71 = sphi 0, %s73
    %s74 = sphi 0, %s71
    %s75 = sphi 0, %s74
    %s91 = sphi 0, %s75
    %s97 = sphi 0, %s99
    %s100 = sphi 0, %s97
    %s101 = sphi 0, %s100
    %s117 = sphi 0, %s101
    %s123 = sphi 0, %s125
    %s126 = sphi 0, %s123
    %s127 = sphi 0, %s126
    %s143 = sphi 0, %s127
    %s153 = sphi 0, %s155
    %s156 = sphi 0, %s153
    %s157 = sphi 0, %s156
    %s173 = sphi 0, %s157
  $region4: #{tpu_custom_call.1} parent=0 // loop_header_branch
    %13 = sbr.rel (%p11) target = $region8
  $region5: #{tpu_custom_call.1} parent=0 // loop_body
    %s15 = ssub.s32 %s10, 1
    %s16 = ssub.s32 %s10, 2
    %s26 = sadd.s32 1, %s19
    %p27 = scmp.ge.s32.totalorder %s26, 1
    %s28 = scalar_select %p27, 0, %s26
    %s29 = sadd.s32 1, %s18
    %s30 = scalar_select %p27, %s29, %s18
    %p31 = scmp.ge.s32.totalorder %s30, 1
    %s32 = scalar_select %p31, 0, %s30
    %s33 = sadd.s32 1, %s17
    %s34 = scalar_select %p31, %s33, %s17
    %p35 = scmp.ge.s32.totalorder %s34, 2
    %s36 = scalar_select %p35, 0, %s34
    %s37 = ssub.s32 %s17, %s36
    %s38 = ssub.s32 %s18, %s32
    %s39 = sor.u32 %s37, %s38
    %p40 = scmp.eq.s32.totalorder %s39, 0
    %s42 = sadd.s32 %s41, 1
    %s43 = scalar_select %p40, %s41, %s42
    %p46 = pneg %p40
    %p47 = scmp.eq.s32.totalorder %s10, 1
    %p48 = por %p46, %p47
    %p49 = scmp.ne.s32.totalorder %s41, %s44
    %p50 = scmp.eq.s32.totalorder %s10, 0
    %p51 = por %p49, %p50
    %p52 = scmp.ne.s32.totalorder %s41, %s44
    %p53 = scmp.eq.s32.totalorder %s15, 1
    %p54 = por %p52, %p53
    %p55 = scmp.ne.s32.totalorder %s44, %s45
    %p56 = scmp.eq.s32.totalorder %s15, 0
    %p57 = por %p55, %p56
    %p58 = scmp.ne.s32.totalorder %s44, %s45
    %p59 = scmp.eq.s32.totalorder %s16, 1
    %p60 = por %p58, %p59
    %p62 = scmp.ne.s32.totalorder %s45, %s61
    %p63 = scmp.eq.s32.totalorder %s16, 0
    %p64 = por %p62, %p63
    %s65 = sadd.s32 %s18, 1
    %s66 = sadd.s32 %s32, 1
    %s67 = ssub.s32 %s17, %s36
    %s68 = ssub.s32 %s65, %s66
    %s69 = sor.u32 %s67, %s68
    %p70 = scmp.eq.s32.totalorder %s69, 0
    %s72 = sadd.s32 %s71, 1
    %s73 = scalar_select %p70, %s71, %s72
    %p76 = pneg %p70
    %p77 = scmp.eq.s32.totalorder %s10, 1
    %p78 = por %p76, %p77
    %p79 = scmp.ne.s32.totalorder %s71, %s74
    %p80 = scmp.eq.s32.totalorder %s10, 0
    %p81 = por %p79, %p80
    %p82 = scmp.ne.s32.totalorder %s71, %s74
    %p83 = scmp.eq.s32.totalorder %s15, 1
    %p84 = por %p82, %p83
    %p85 = scmp.ne.s32.totalorder %s74, %s75
    %p86 = scmp.eq.s32.totalorder %s15, 0
    %p87 = por %p85, %p86
    %p88 = scmp.ne.s32.totalorder %s74, %s75
    %p89 = scmp.eq.s32.totalorder %s16, 1
    %p90 = por %p88, %p89
    %p92 = scmp.ne.s32.totalorder %s75, %s91
    %p93 = scmp.eq.s32.totalorder %s16, 0
    %p94 = por %p92, %p93
    %s95 = ssub.s32 %s19, %s28
    %p96 = scmp.eq.s32.totalorder %s95, 0
    %s98 = sadd.s32 %s97, 1
    %s99 = scalar_select %p96, %s97, %s98
    %p102 = pneg %p96
    %p103 = scmp.eq.s32.totalorder %s10, 1
    %p104 = por %p102, %p103
    %p105 = scmp.ne.s32.totalorder %s97, %s100
    %p106 = scmp.eq.s32.totalorder %s10, 0
    %p107 = por %p105, %p106
    %p108 = scmp.ne.s32.totalorder %s97, %s100
    %p109 = scmp.eq.s32.totalorder %s15, 1
    %p110 = por %p108, %p109
    %p111 = scmp.ne.s32.totalorder %s100, %s101
    %p112 = scmp.eq.s32.totalorder %s15, 0
    %p113 = por %p111, %p112
    %p114 = scmp.ne.s32.totalorder %s100, %s101
    %p115 = scmp.eq.s32.totalorder %s16, 1
    %p116 = por %p114, %p115
    %p118 = scmp.ne.s32.totalorder %s101, %s117
    %p119 = scmp.eq.s32.totalorder %s16, 0
    %p120 = por %p118, %p119
    %s121 = ssub.s32 %s19, %s28
    %p122 = scmp.eq.s32.totalorder %s121, 0
    %s124 = sadd.s32 %s123, 1
    %s125 = scalar_select %p122, %s123, %s124
    %p128 = pneg %p122
    %p129 = scmp.eq.s32.totalorder %s10, 1
    %p130 = por %p128, %p129
    %p131 = scmp.ne.s32.totalorder %s123, %s126
    %p132 = scmp.eq.s32.totalorder %s10, 0
    %p133 = por %p131, %p132
    %p134 = scmp.ne.s32.totalorder %s123, %s126
    %p135 = scmp.eq.s32.totalorder %s15, 1
    %p136 = por %p134, %p135
    %p137 = scmp.ne.s32.totalorder %s126, %s127
    %p138 = scmp.eq.s32.totalorder %s15, 0
    %p139 = por %p137, %p138
    %p140 = scmp.ne.s32.totalorder %s126, %s127
    %p141 = scmp.eq.s32.totalorder %s16, 1
    %p142 = por %p140, %p141
    %p144 = scmp.ne.s32.totalorder %s127, %s143
    %p145 = scmp.eq.s32.totalorder %s16, 0
    %p146 = por %p144, %p145
    %s147 = ssub.s32 %s17, %s36
    %s148 = ssub.s32 %s18, %s32
    %s149 = sor.u32 %s147, %s148
    %s150 = ssub.s32 %s19, %s28
    %s151 = sor.u32 %s149, %s150
    %p152 = scmp.eq.s32.totalorder %s151, 0
    %s154 = sadd.s32 %s153, 1
    %s155 = scalar_select %p152, %s153, %s154
    %p158 = pneg %p152
    %p159 = scmp.eq.s32.totalorder %s10, 1
    %p160 = por %p158, %p159
    %p161 = scmp.ne.s32.totalorder %s153, %s156
    %p162 = scmp.eq.s32.totalorder %s10, 0
    %p163 = por %p161, %p162
    %p164 = scmp.ne.s32.totalorder %s153, %s156
    %p165 = scmp.eq.s32.totalorder %s15, 1
    %p166 = por %p164, %p165
    %p167 = scmp.ne.s32.totalorder %s156, %s157
    %p168 = scmp.eq.s32.totalorder %s15, 0
    %p169 = por %p167, %p168
    %p170 = scmp.ne.s32.totalorder %s156, %s157
    %p171 = scmp.eq.s32.totalorder %s16, 1
    %p172 = por %p170, %p171
    %p174 = scmp.ne.s32.totalorder %s157, %s173
    %p175 = scmp.eq.s32.totalorder %s16, 0
    %p176 = por %p174, %p175
    %p177 = scmp.le.s32.totalorder 1, %s10
    %p178 = scmp.lt.s32.totalorder %s10, 3
    %p179 = pnand %p177, %p178
    %p180 = pneg %p179
    // Predicated region
    $region9: #{tpu_custom_call.1} parent=5 // pred_check
      _
    $region10: #{tpu_custom_call.1} parent=5 // pred_check_branch
      %182 = sbr.rel (%p179) target = $region12
    $region11: #{tpu_custom_call.1} parent=5 // pred_region
      %s183 = ssub.s32 %s10, 1
      // Predicated region
      $region13: #{tpu_custom_call.1} parent=11 // pred_check
        %p184 = pneg %p113
      $region14: #{tpu_custom_call.1} parent=11 // pred_check_branch
        %186 = sbr.rel (%p184) target = $region16
      $region15: #{tpu_custom_call.1} parent=11 // pred_region
        %p187 = scmp.lt.s32.totalorder %s22, 0
        %s188 = scalar_select %p187, %s22, 0
        %s189 = smul.addr %s188, 4
        %s190 = scalar_lea.vmem %s2, %s189
      $region16: #{tpu_custom_call.1} parent=11 // pred_fallthru
        _
      // Predicated region
      $region17: #{tpu_custom_call.1} parent=11 // pred_check
        %p191 = pneg %p139
      $region18: #{tpu_custom_call.1} parent=11 // pred_check_branch
        %193 = sbr.rel (%p191) target = $region20
      $region19: #{tpu_custom_call.1} parent=11 // pred_region
        %p194 = scmp.lt.s32.totalorder %s22, 0
        %s195 = scalar_select %p194, %s22, 0
        %s196 = scalar_lea.vmem %s3, %s195
      $region20: #{tpu_custom_call.1} parent=11 // pred_fallthru
        _
    $region12: #{tpu_custom_call.1} parent=5 // pred_fallthru
      _
    %p197 = scmp.lt.s32.totalorder %s10, 2
    // Predicated region
    $region21: #{tpu_custom_call.1} parent=5 // pred_check
      %p198 = pneg %p197
    $region22: #{tpu_custom_call.1} parent=5 // pred_check_branch
      %200 = sbr.rel (%p198) target = $region24
    $region23: #{tpu_custom_call.1} parent=5 // pred_region
      // Predicated region
      $region25: #{tpu_custom_call.1} parent=23 // pred_check
        %p201 = pneg %p51
      $region26: #{tpu_custom_call.1} parent=23 // pred_check_branch
        %203 = sbr.rel (%p201) target = $region28
      $region27: #{tpu_custom_call.1} parent=23 // pred_region
        %s204 = smul.u32 36, %s18
        %p205 = scmp.lt.s32.totalorder %s17, 1
        %s206 = scalar_select %p205, %s17, 1
        %p207 = scmp.lt.s32.totalorder %s204, 71
        %s208 = scalar_select %p207, %s204, 71
        %s209 = smul.addr %s206, 72
        %s210 = sadd.s32 %s208, %s209
        %s211 = smul.addr %s210, 4
        %s212 = scalar_lea.vmem %s0, %s211
        %s213 = smul.u32 36, %s18
      $region28: #{tpu_custom_call.1} parent=23 // pred_fallthru
        _
      // Predicated region
      $region29: #{tpu_custom_call.1} parent=23 // pred_check
        %p214 = pneg %p81
      $region30: #{tpu_custom_call.1} parent=23 // pred_check_branch
        %216 = sbr.rel (%p214) target = $region32
      $region31: #{tpu_custom_call.1} parent=23 // pred_region
        %s217 = sadd.s32 %s18, 1
        %s218 = smul.u32 36, %s217
        %p219 = scmp.lt.s32.totalorder %s17, 1
        %s220 = scalar_select %p219, %s17, 1
        %p221 = scmp.lt.s32.totalorder %s218, 71
        %s222 = scalar_select %p221, %s218, 71
        %s223 = smul.addr %s220, 72
        %s224 = sadd.s32 %s222, %s223
        %s225 = smul.addr %s224, 4
        %s226 = scalar_lea.vmem %s1, %s225
        %s227 = sadd.s32 %s18, 1
        %s228 = smul.u32 36, %s227
      $region32: #{tpu_custom_call.1} parent=23 // pred_fallthru
        _
    $region24: #{tpu_custom_call.1} parent=5 // pred_fallthru
      _
    %p229 = scmp.le.s32.totalorder 1, %s10
    %p230 = scmp.lt.s32.totalorder %s10, 3
    %p231 = pnand %p229, %p230
    %p232 = pneg %p231
    // Predicated region
    $region33: #{tpu_custom_call.1} parent=5 // pred_check
      _
    $region34: #{tpu_custom_call.1} parent=5 // pred_check_branch
      %234 = sbr.rel (%p231) target = $region36
    $region35: #{tpu_custom_call.1} parent=5 // pred_region
      %s235 = ssub.s32 %s10, 1
      %s236 = smul.u32 36, %s21
      %p237 = scmp.lt.s32.totalorder %s20, 1
      %s238 = scalar_select %p237, %s20, 1
      %p239 = scmp.lt.s32.totalorder %s236, 71
      %s240 = scalar_select %p239, %s236, 71
      %s241 = smul.addr %s238, 72
      %s242 = sadd.s32 %s240, %s241
      %s243 = smul.addr %s242, 4
      %s244 = scalar_lea.vmem %s0, %s243
      %p245 = pneg %p57
      %p246 = pneg %p54
      %s247 = sadd.s32 %s21, 1
      %s248 = smul.u32 36, %s247
      %p249 = scmp.lt.s32.totalorder %s20, 1
      %s250 = scalar_select %p249, %s20, 1
      %p251 = scmp.lt.s32.totalorder %s248, 71
      %s252 = scalar_select %p251, %s248, 71
      %s253 = smul.addr %s250, 72
      %s254 = sadd.s32 %s252, %s253
      %s255 = smul.addr %s254, 4
      %s256 = scalar_lea.vmem %s1, %s255
      %p257 = pneg %p87
      %p258 = pneg %p84
      %p259 = scmp.lt.s32.totalorder %s22, 0
      %s260 = scalar_select %p259, %s22, 0
      %s261 = smul.addr %s260, 4
      %s262 = scalar_lea.vmem %s2, %s261
      %p263 = pneg %p113
      %p264 = pneg %p110
      %p265 = scmp.lt.s32.totalorder %s22, 0
      %s266 = scalar_select %p265, %s22, 0
      %s267 = scalar_lea.vmem %s3, %s266
      %p268 = pneg %p139
      %p269 = pneg %p136
      %p270 = pneg %p169
      %p271 = pneg %p166
      %s272 = smul.u32 36, %s21
      %p273 = scmp.lt.s32.totalorder %s20, 1
      %s274 = scalar_select %p273, %s20, 1
      %p275 = scmp.lt.s32.totalorder %s272, 35
      %s276 = scalar_select %p275, %s272, 35
      %p277 = scmp.lt.s32.totalorder %s22, 0
      %s278 = scalar_select %p277, %s22, 0
      %s279 = sadd.s32 %s278, %s276
      %s280 = smul.addr %s274, 36
      %s281 = sadd.s32 %s279, %s280
      %s282 = smul.addr %s281, 4
      %s283 = scalar_lea.vmem %s4, %s282
      %s284 = smul.u32 36, %s21
      %p285 = scmp.lt.s32.totalorder %s20, 1
      %s286 = scalar_select %p285, %s20, 1
      %p287 = scmp.lt.s32.totalorder %s284, 71
      %s288 = scalar_select %p287, %s284, 71
      %s289 = smul.addr %s286, 72
      %s290 = sadd.s32 %s288, %s289
      %s291 = smul.addr %s290, 4
      %s292 = scalar_lea.vmem %s0, %s291
      %s293 = smul.u32 36, %s21
      %s294 = sadd.s32 %s21, 1
      %s295 = smul.u32 36, %s294
      %p296 = scmp.lt.s32.totalorder %s20, 1
      %s297 = scalar_select %p296, %s20, 1
      %p298 = scmp.lt.s32.totalorder %s295, 71
      %s299 = scalar_select %p298, %s295, 71
      %s300 = smul.addr %s297, 72
      %s301 = sadd.s32 %s299, %s300
      %s302 = smul.addr %s301, 4
      %s303 = scalar_lea.vmem %s1, %s302
      %s304 = sadd.s32 %s21, 1
      %s305 = smul.u32 36, %s304
      %p306 = scmp.lt.s32.totalorder %s22, 0
      %s307 = scalar_select %p306, %s22, 0
      %s308 = smul.addr %s307, 4
      %s309 = scalar_lea.vmem %s2, %s308
      %p310 = scmp.lt.s32.totalorder %s22, 0
      %s311 = scalar_select %p310, %s22, 0
      %s312 = scalar_lea.vmem %s3, %s311
      %s313 = smul.u32 36, %s21
      %p314 = scmp.lt.s32.totalorder %s20, 1
      %s315 = scalar_select %p314, %s20, 1
      %p316 = scmp.lt.s32.totalorder %s313, 35
      %s317 = scalar_select %p316, %s313, 35
      %p318 = scmp.lt.s32.totalorder %s22, 0
      %s319 = scalar_select %p318, %s22, 0
      %s320 = sadd.s32 %s319, %s317
      %s321 = smul.addr %s315, 36
      %s322 = sadd.s32 %s320, %s321
      %s323 = smul.addr %s322, 4
      %s324 = scalar_lea.vmem %s4, %s323
      %s325 = smul.u32 36, %s21
      %v327 = vld [vmem:[%s292] sm:$0xf]
      %v328 = vld [vmem:[%s292 + $0x4] sm:$0xf]
      %v329 = vld [vmem:[%s292 + $0x8] sm:$0xf]
      %v330 = vld [vmem:[%s292 + $0xc] sm:$0xf]
      %v331 = vld [vmem:[%s292 + $0x10] sm:$0xf]
      %v332 = vld [vmem:[%s292 + $0x14] sm:$0xf]
      %v333 = vld [vmem:[%s292 + $0x18] sm:$0xf]
      %v334 = vld [vmem:[%s292 + $0x1c] sm:$0xf]
      %v335 = vld [vmem:[%s292 + $0x20] sm:$0xf]
      %v336 = vld [vmem:[%s292 + $0x24] sm:$0xf]
      %v337 = vld [vmem:[%s292 + $0x28] sm:$0xf]
      %v338 = vld [vmem:[%s292 + $0x2c] sm:$0xf]
      %v339 = vld [vmem:[%s292 + $0x30] sm:$0xf]
      %v340 = vld [vmem:[%s292 + $0x34] sm:$0xf]
      %v341 = vld [vmem:[%s292 + $0x38] sm:$0xf]
      %v342 = vld [vmem:[%s292 + $0x3c] sm:$0xf]
      %v343 = vld [vmem:[%s292 + $0x40] sm:$0xf]
      %v344 = vld [vmem:[%s292 + $0x44] sm:$0xf]
      %v345 = vld [vmem:[%s292 + $0x48] sm:$0xf]
      %v346 = vld [vmem:[%s292 + $0x4c] sm:$0xf]
      %v347 = vld [vmem:[%s292 + $0x50] sm:$0xf]
      %v348 = vld [vmem:[%s292 + $0x54] sm:$0xf]
      %v349 = vld [vmem:[%s292 + $0x58] sm:$0xf]
      %v350 = vld [vmem:[%s292 + $0x5c] sm:$0xf]
      %v351 = vld [vmem:[%s292 + $0x60] sm:$0xf]
      %v352 = vld [vmem:[%s292 + $0x64] sm:$0xf]
      %v353 = vld [vmem:[%s292 + $0x68] sm:$0xf]
      %v354 = vld [vmem:[%s292 + $0x6c] sm:$0xf]
      %v355 = vld [vmem:[%s292 + $0x70] sm:$0xf]
      %v356 = vld [vmem:[%s292 + $0x74] sm:$0xf]
      %v357 = vld [vmem:[%s292 + $0x78] sm:$0xf]
      %v358 = vld [vmem:[%s292 + $0x7c] sm:$0xf]
      %v359 = vld [vmem:[%s292 + $0x80] sm:$0xf]
      %v360 = vld [vmem:[%s292 + $0x84] sm:$0xf]
      %v361 = vld [vmem:[%s292 + $0x88] sm:$0xf]
      %v362 = vld [vmem:[%s292 + $0x8c] sm:$0xf]
      %v363 = vld [vmem:[%s303] sm:$0xf]
      %v364 = vld [vmem:[%s303 + $0x4] sm:$0xf]
      %v365 = vld [vmem:[%s303 + $0x8] sm:$0xf]
      %v366 = vld [vmem:[%s303 + $0xc] sm:$0xf]
      %v367 = vld [vmem:[%s303 + $0x10] sm:$0xf]
      %v368 = vld [vmem:[%s303 + $0x14] sm:$0xf]
      %v405 = vunpack.c.l.b16 %v327
      %v406 = vunpack.c.l.b16 %v328
      %v407 = vunpack.c.l.b16 %v329
      %v408 = vunpack.c.l.b16 %v330
      %v409 = vunpack.c.l.b16 %v331
      %v410 = vunpack.c.l.b16 %v332
      %v411 = vunpack.c.l.b16 %v333
      %v412 = vunpack.c.l.b16 %v334
      %v413 = vunpack.c.l.b16 %v335
      %v414 = vunpack.c.l.b16 %v336
      %v415 = vunpack.c.l.b16 %v337
      %v416 = vunpack.c.l.b16 %v338
      %v417 = vunpack.c.l.b16 %v339
      %v418 = vunpack.c.l.b16 %v340
      %v419 = vunpack.c.l.b16 %v341
      %v420 = vunpack.c.l.b16 %v342
      %v421 = vunpack.c.l.b16 %v343
      %v422 = vunpack.c.l.b16 %v344
      %v423 = vunpack.c.l.b16 %v345
      %v424 = vunpack.c.l.b16 %v346
      %v425 = vunpack.c.l.b16 %v347
      %v426 = vunpack.c.l.b16 %v348
      %v427 = vunpack.c.l.b16 %v349
      %v428 = vunpack.c.l.b16 %v350
      %v429 = vunpack.c.l.b16 %v351
      %v430 = vunpack.c.l.b16 %v352
      %v431 = vunpack.c.l.b16 %v353
      %v432 = vunpack.c.l.b16 %v354
      %v433 = vunpack.c.l.b16 %v355
      %v434 = vunpack.c.l.b16 %v356
      %v435 = vunpack.c.l.b16 %v357
      %v436 = vunpack.c.l.b16 %v358
      %v437 = vunpack.c.l.b16 %v359
      %v438 = vunpack.c.l.b16 %v360
      %v439 = vunpack.c.l.b16 %v361
      %v440 = vunpack.c.l.b16 %v362
      %v441 = vpack.c.b16 %v406, %v405
      %v442 = vpack.c.b16 %v408, %v407
      %v443 = vpack.c.b16 %v410, %v409
      %v444 = vpack.c.b16 %v412, %v411
      %v445 = vpack.c.b16 %v414, %v413
      %v446 = vpack.c.b16 %v416, %v415
      %v447 = vpack.c.b16 %v418, %v417
      %v448 = vpack.c.b16 %v420, %v419
      %v449 = vpack.c.b16 %v422, %v421
      %v450 = vpack.c.b16 %v424, %v423
      %v451 = vpack.c.b16 %v426, %v425
      %v452 = vpack.c.b16 %v428, %v427
      %v453 = vpack.c.b16 %v430, %v429
      %v454 = vpack.c.b16 %v432, %v431
      %v455 = vpack.c.b16 %v434, %v433
      %v456 = vpack.c.b16 %v436, %v435
      %v457 = vpack.c.b16 %v438, %v437
      %v458 = vpack.c.b16 %v440, %v439
      %v465 = vunpack.c.l.b16 %v363
      %v466 = vunpack.c.l.b16 %v364
      %v467 = vunpack.c.l.b16 %v365
      %v468 = vunpack.c.l.b16 %v366
      %v469 = vunpack.c.l.b16 %v367
      %v470 = vunpack.c.l.b16 %v368
      %v471 = vpack.c.b16 %v466, %v465
      %v472 = vpack.c.b16 %v468, %v467
      %v473 = vpack.c.b16 %v470, %v469
      %v474 = vld [vmem:[%s309] sm:$0xf]
      %v475 = vld [vmem:[%s309 + $0x4] sm:$0xf]
      %v476 = vld [vmem:[%s309 + $0x8] sm:$0xf]
      %v477 = vld [vmem:[%s309 + $0xc] sm:$0x3]
      %vm478 = vsmask.f32 7424
      %v480 = vshrl.u32 %v441, 16
      %v482 = vshll.u32 %v441, 16
      %v484 = vrot.slane %v482, 1
      %v485 = vor.u32 %v480, %v484
      %v487 = vshll.u32 %v442, 16
      %v489 = vrot.slane %v487, 1
      %v490 = vsel %vm478, %v485, %v489
      %v491 = vshrl.u32 %v442, 16
      %v493 = vor.u32 %v491, %v489
      %v495 = vshll.u32 %v443, 16
      %v497 = vrot.slane %v495, 1
      %v498 = vsel %vm478, %v493, %v497
      %v499 = vshrl.u32 %v443, 16
      %v501 = vor.u32 %v499, %v497
      %v503 = vshll.u32 %v444, 16
      %v505 = vrot.slane %v503, 1
      %v506 = vsel %vm478, %v501, %v505
      %v507 = vshrl.u32 %v444, 16
      %v509 = vor.u32 %v507, %v505
      %v511 = vshll.u32 %v445, 16
      %v513 = vrot.slane %v511, 1
      %v514 = vsel %vm478, %v509, %v513
      %v515 = vshrl.u32 %v445, 16
      %v517 = vor.u32 %v515, %v513
      %v519 = vshll.u32 %v446, 16
      %v521 = vrot.slane %v519, 1
      %v522 = vsel %vm478, %v517, %v521
      %v523 = vshrl.u32 %v446, 16
      %v525 = vor.u32 %v523, %v521
      %v527 = vshll.u32 %v447, 16
      %v529 = vrot.slane %v527, 1
      %v530 = vsel %vm478, %v525, %v529
      %v531 = vshrl.u32 %v447, 16
      %v533 = vor.u32 %v531, %v529
      %v535 = vshll.u32 %v448, 16
      %v537 = vrot.slane %v535, 1
      %v538 = vsel %vm478, %v533, %v537
      %v539 = vshrl.u32 %v448, 16
      %v541 = vor.u32 %v539, %v537
      %v543 = vshll.u32 %v449, 16
      %v545 = vrot.slane %v543, 1
      %v546 = vsel %vm478, %v541, %v545
      %v547 = vshrl.u32 %v449, 16
      %v549 = vor.u32 %v547, %v545
      %v551 = vshll.u32 %v450, 16
      %v553 = vrot.slane %v551, 1
      %v554 = vsel %vm478, %v549, %v553
      %v555 = vshrl.u32 %v450, 16
      %v557 = vor.u32 %v555, %v553
      %v559 = vshll.u32 %v451, 16
      %v561 = vrot.slane %v559, 1
      %v562 = vsel %vm478, %v557, %v561
      %v563 = vshrl.u32 %v451, 16
      %v565 = vor.u32 %v563, %v561
      %v567 = vshll.u32 %v452, 16
      %v569 = vrot.slane %v567, 1
      %v570 = vsel %vm478, %v565, %v569
      %v571 = vshrl.u32 %v452, 16
      %v573 = vor.u32 %v571, %v569
      %v575 = vshll.u32 %v453, 16
      %v577 = vrot.slane %v575, 1
      %v578 = vsel %vm478, %v573, %v577
      %v579 = vshrl.u32 %v453, 16
      %v581 = vor.u32 %v579, %v577
      %v583 = vshll.u32 %v454, 16
      %v585 = vrot.slane %v583, 1
      %v586 = vsel %vm478, %v581, %v585
      %v587 = vshrl.u32 %v454, 16
      %v589 = vor.u32 %v587, %v585
      %v591 = vshll.u32 %v455, 16
      %v593 = vrot.slane %v591, 1
      %v594 = vsel %vm478, %v589, %v593
      %v595 = vshrl.u32 %v455, 16
      %v597 = vor.u32 %v595, %v593
      %v599 = vshll.u32 %v456, 16
      %v601 = vrot.slane %v599, 1
      %v602 = vsel %vm478, %v597, %v601
      %v603 = vshrl.u32 %v456, 16
      %v605 = vor.u32 %v603, %v601
      %v607 = vshll.u32 %v457, 16
      %v609 = vrot.slane %v607, 1
      %v610 = vsel %vm478, %v605, %v609
      %v611 = vshrl.u32 %v457, 16
      %v613 = vor.u32 %v611, %v609
      %v615 = vshll.u32 %v458, 16
      %v617 = vrot.slane %v615, 1
      %v618 = vsel %vm478, %v613, %v617
      %v619 = vshrl.u32 %v458, 16
      %v621 = vor.u32 %v619, %v617
      %v623 = vshll.u32 %v471, 16
      %v625 = vrot.slane %v623, 1
      %v626 = vsel %vm478, %v621, %v625
      %v628 = vunpack.c.l.b16 %v474
      %v629 = vpack.c.b16 %v628, %v628
      %v631 = vshrl.u32 %v629, 16
      %v633 = vrot.slane %v631, 1
      %v634 = vshll.u32 %v629, 16
      %v636 = vrot.slane %v634, 2
      %v637 = vor.u32 %v633, %v636
      %vm638 = vcmask 23552
      %v640 = vsel %vm638, %v490, 0
      %v643 = vsel %vm638, %v498, 0
      %v646 = vsel %vm638, %v506, 0
      %v649 = vsel %vm638, %v514, 0
      %v652 = vsel %vm638, %v522, 0
      %v655 = vsel %vm638, %v530, 0
      %v658 = vsel %vm638, %v538, 0
      %v661 = vsel %vm638, %v546, 0
      %v664 = vsel %vm638, %v554, 0
      %v667 = vsel %vm638, %v562, 0
      %v670 = vsel %vm638, %v570, 0
      %v673 = vsel %vm638, %v578, 0
      %v676 = vsel %vm638, %v586, 0
      %v679 = vsel %vm638, %v594, 0
      %v682 = vsel %vm638, %v602, 0
      %v685 = vsel %vm638, %v610, 0
      %v688 = vsel %vm638, %v618, 0
      %v691 = vsel %vm638, %v626, 0
      %vm693 = vcmask 1040384
      %vm694 = vcmask 1041408
      %v695 = vsel %vm693, 4294967295, 65535
      %v696 = vsel %vm694, %v695, 0
      %v698 = vand.u32 %v637, %v696
      %700 = vmatprep.subr.bf16.mxu0 0
      %701 = vmatpush1.bf16.msra.mxu0 %v698
      %702 = vmatprep.subr.bf16.mxu0 0
      %703 = vmatpush1.bf16.msra.mxu0 0
      %704 = vmatprep.subr.bf16.mxu0 0
      %705 = vmatpush1.bf16.msra.mxu0 0
      %706 = vmatprep.subr.bf16.mxu0 0
      %707 = vmatpush1.bf16.msra.mxu0 0
      %708 = vmatprep.subr.bf16.mxu0 0
      %709 = vmatpush1.bf16.msra.mxu0 0
      %710 = vmatprep.subr.bf16.mxu0 0
      %711 = vmatpush1.bf16.msra.mxu0 0
      %712 = vmatprep.subr.bf16.mxu0 0
      %713 = vmatpush1.bf16.msra.mxu0 0
      %714 = vmatprep.subr.bf16.mxu0 0
      %715 = vmatpush1.bf16.msra.mxu0 0
      %716 = vmatprep.subr.bf16.mxu0 0
      %717 = vmatpush1.bf16.msra.mxu0 0
      %718 = vmatprep.subr.bf16.mxu0 0
      %719 = vmatpush1.bf16.msra.mxu0 0
      %720 = vmatprep.subr.bf16.mxu0 0
      %721 = vmatpush1.bf16.msra.mxu0 0
      %722 = vmatprep.subr.bf16.mxu0 0
      %723 = vmatpush1.bf16.msra.mxu0 0
      %724 = vmatprep.subr.bf16.mxu0 0
      %725 = vmatpush1.bf16.msra.mxu0 0
      %726 = vmatprep.subr.bf16.mxu0 0
      %727 = vmatpush1.bf16.msra.mxu0 0
      %728 = vmatprep.subr.bf16.mxu0 0
      %729 = vmatpush1.bf16.msra.mxu0 0
      %730 = vmatprep.subr.bf16.mxu0 0
      %731 = vmatpush1.bf16.msra.mxu0 0
      %732 = vmatprep.mubr.bf16.mxu0 0
      %733 = vmatmul.mubr.bf16.gmra.mrb[0].mxu0 %v640
      %v734 = vpop.f32.mrb[0].mxu0
      %v735 = vadd.f32 0.0, %v734
      %v736 = vpop.f32.mrb[0].mxu0
      %v737 = vpop.f32.mrb[0].mxu0
      %v738 = vadd.f32 0.0, %v737
      %v739 = vpop.f32.mrb[0].mxu0
      %740 = vmatprep.mubr.bf16.mxu0 0
      %741 = vmatmul.mubr.bf16.gmra.mrb[0].mxu0 %v643
      %v742 = vpop.f32.mrb[0].mxu0
      %v743 = vadd.f32 0.0, %v742
      %v744 = vpop.f32.mrb[0].mxu0
      %v745 = vpop.f32.mrb[0].mxu0
      %v746 = vadd.f32 0.0, %v745
      %v747 = vpop.f32.mrb[0].mxu0
      %748 = vmatprep.mubr.bf16.mxu0 0
      %749 = vmatmul.mubr.bf16.gmra.mrb[0].mxu0 %v646
      %v750 = vpop.f32.mrb[0].mxu0
      %v751 = vadd.f32 0.0, %v750
      %v752 = vpop.f32.mrb[0].mxu0
      %v753 = vpop.f32.mrb[0].mxu0
      %v754 = vadd.f32 0.0, %v753
      %v755 = vpop.f32.mrb[0].mxu0
      %756 = vmatprep.mubr.bf16.mxu0 0
      %757 = vmatmul.mubr.bf16.gmra.mrb[0].mxu0 %v649
      %v758 = vpop.f32.mrb[0].mxu0
      %v759 = vadd.f32 0.0, %v758
      %v760 = vpop.f32.mrb[0].mxu0
      %v761 = vpop.f32.mrb[0].mxu0
      %v762 = vadd.f32 0.0, %v761
      %v763 = vpop.f32.mrb[0].mxu0
      %764 = vmatprep.mubr.bf16.mxu0 0
      %765 = vmatmul.mubr.bf16.gmra.mrb[0].mxu0 %v652
      %v766 = vpop.f32.mrb[0].mxu0
      %v767 = vadd.f32 0.0, %v766
      %v768 = vpop.f32.mrb[0].mxu0
      %v769 = vpop.f32.mrb[0].mxu0
      %v770 = vadd.f32 0.0, %v769
      %v771 = vpop.f32.mrb[0].mxu0
      %772 = vmatprep.mubr.bf16.mxu0 0
      %773 = vmatmul.mubr.bf16.gmra.mrb[0].mxu0 %v655
      %v774 = vpop.f32.mrb[0].mxu0
      %v775 = vadd.f32 0.0, %v774
      %v776 = vpop.f32.mrb[0].mxu0
      %v777 = vpop.f32.mrb[0].mxu0
      %v778 = vadd.f32 0.0, %v777
      %v779 = vpop.f32.mrb[0].mxu0
      %780 = vmatprep.mubr.bf16.mxu0 0
      %781 = vmatmul.mubr.bf16.gmra.mrb[0].mxu0 %v658
      %v782 = vpop.f32.mrb[0].mxu0
      %v783 = vadd.f32 0.0, %v782
      %v784 = vpop.f32.mrb[0].mxu0
      %v785 = vpop.f32.mrb[0].mxu0
      %v786 = vadd.f32 0.0, %v785
      %v787 = vpop.f32.mrb[0].mxu0
      %788 = vmatprep.mubr.bf16.mxu0 0
      %789 = vmatmul.mubr.bf16.gmra.mrb[0].mxu0 %v661
      %v790 = vpop.f32.mrb[0].mxu0
      %v791 = vadd.f32 0.0, %v790
      %v792 = vpop.f32.mrb[0].mxu0
      %v793 = vpop.f32.mrb[0].mxu0
      %v794 = vadd.f32 0.0, %v793
      %v795 = vpop.f32.mrb[0].mxu0
      %796 = vmatprep.mubr.bf16.mxu0 0
      %797 = vmatmul.mubr.bf16.gmra.mrb[0].mxu0 %v664
      %v798 = vpop.f32.mrb[0].mxu0
      %v799 = vadd.f32 0.0, %v798
      %v800 = vpop.f32.mrb[0].mxu0
      %v801 = vpop.f32.mrb[0].mxu0
      %v802 = vadd.f32 0.0, %v801
      %v803 = vpop.f32.mrb[0].mxu0
      %804 = vmatprep.mubr.bf16.mxu0 0
      %805 = vmatmul.mubr.bf16.gmra.mrb[0].mxu0 %v667
      %v806 = vpop.f32.mrb[0].mxu0
      %v807 = vadd.f32 0.0, %v806
      %v808 = vpop.f32.mrb[0].mxu0
      %v809 = vpop.f32.mrb[0].mxu0
      %v810 = vadd.f32 0.0, %v809
      %v811 = vpop.f32.mrb[0].mxu0
      %812 = vmatprep.mubr.bf16.mxu0 0
      %813 = vmatmul.mubr.bf16.gmra.mrb[0].mxu0 %v670
      %v814 = vpop.f32.mrb[0].mxu0
      %v815 = vadd.f32 0.0, %v814
      %v816 = vpop.f32.mrb[0].mxu0
      %v817 = vpop.f32.mrb[0].mxu0
      %v818 = vadd.f32 0.0, %v817
      %v819 = vpop.f32.mrb[0].mxu0
      %820 = vmatprep.mubr.bf16.mxu0 0
      %821 = vmatmul.mubr.bf16.gmra.mrb[0].mxu0 %v673
      %v822 = vpop.f32.mrb[0].mxu0
      %v823 = vadd.f32 0.0, %v822
      %v824 = vpop.f32.mrb[0].mxu0
      %v825 = vpop.f32.mrb[0].mxu0
      %v826 = vadd.f32 0.0, %v825
      %v827 = vpop.f32.mrb[0].mxu0
      %828 = vmatprep.mubr.bf16.mxu0 0
      %829 = vmatmul.mubr.bf16.gmra.mrb[0].mxu0 %v676
      %v830 = vpop.f32.mrb[0].mxu0
      %v831 = vadd.f32 0.0, %v830
      %v832 = vpop.f32.mrb[0].mxu0
      %v833 = vpop.f32.mrb[0].mxu0
      %v834 = vadd.f32 0.0, %v833
      %v835 = vpop.f32.mrb[0].mxu0
      %836 = vmatprep.mubr.bf16.mxu0 0
      %837 = vmatmul.mubr.bf16.gmra.mrb[0].mxu0 %v679
      %v838 = vpop.f32.mrb[0].mxu0
      %v839 = vadd.f32 0.0, %v838
      %v840 = vpop.f32.mrb[0].mxu0
      %v841 = vpop.f32.mrb[0].mxu0
      %v842 = vadd.f32 0.0, %v841
      %v843 = vpop.f32.mrb[0].mxu0
      %844 = vmatprep.mubr.bf16.mxu0 0
      %845 = vmatmul.mubr.bf16.gmra.mrb[0].mxu0 %v682
      %v846 = vpop.f32.mrb[0].mxu0
      %v847 = vadd.f32 0.0, %v846
      %v848 = vpop.f32.mrb[0].mxu0
      %v849 = vpop.f32.mrb[0].mxu0
      %v850 = vadd.f32 0.0, %v849
      %v851 = vpop.f32.mrb[0].mxu0
      %852 = vmatprep.mubr.bf16.mxu0 0
      %853 = vmatmul.mubr.bf16.gmra.mrb[0].mxu0 %v685
      %v854 = vpop.f32.mrb[0].mxu0
      %v855 = vadd.f32 0.0, %v854
      %v856 = vpop.f32.mrb[0].mxu0
      %v857 = vpop.f32.mrb[0].mxu0
      %v858 = vadd.f32 0.0, %v857
      %v859 = vpop.f32.mrb[0].mxu0
      %860 = vmatprep.mubr.bf16.mxu0 0
      %861 = vmatmul.mubr.bf16.gmra.mrb[0].mxu0 %v688
      %v862 = vpop.f32.mrb[0].mxu0
      %v863 = vadd.f32 0.0, %v862
      %v864 = vpop.f32.mrb[0].mxu0
      %v865 = vpop.f32.mrb[0].mxu0
      %v866 = vadd.f32 0.0, %v865
      %v867 = vpop.f32.mrb[0].mxu0
      %868 = vmatprep.mubr.bf16.mxu0 0
      %869 = vmatmul.mubr.bf16.gmra.mrb[0].mxu0 %v691
      %v870 = vpop.f32.mrb[0].mxu0
      %v871 = vadd.f32 0.0, %v870
      %v872 = vpop.f32.mrb[0].mxu0
      %v873 = vpop.f32.mrb[0].mxu0
      %v874 = vadd.f32 0.0, %v873
      %v875 = vpop.f32.mrb[0].mxu0
      %876 = vdwg.mxu0
      %v877 = vsel %vm638, %v441, 0
      %v879 = vsel %vm638, %v442, 0
      %v881 = vsel %vm638, %v443, 0
      %v883 = vsel %vm638, %v444, 0
      %v885 = vsel %vm638, %v445, 0
      %v887 = vsel %vm638, %v446, 0
      %v889 = vsel %vm638, %v447, 0
      %v891 = vsel %vm638, %v448, 0
      %v893 = vsel %vm638, %v449, 0
      %v895 = vsel %vm638, %v450, 0
      %v897 = vsel %vm638, %v451, 0
      %v899 = vsel %vm638, %v452, 0
      %v901 = vsel %vm638, %v453, 0
      %v903 = vsel %vm638, %v454, 0
      %v905 = vsel %vm638, %v455, 0
      %v907 = vsel %vm638, %v456, 0
      %v909 = vsel %vm638, %v457, 0
      %v911 = vsel %vm638, %v458, 0
      %v914 = vand.u32 %v474, %v696
      %916 = vmatprep.subr.bf16.mxu0 0
      %917 = vmatpush1.bf16.msra.mxu0 %v914
      %918 = vmatprep.subr.bf16.mxu0 0
      %919 = vmatpush1.bf16.msra.mxu0 0
      %920 = vmatprep.subr.bf16.mxu0 0
      %921 = vmatpush1.bf16.msra.mxu0 0
      %922 = vmatprep.subr.bf16.mxu0 0
      %923 = vmatpush1.bf16.msra.mxu0 0
      %924 = vmatprep.subr.bf16.mxu0 0
      %925 = vmatpush1.bf16.msra.mxu0 0
      %926 = vmatprep.subr.bf16.mxu0 0
      %927 = vmatpush1.bf16.msra.mxu0 0
      %928 = vmatprep.subr.bf16.mxu0 0
      %929 = vmatpush1.bf16.msra.mxu0 0
      %930 = vmatprep.subr.bf16.mxu0 0
      %931 = vmatpush1.bf16.msra.mxu0 0
      %932 = vmatprep.subr.bf16.mxu0 0
      %933 = vmatpush1.bf16.msra.mxu0 0
      %934 = vmatprep.subr.bf16.mxu0 0
      %935 = vmatpush1.bf16.msra.mxu0 0
      %936 = vmatprep.subr.bf16.mxu0 0
      %937 = vmatpush1.bf16.msra.mxu0 0
      %938 = vmatprep.subr.bf16.mxu0 0
      %939 = vmatpush1.bf16.msra.mxu0 0
      %940 = vmatprep.subr.bf16.mxu0 0
      %941 = vmatpush1.bf16.msra.mxu0 0
      %942 = vmatprep.subr.bf16.mxu0 0
      %943 = vmatpush1.bf16.msra.mxu0 0
      %944 = vmatprep.subr.bf16.mxu0 0
      %945 = vmatpush1.bf16.msra.mxu0 0
      %946 = vmatprep.subr.bf16.mxu0 0
      %947 = vmatpush1.bf16.msra.mxu0 0
      %948 = vmatprep.mubr.bf16.mxu0 0
      %949 = vmatmul.mubr.bf16.gmra.mrb[0].mxu0 %v877
      %v950 = vpop.f32.mrb[0].mxu0
      %v951 = vadd.f32 %v735, %v950
      %v952 = vpop.f32.mrb[0].mxu0
      %v953 = vpop.f32.mrb[0].mxu0
      %v954 = vadd.f32 %v738, %v953
      %v955 = vpop.f32.mrb[0].mxu0
      %956 = vmatprep.mubr.bf16.mxu0 0
      %957 = vmatmul.mubr.bf16.gmra.mrb[0].mxu0 %v879
      %v958 = vpop.f32.mrb[0].mxu0
      %v959 = vadd.f32 %v743, %v958
      %v960 = vpop.f32.mrb[0].mxu0
      %v961 = vpop.f32.mrb[0].mxu0
      %v962 = vadd.f32 %v746, %v961
      %v963 = vpop.f32.mrb[0].mxu0
      %964 = vmatprep.mubr.bf16.mxu0 0
      %965 = vmatmul.mubr.bf16.gmra.mrb[0].mxu0 %v881
      %v966 = vpop.f32.mrb[0].mxu0
      %v967 = vadd.f32 %v751, %v966
      %v968 = vpop.f32.mrb[0].mxu0
      %v969 = vpop.f32.mrb[0].mxu0
      %v970 = vadd.f32 %v754, %v969
      %v971 = vpop.f32.mrb[0].mxu0
      %972 = vmatprep.mubr.bf16.mxu0 0
      %973 = vmatmul.mubr.bf16.gmra.mrb[0].mxu0 %v883
      %v974 = vpop.f32.mrb[0].mxu0
      %v975 = vadd.f32 %v759, %v974
      %v976 = vpop.f32.mrb[0].mxu0
      %v977 = vpop.f32.mrb[0].mxu0
      %v978 = vadd.f32 %v762, %v977
      %v979 = vpop.f32.mrb[0].mxu0
      %980 = vmatprep.mubr.bf16.mxu0 0
      %981 = vmatmul.mubr.bf16.gmra.mrb[0].mxu0 %v885
      %v982 = vpop.f32.mrb[0].mxu0
      %v983 = vadd.f32 %v767, %v982
      %v984 = vpop.f32.mrb[0].mxu0
      %v985 = vpop.f32.mrb[0].mxu0
      %v986 = vadd.f32 %v770, %v985
      %v987 = vpop.f32.mrb[0].mxu0
      %988 = vmatprep.mubr.bf16.mxu0 0
      %989 = vmatmul.mubr.bf16.gmra.mrb[0].mxu0 %v887
      %v990 = vpop.f32.mrb[0].mxu0
      %v991 = vadd.f32 %v775, %v990
      %v992 = vpop.f32.mrb[0].mxu0
      %v993 = vpop.f32.mrb[0].mxu0
      %v994 = vadd.f32 %v778, %v993
      %v995 = vpop.f32.mrb[0].mxu0
      %996 = vmatprep.mubr.bf16.mxu0 0
      %997 = vmatmul.mubr.bf16.gmra.mrb[0].mxu0 %v889
      %v998 = vpop.f32.mrb[0].mxu0
      %v999 = vadd.f32 %v783, %v998
      %v1000 = vpop.f32.mrb[0].mxu0
      %v1001 = vpop.f32.mrb[0].mxu0
      %v1002 = vadd.f32 %v786, %v1001
      %v1003 = vpop.f32.mrb[0].mxu0
      %1004 = vmatprep.mubr.bf16.mxu0 0
      %1005 = vmatmul.mubr.bf16.gmra.mrb[0].mxu0 %v891
      %v1006 = vpop.f32.mrb[0].mxu0
      %v1007 = vadd.f32 %v791, %v1006
      %v1008 = vpop.f32.mrb[0].mxu0
      %v1009 = vpop.f32.mrb[0].mxu0
      %v1010 = vadd.f32 %v794, %v1009
      %v1011 = vpop.f32.mrb[0].mxu0
      %1012 = vmatprep.mubr.bf16.mxu0 0
      %1013 = vmatmul.mubr.bf16.gmra.mrb[0].mxu0 %v893
      %v1014 = vpop.f32.mrb[0].mxu0
      %v1015 = vadd.f32 %v799, %v1014
      %v1016 = vpop.f32.mrb[0].mxu0
      %v1017 = vpop.f32.mrb[0].mxu0
      %v1018 = vadd.f32 %v802, %v1017
      %v1019 = vpop.f32.mrb[0].mxu0
      %1020 = vmatprep.mubr.bf16.mxu0 0
      %1021 = vmatmul.mubr.bf16.gmra.mrb[0].mxu0 %v895
      %v1022 = vpop.f32.mrb[0].mxu0
      %v1023 = vadd.f32 %v807, %v1022
      %v1024 = vpop.f32.mrb[0].mxu0
      %v1025 = vpop.f32.mrb[0].mxu0
      %v1026 = vadd.f32 %v810, %v1025
      %v1027 = vpop.f32.mrb[0].mxu0
      %1028 = vmatprep.mubr.bf16.mxu0 0
      %1029 = vmatmul.mubr.bf16.gmra.mrb[0].mxu0 %v897
      %v1030 = vpop.f32.mrb[0].mxu0
      %v1031 = vadd.f32 %v815, %v1030
      %v1032 = vpop.f32.mrb[0].mxu0
      %v1033 = vpop.f32.mrb[0].mxu0
      %v1034 = vadd.f32 %v818, %v1033
      %v1035 = vpop.f32.mrb[0].mxu0
      %1036 = vmatprep.mubr.bf16.mxu0 0
      %1037 = vmatmul.mubr.bf16.gmra.mrb[0].mxu0 %v899
      %v1038 = vpop.f32.mrb[0].mxu0
      %v1039 = vadd.f32 %v823, %v1038
      %v1040 = vpop.f32.mrb[0].mxu0
      %v1041 = vpop.f32.mrb[0].mxu0
      %v1042 = vadd.f32 %v826, %v1041
      %v1043 = vpop.f32.mrb[0].mxu0
      %1044 = vmatprep.mubr.bf16.mxu0 0
      %1045 = vmatmul.mubr.bf16.gmra.mrb[0].mxu0 %v901
      %v1046 = vpop.f32.mrb[0].mxu0
      %v1047 = vadd.f32 %v831, %v1046
      %v1048 = vpop.f32.mrb[0].mxu0
      %v1049 = vpop.f32.mrb[0].mxu0
      %v1050 = vadd.f32 %v834, %v1049
      %v1051 = vpop.f32.mrb[0].mxu0
      %1052 = vmatprep.mubr.bf16.mxu0 0
      %1053 = vmatmul.mubr.bf16.gmra.mrb[0].mxu0 %v903
      %v1054 = vpop.f32.mrb[0].mxu0
      %v1055 = vadd.f32 %v839, %v1054
      %v1056 = vpop.f32.mrb[0].mxu0
      %v1057 = vpop.f32.mrb[0].mxu0
      %v1058 = vadd.f32 %v842, %v1057
      %v1059 = vpop.f32.mrb[0].mxu0
      %1060 = vmatprep.mubr.bf16.mxu0 0
      %1061 = vmatmul.mubr.bf16.gmra.mrb[0].mxu0 %v905
      %v1062 = vpop.f32.mrb[0].mxu0
      %v1063 = vadd.f32 %v847, %v1062
      %v1064 = vpop.f32.mrb[0].mxu0
      %v1065 = vpop.f32.mrb[0].mxu0
      %v1066 = vadd.f32 %v850, %v1065
      %v1067 = vpop.f32.mrb[0].mxu0
      %1068 = vmatprep.mubr.bf16.mxu0 0
      %1069 = vmatmul.mubr.bf16.gmra.mrb[0].mxu0 %v907
      %v1070 = vpop.f32.mrb[0].mxu0
      %v1071 = vadd.f32 %v855, %v1070
      %v1072 = vpop.f32.mrb[0].mxu0
      %v1073 = vpop.f32.mrb[0].mxu0
      %v1074 = vadd.f32 %v858, %v1073
      %v1075 = vpop.f32.mrb[0].mxu0
      %1076 = vmatprep.mubr.bf16.mxu0 0
      %1077 = vmatmul.mubr.bf16.gmra.mrb[0].mxu0 %v909
      %v1078 = vpop.f32.mrb[0].mxu0
      %v1079 = vadd.f32 %v863, %v1078
      %v1080 = vpop.f32.mrb[0].mxu0
      %v1081 = vpop.f32.mrb[0].mxu0
      %v1082 = vadd.f32 %v866, %v1081
      %v1083 = vpop.f32.mrb[0].mxu0
      %1084 = vmatprep.mubr.bf16.mxu0 0
      %1085 = vmatmul.mubr.bf16.gmra.mrb[0].mxu0 %v911
      %v1086 = vpop.f32.mrb[0].mxu0
      %v1087 = vadd.f32 %v871, %v1086
      %v1088 = vpop.f32.mrb[0].mxu0
      %v1089 = vpop.f32.mrb[0].mxu0
      %v1090 = vadd.f32 %v874, %v1089
      %v1091 = vpop.f32.mrb[0].mxu0
      %1092 = vdwg.mxu0
      %vm1093 = vcmask 1046528
      %v1094 = vrot.slane %v441, 1
      %v1095 = vrot.slane %v442, 1
      %v1096 = vsel %vm1093, %v1094, %v1095
      %v1097 = vrot.slane %v443, 1
      %v1098 = vsel %vm1093, %v1095, %v1097
      %v1099 = vrot.slane %v444, 1
      %v1100 = vsel %vm1093, %v1097, %v1099
      %v1101 = vrot.slane %v445, 1
      %v1102 = vsel %vm1093, %v1099, %v1101
      %v1103 = vrot.slane %v446, 1
      %v1104 = vsel %vm1093, %v1101, %v1103
      %v1105 = vrot.slane %v447, 1
      %v1106 = vsel %vm1093, %v1103, %v1105
      %v1107 = vrot.slane %v448, 1
      %v1108 = vsel %vm1093, %v1105, %v1107
      %v1109 = vrot.slane %v449, 1
      %v1110 = vsel %vm1093, %v1107, %v1109
      %v1111 = vrot.slane %v450, 1
      %v1112 = vsel %vm1093, %v1109, %v1111
      %v1113 = vrot.slane %v451, 1
      %v1114 = vsel %vm1093, %v1111, %v1113
      %v1115 = vrot.slane %v452, 1
      %v1116 = vsel %vm1093, %v1113, %v1115
      %v1117 = vrot.slane %v453, 1
      %v1118 = vsel %vm1093, %v1115, %v1117
      %v1119 = vrot.slane %v454, 1
      %v1120 = vsel %vm1093, %v1117, %v1119
      %v1121 = vrot.slane %v455, 1
      %v1122 = vsel %vm1093, %v1119, %v1121
      %v1123 = vrot.slane %v456, 1
      %v1124 = vsel %vm1093, %v1121, %v1123
      %v1125 = vrot.slane %v457, 1
      %v1126 = vsel %vm1093, %v1123, %v1125
      %v1127 = vrot.slane %v458, 1
      %v1128 = vsel %vm1093, %v1125, %v1127
      %v1129 = vrot.slane %v471, 1
      %v1130 = vsel %vm1093, %v1127, %v1129
      %v1132 = vunpack.c.l.b16 %v475
      %v1133 = vpack.c.b16 %v1132, %v628
      %v1134 = vrot.slane %v1133, 3
      %v1136 = vsel %vm638, %v1096, 0
      %v1139 = vsel %vm638, %v1098, 0
      %v1142 = vsel %vm638, %v1100, 0
      %v1145 = vsel %vm638, %v1102, 0
      %v1148 = vsel %vm638, %v1104, 0
      %v1151 = vsel %vm638, %v1106, 0
      %v1154 = vsel %vm638, %v1108, 0
      %v1157 = vsel %vm638, %v1110, 0
      %v1160 = vsel %vm638, %v1112, 0
      %v1163 = vsel %vm638, %v1114, 0
      %v1166 = vsel %vm638, %v1116, 0
      %v1169 = vsel %vm638, %v1118, 0
      %v1172 = vsel %vm638, %v1120, 0
      %v1175 = vsel %vm638, %v1122, 0
      %v1178 = vsel %vm638, %v1124, 0
      %v1181 = vsel %vm638, %v1126, 0
      %v1184 = vsel %vm638, %v1128, 0
      %v1187 = vsel %vm638, %v1130, 0
      %v1190 = vand.u32 %v1134, %v696
      %1192 = vmatprep.subr.bf16.mxu0 0
      %1193 = vmatpush1.bf16.msra.mxu0 %v1190
      %1194 = vmatprep.subr.bf16.mxu0 0
      %1195 = vmatpush1.bf16.msra.mxu0 0
      %1196 = vmatprep.subr.bf16.mxu0 0
      %1197 = vmatpush1.bf16.msra.mxu0 0
      %1198 = vmatprep.subr.bf16.mxu0 0
      %1199 = vmatpush1.bf16.msra.mxu0 0
      %1200 = vmatprep.subr.bf16.mxu0 0
      %1201 = vmatpush1.bf16.msra.mxu0 0
      %1202 = vmatprep.subr.bf16.mxu0 0
      %1203 = vmatpush1.bf16.msra.mxu0 0
      %1204 = vmatprep.subr.bf16.mxu0 0
      %1205 = vmatpush1.bf16.msra.mxu0 0
      %1206 = vmatprep.subr.bf16.mxu0 0
      %1207 = vmatpush1.bf16.msra.mxu0 0
      %1208 = vmatprep.subr.bf16.mxu0 0
      %1209 = vmatpush1.bf16.msra.mxu0 0
      %1210 = vmatprep.subr.bf16.mxu0 0
      %1211 = vmatpush1.bf16.msra.mxu0 0
      %1212 = vmatprep.subr.bf16.mxu0 0
      %1213 = vmatpush1.bf16.msra.mxu0 0
      %1214 = vmatprep.subr.bf16.mxu0 0
      %1215 = vmatpush1.bf16.msra.mxu0 0
      %1216 = vmatprep.subr.bf16.mxu0 0
      %1217 = vmatpush1.bf16.msra.mxu0 0
      %1218 = vmatprep.subr.bf16.mxu0 0
      %1219 = vmatpush1.bf16.msra.mxu0 0
      %1220 = vmatprep.subr.bf16.mxu0 0
      %1221 = vmatpush1.bf16.msra.mxu0 0
      %1222 = vmatprep.subr.bf16.mxu0 0
      %1223 = vmatpush1.bf16.msra.mxu0 0
      %1224 = vmatprep.mubr.bf16.mxu0 0
      %1225 = vmatmul.mubr.bf16.gmra.mrb[0].mxu0 %v1136
      %v1226 = vpop.f32.mrb[0].mxu0
      %v1227 = vadd.f32 0.0, %v1226
      %v1228 = vpop.f32.mrb[0].mxu0
      %v1229 = vpop.f32.mrb[0].mxu0
      %v1230 = vadd.f32 0.0, %v1229
      %v1231 = vpop.f32.mrb[0].mxu0
      %1232 = vmatprep.mubr.bf16.mxu0 0
      %1233 = vmatmul.mubr.bf16.gmra.mrb[0].mxu0 %v1139
      %v1234 = vpop.f32.mrb[0].mxu0
      %v1235 = vadd.f32 0.0, %v1234
      %v1236 = vpop.f32.mrb[0].mxu0
      %v1237 = vpop.f32.mrb[0].mxu0
      %v1238 = vadd.f32 0.0, %v1237
      %v1239 = vpop.f32.mrb[0].mxu0
      %1240 = vmatprep.mubr.bf16.mxu0 0
      %1241 = vmatmul.mubr.bf16.gmra.mrb[0].mxu0 %v1142
      %v1242 = vpop.f32.mrb[0].mxu0
      %v1243 = vadd.f32 0.0, %v1242
      %v1244 = vpop.f32.mrb[0].mxu0
      %v1245 = vpop.f32.mrb[0].mxu0
      %v1246 = vadd.f32 0.0, %v1245
      %v1247 = vpop.f32.mrb[0].mxu0
      %1248 = vmatprep.mubr.bf16.mxu0 0
      %1249 = vmatmul.mubr.bf16.gmra.mrb[0].mxu0 %v1145
      %v1250 = vpop.f32.mrb[0].mxu0
      %v1251 = vadd.f32 0.0, %v1250
      %v1252 = vpop.f32.mrb[0].mxu0
      %v1253 = vpop.f32.mrb[0].mxu0
      %v1254 = vadd.f32 0.0, %v1253
      %v1255 = vpop.f32.mrb[0].mxu0
      %1256 = vmatprep.mubr.bf16.mxu0 0
      %1257 = vmatmul.mubr.bf16.gmra.mrb[0].mxu0 %v1148
      %v1258 = vpop.f32.mrb[0].mxu0
      %v1259 = vadd.f32 0.0, %v1258
      %v1260 = vpop.f32.mrb[0].mxu0
      %v1261 = vpop.f32.mrb[0].mxu0
      %v1262 = vadd.f32 0.0, %v1261
      %v1263 = vpop.f32.mrb[0].mxu0
      %1264 = vmatprep.mubr.bf16.mxu0 0
      %1265 = vmatmul.mubr.bf16.gmra.mrb[0].mxu0 %v1151
      %v1266 = vpop.f32.mrb[0].mxu0
      %v1267 = vadd.f32 0.0, %v1266
      %v1268 = vpop.f32.mrb[0].mxu0
      %v1269 = vpop.f32.mrb[0].mxu0
      %v1270 = vadd.f32 0.0, %v1269
      %v1271 = vpop.f32.mrb[0].mxu0
      %1272 = vmatprep.mubr.bf16.mxu0 0
      %1273 = vmatmul.mubr.bf16.gmra.mrb[0].mxu0 %v1154
      %v1274 = vpop.f32.mrb[0].mxu0
      %v1275 = vadd.f32 0.0, %v1274
      %v1276 = vpop.f32.mrb[0].mxu0
      %v1277 = vpop.f32.mrb[0].mxu0
      %v1278 = vadd.f32 0.0, %v1277
      %v1279 = vpop.f32.mrb[0].mxu0
      %1280 = vmatprep.mubr.bf16.mxu0 0
      %1281 = vmatmul.mubr.bf16.gmra.mrb[0].mxu0 %v1157
      %v1282 = vpop.f32.mrb[0].mxu0
      %v1283 = vadd.f32 0.0, %v1282
      %v1284 = vpop.f32.mrb[0].mxu0
      %v1285 = vpop.f32.mrb[0].mxu0
      %v1286 = vadd.f32 0.0, %v1285
      %v1287 = vpop.f32.mrb[0].mxu0
      %1288 = vmatprep.mubr.bf16.mxu0 0
      %1289 = vmatmul.mubr.bf16.gmra.mrb[0].mxu0 %v1160
      %v1290 = vpop.f32.mrb[0].mxu0
      %v1291 = vadd.f32 0.0, %v1290
      %v1292 = vpop.f32.mrb[0].mxu0
      %v1293 = vpop.f32.mrb[0].mxu0
      %v1294 = vadd.f32 0.0, %v1293
      %v1295 = vpop.f32.mrb[0].mxu0
      %1296 = vmatprep.mubr.bf16.mxu0 0
      %1297 = vmatmul.mubr.bf16.gmra.mrb[0].mxu0 %v1163
      %v1298 = vpop.f32.mrb[0].mxu0
      %v1299 = vadd.f32 0.0, %v1298
      %v1300 = vpop.f32.mrb[0].mxu0
      %v1301 = vpop.f32.mrb[0].mxu0
      %v1302 = vadd.f32 0.0, %v1301
      %v1303 = vpop.f32.mrb[0].mxu0
      %1304 = vmatprep.mubr.bf16.mxu0 0
      %1305 = vmatmul.mubr.bf16.gmra.mrb[0].mxu0 %v1166
      %v1306 = vpop.f32.mrb[0].mxu0
      %v1307 = vadd.f32 0.0, %v1306
      %v1308 = vpop.f32.mrb[0].mxu0
      %v1309 = vpop.f32.mrb[0].mxu0
      %v1310 = vadd.f32 0.0, %v1309
      %v1311 = vpop.f32.mrb[0].mxu0
      %1312 = vmatprep.mubr.bf16.mxu0 0
      %1313 = vmatmul.mubr.bf16.gmra.mrb[0].mxu0 %v1169
      %v1314 = vpop.f32.mrb[0].mxu0
      %v1315 = vadd.f32 0.0, %v1314
      %v1316 = vpop.f32.mrb[0].mxu0
      %v1317 = vpop.f32.mrb[0].mxu0
      %v1318 = vadd.f32 0.0, %v1317
      %v1319 = vpop.f32.mrb[0].mxu0
      %1320 = vmatprep.mubr.bf16.mxu0 0
      %1321 = vmatmul.mubr.bf16.gmra.mrb[0].mxu0 %v1172
      %v1322 = vpop.f32.mrb[0].mxu0
      %v1323 = vadd.f32 0.0, %v1322
      %v1324 = vpop.f32.mrb[0].mxu0
      %v1325 = vpop.f32.mrb[0].mxu0
      %v1326 = vadd.f32 0.0, %v1325
      %v1327 = vpop.f32.mrb[0].mxu0
      %1328 = vmatprep.mubr.bf16.mxu0 0
      %1329 = vmatmul.mubr.bf16.gmra.mrb[0].mxu0 %v1175
      %v1330 = vpop.f32.mrb[0].mxu0
      %v1331 = vadd.f32 0.0, %v1330
      %v1332 = vpop.f32.mrb[0].mxu0
      %v1333 = vpop.f32.mrb[0].mxu0
      %v1334 = vadd.f32 0.0, %v1333
      %v1335 = vpop.f32.mrb[0].mxu0
      %1336 = vmatprep.mubr.bf16.mxu0 0
      %1337 = vmatmul.mubr.bf16.gmra.mrb[0].mxu0 %v1178
      %v1338 = vpop.f32.mrb[0].mxu0
      %v1339 = vadd.f32 0.0, %v1338
      %v1340 = vpop.f32.mrb[0].mxu0
      %v1341 = vpop.f32.mrb[0].mxu0
      %v1342 = vadd.f32 0.0, %v1341
      %v1343 = vpop.f32.mrb[0].mxu0
      %1344 = vmatprep.mubr.bf16.mxu0 0
      %1345 = vmatmul.mubr.bf16.gmra.mrb[0].mxu0 %v1181
      %v1346 = vpop.f32.mrb[0].mxu0
      %v1347 = vadd.f32 0.0, %v1346
      %v1348 = vpop.f32.mrb[0].mxu0
      %v1349 = vpop.f32.mrb[0].mxu0
      %v1350 = vadd.f32 0.0, %v1349
      %v1351 = vpop.f32.mrb[0].mxu0
      %1352 = vmatprep.mubr.bf16.mxu0 0
      %1353 = vmatmul.mubr.bf16.gmra.mrb[0].mxu0 %v1184
      %v1354 = vpop.f32.mrb[0].mxu0
      %v1355 = vadd.f32 0.0, %v1354
      %v1356 = vpop.f32.mrb[0].mxu0
      %v1357 = vpop.f32.mrb[0].mxu0
      %v1358 = vadd.f32 0.0, %v1357
      %v1359 = vpop.f32.mrb[0].mxu0
      %1360 = vmatprep.mubr.bf16.mxu0 0
      %1361 = vmatmul.mubr.bf16.gmra.mrb[0].mxu0 %v1187
      %v1362 = vpop.f32.mrb[0].mxu0
      %v1363 = vadd.f32 0.0, %v1362
      %v1364 = vpop.f32.mrb[0].mxu0
      %v1365 = vpop.f32.mrb[0].mxu0
      %v1366 = vadd.f32 0.0, %v1365
      %v1367 = vpop.f32.mrb[0].mxu0
      %1368 = vdwg.mxu0
      %v1369 = vadd.f32 %v951, %v1227
      %v1370 = vadd.f32 %v954, %v1230
      %v1371 = vadd.f32 %v959, %v1235
      %v1372 = vadd.f32 %v962, %v1238
      %v1373 = vadd.f32 %v967, %v1243
      %v1374 = vadd.f32 %v970, %v1246
      %v1375 = vadd.f32 %v975, %v1251
      %v1376 = vadd.f32 %v978, %v1254
      %v1377 = vadd.f32 %v983, %v1259
      %v1378 = vadd.f32 %v986, %v1262
      %v1379 = vadd.f32 %v991, %v1267
      %v1380 = vadd.f32 %v994, %v1270
      %v1381 = vadd.f32 %v999, %v1275
      %v1382 = vadd.f32 %v1002, %v1278
      %v1383 = vadd.f32 %v1007, %v1283
      %v1384 = vadd.f32 %v1010, %v1286
      %v1385 = vadd.f32 %v1015, %v1291
      %v1386 = vadd.f32 %v1018, %v1294
      %v1387 = vadd.f32 %v1023, %v1299
      %v1388 = vadd.f32 %v1026, %v1302
      %v1389 = vadd.f32 %v1031, %v1307
      %v1390 = vadd.f32 %v1034, %v1310
      %v1391 = vadd.f32 %v1039, %v1315
      %v1392 = vadd.f32 %v1042, %v1318
      %v1393 = vadd.f32 %v1047, %v1323
      %v1394 = vadd.f32 %v1050, %v1326
      %v1395 = vadd.f32 %v1055, %v1331
      %v1396 = vadd.f32 %v1058, %v1334
      %v1397 = vadd.f32 %v1063, %v1339
      %v1398 = vadd.f32 %v1066, %v1342
      %v1399 = vadd.f32 %v1071, %v1347
      %v1400 = vadd.f32 %v1074, %v1350
      %v1401 = vadd.f32 %v1079, %v1355
      %v1402 = vadd.f32 %v1082, %v1358
      %v1403 = vadd.f32 %v1087, %v1363
      %v1404 = vadd.f32 %v1090, %v1366
      %v1405 = vrot.slane %v472, 1
      %v1406 = vsel %vm1093, %v1129, %v1405
      %v1407 = vpack.c.b16 %v1132, %v1132
      %v1409 = vshrl.u32 %v1407, 16
      %v1411 = vshll.u32 %v1407, 16
      %v1413 = vrot.slane %v1411, 1
      %v1414 = vor.u32 %v1409, %v1413
      %v1416 = vsel %vm638, %v1406, 0
      %v1419 = vand.u32 %v1414, %v696
      %1421 = vmatprep.subr.bf16.mxu0 0
      %1422 = vmatpush1.bf16.msra.mxu0 %v1419
      %1423 = vmatprep.subr.bf16.mxu0 0
      %1424 = vmatpush1.bf16.msra.mxu0 0
      %1425 = vmatprep.subr.bf16.mxu0 0
      %1426 = vmatpush1.bf16.msra.mxu0 0
      %1427 = vmatprep.subr.bf16.mxu0 0
      %1428 = vmatpush1.bf16.msra.mxu0 0
      %1429 = vmatprep.subr.bf16.mxu0 0
      %1430 = vmatpush1.bf16.msra.mxu0 0
      %1431 = vmatprep.subr.bf16.mxu0 0
      %1432 = vmatpush1.bf16.msra.mxu0 0
      %1433 = vmatprep.subr.bf16.mxu0 0
      %1434 = vmatpush1.bf16.msra.mxu0 0
      %1435 = vmatprep.subr.bf16.mxu0 0
      %1436 = vmatpush1.bf16.msra.mxu0 0
      %1437 = vmatprep.subr.bf16.mxu0 0
      %1438 = vmatpush1.bf16.msra.mxu0 0
      %1439 = vmatprep.subr.bf16.mxu0 0
      %1440 = vmatpush1.bf16.msra.mxu0 0
      %1441 = vmatprep.subr.bf16.mxu0 0
      %1442 = vmatpush1.bf16.msra.mxu0 0
      %1443 = vmatprep.subr.bf16.mxu0 0
      %1444 = vmatpush1.bf16.msra.mxu0 0
      %1445 = vmatprep.subr.bf16.mxu0 0
      %1446 = vmatpush1.bf16.msra.mxu0 0
      %1447 = vmatprep.subr.bf16.mxu0 0
      %1448 = vmatpush1.bf16.msra.mxu0 0
      %1449 = vmatprep.subr.bf16.mxu0 0
      %1450 = vmatpush1.bf16.msra.mxu0 0
      %1451 = vmatprep.subr.bf16.mxu0 0
      %1452 = vmatpush1.bf16.msra.mxu0 0
      %1453 = vmatprep.mubr.bf16.mxu0 0
      %1454 = vmatmul.mubr.bf16.gmra.mrb[0].mxu0 %v1139
      %v1455 = vpop.f32.mrb[0].mxu0
      %v1456 = vadd.f32 0.0, %v1455
      %v1457 = vpop.f32.mrb[0].mxu0
      %v1458 = vpop.f32.mrb[0].mxu0
      %v1459 = vadd.f32 0.0, %v1458
      %v1460 = vpop.f32.mrb[0].mxu0
      %1461 = vmatprep.mubr.bf16.mxu0 0
      %1462 = vmatmul.mubr.bf16.gmra.mrb[0].mxu0 %v1142
      %v1463 = vpop.f32.mrb[0].mxu0
      %v1464 = vadd.f32 0.0, %v1463
      %v1465 = vpop.f32.mrb[0].mxu0
      %v1466 = vpop.f32.mrb[0].mxu0
      %v1467 = vadd.f32 0.0, %v1466
      %v1468 = vpop.f32.mrb[0].mxu0
      %1469 = vmatprep.mubr.bf16.mxu0 0
      %1470 = vmatmul.mubr.bf16.gmra.mrb[0].mxu0 %v1145
      %v1471 = vpop.f32.mrb[0].mxu0
      %v1472 = vadd.f32 0.0, %v1471
      %v1473 = vpop.f32.mrb[0].mxu0
      %v1474 = vpop.f32.mrb[0].mxu0
      %v1475 = vadd.f32 0.0, %v1474
      %v1476 = vpop.f32.mrb[0].mxu0
      %1477 = vmatprep.mubr.bf16.mxu0 0
      %1478 = vmatmul.mubr.bf16.gmra.mrb[0].mxu0 %v1148
      %v1479 = vpop.f32.mrb[0].mxu0
      %v1480 = vadd.f32 0.0, %v1479
      %v1481 = vpop.f32.mrb[0].mxu0
      %v1482 = vpop.f32.mrb[0].mxu0
      %v1483 = vadd.f32 0.0, %v1482
      %v1484 = vpop.f32.mrb[0].mxu0
      %1485 = vmatprep.mubr.bf16.mxu0 0
      %1486 = vmatmul.mubr.bf16.gmra.mrb[0].mxu0 %v1151
      %v1487 = vpop.f32.mrb[0].mxu0
      %v1488 = vadd.f32 0.0, %v1487
      %v1489 = vpop.f32.mrb[0].mxu0
      %v1490 = vpop.f32.mrb[0].mxu0
      %v1491 = vadd.f32 0.0, %v1490
      %v1492 = vpop.f32.mrb[0].mxu0
      %1493 = vmatprep.mubr.bf16.mxu0 0
      %1494 = vmatmul.mubr.bf16.gmra.mrb[0].mxu0 %v1154
      %v1495 = vpop.f32.mrb[0].mxu0
      %v1496 = vadd.f32 0.0, %v1495
      %v1497 = vpop.f32.mrb[0].mxu0
      %v1498 = vpop.f32.mrb[0].mxu0
      %v1499 = vadd.f32 0.0, %v1498
      %v1500 = vpop.f32.mrb[0].mxu0
      %1501 = vmatprep.mubr.bf16.mxu0 0
      %1502 = vmatmul.mubr.bf16.gmra.mrb[0].mxu0 %v1157
      %v1503 = vpop.f32.mrb[0].mxu0
      %v1504 = vadd.f32 0.0, %v1503
      %v1505 = vpop.f32.mrb[0].mxu0
      %v1506 = vpop.f32.mrb[0].mxu0
      %v1507 = vadd.f32 0.0, %v1506
      %v1508 = vpop.f32.mrb[0].mxu0
      %1509 = vmatprep.mubr.bf16.mxu0 0
      %1510 = vmatmul.mubr.bf16.gmra.mrb[0].mxu0 %v1160
      %v1511 = vpop.f32.mrb[0].mxu0
      %v1512 = vadd.f32 0.0, %v1511
      %v1513 = vpop.f32.mrb[0].mxu0
      %v1514 = vpop.f32.mrb[0].mxu0
      %v1515 = vadd.f32 0.0, %v1514
      %v1516 = vpop.f32.mrb[0].mxu0
      %1517 = vmatprep.mubr.bf16.mxu0 0
      %1518 = vmatmul.mubr.bf16.gmra.mrb[0].mxu0 %v1163
      %v1519 = vpop.f32.mrb[0].mxu0
      %v1520 = vadd.f32 0.0, %v1519
      %v1521 = vpop.f32.mrb[0].mxu0
      %v1522 = vpop.f32.mrb[0].mxu0
      %v1523 = vadd.f32 0.0, %v1522
      %v1524 = vpop.f32.mrb[0].mxu0
      %1525 = vmatprep.mubr.bf16.mxu0 0
      %1526 = vmatmul.mubr.bf16.gmra.mrb[0].mxu0 %v1166
      %v1527 = vpop.f32.mrb[0].mxu0
      %v1528 = vadd.f32 0.0, %v1527
      %v1529 = vpop.f32.mrb[0].mxu0
      %v1530 = vpop.f32.mrb[0].mxu0
      %v1531 = vadd.f32 0.0, %v1530
      %v1532 = vpop.f32.mrb[0].mxu0
      %1533 = vmatprep.mubr.bf16.mxu0 0
      %1534 = vmatmul.mubr.bf16.gmra.mrb[0].mxu0 %v1169
      %v1535 = vpop.f32.mrb[0].mxu0
      %v1536 = vadd.f32 0.0, %v1535
      %v1537 = vpop.f32.mrb[0].mxu0
      %v1538 = vpop.f32.mrb[0].mxu0
      %v1539 = vadd.f32 0.0, %v1538
      %v1540 = vpop.f32.mrb[0].mxu0
      %1541 = vmatprep.mubr.bf16.mxu0 0
      %1542 = vmatmul.mubr.bf16.gmra.mrb[0].mxu0 %v1172
      %v1543 = vpop.f32.mrb[0].mxu0
      %v1544 = vadd.f32 0.0, %v1543
      %v1545 = vpop.f32.mrb[0].mxu0
      %v1546 = vpop.f32.mrb[0].mxu0
      %v1547 = vadd.f32 0.0, %v1546
      %v1548 = vpop.f32.mrb[0].mxu0
      %1549 = vmatprep.mubr.bf16.mxu0 0
      %1550 = vmatmul.mubr.bf16.gmra.mrb[0].mxu0 %v1175
      %v1551 = vpop.f32.mrb[0].mxu0
      %v1552 = vadd.f32 0.0, %v1551
      %v1553 = vpop.f32.mrb[0].mxu0
      %v1554 = vpop.f32.mrb[0].mxu0
      %v1555 = vadd.f32 0.0, %v1554
      %v1556 = vpop.f32.mrb[0].mxu0
      %1557 = vmatprep.mubr.bf16.mxu0 0
      %1558 = vmatmul.mubr.bf16.gmra.mrb[0].mxu0 %v1178
      %v1559 = vpop.f32.mrb[0].mxu0
      %v1560 = vadd.f32 0.0, %v1559
      %v1561 = vpop.f32.mrb[0].mxu0
      %v1562 = vpop.f32.mrb[0].mxu0
      %v1563 = vadd.f32 0.0, %v1562
      %v1564 = vpop.f32.mrb[0].mxu0
      %1565 = vmatprep.mubr.bf16.mxu0 0
      %1566 = vmatmul.mubr.bf16.gmra.mrb[0].mxu0 %v1181
      %v1567 = vpop.f32.mrb[0].mxu0
      %v1568 = vadd.f32 0.0, %v1567
      %v1569 = vpop.f32.mrb[0].mxu0
      %v1570 = vpop.f32.mrb[0].mxu0
      %v1571 = vadd.f32 0.0, %v1570
      %v1572 = vpop.f32.mrb[0].mxu0
      %1573 = vmatprep.mubr.bf16.mxu0 0
      %1574 = vmatmul.mubr.bf16.gmra.mrb[0].mxu0 %v1184
      %v1575 = vpop.f32.mrb[0].mxu0
      %v1576 = vadd.f32 0.0, %v1575
      %v1577 = vpop.f32.mrb[0].mxu0
      %v1578 = vpop.f32.mrb[0].mxu0
      %v1579 = vadd.f32 0.0, %v1578
      %v1580 = vpop.f32.mrb[0].mxu0
      %1581 = vmatprep.mubr.bf16.mxu0 0
      %1582 = vmatmul.mubr.bf16.gmra.mrb[0].mxu0 %v1187
      %v1583 = vpop.f32.mrb[0].mxu0
      %v1584 = vadd.f32 0.0, %v1583
      %v1585 = vpop.f32.mrb[0].mxu0
      %v1586 = vpop.f32.mrb[0].mxu0
      %v1587 = vadd.f32 0.0, %v1586
      %v1588 = vpop.f32.mrb[0].mxu0
      %1589 = vmatprep.mubr.bf16.mxu0 0
      %1590 = vmatmul.mubr.bf16.gmra.mrb[0].mxu0 %v1416
      %v1591 = vpop.f32.mrb[0].mxu0
      %v1592 = vadd.f32 0.0, %v1591
      %v1593 = vpop.f32.mrb[0].mxu0
      %v1594 = vpop.f32.mrb[0].mxu0
      %v1595 = vadd.f32 0.0, %v1594
      %v1596 = vpop.f32.mrb[0].mxu0
      %1597 = vdwg.mxu0
      %v1598 = vadd.f32 %v1369, %v1456
      %v1599 = vadd.f32 %v1370, %v1459
      %v1600 = vadd.f32 %v1371, %v1464
      %v1601 = vadd.f32 %v1372, %v1467
      %v1602 = vadd.f32 %v1373, %v1472
      %v1603 = vadd.f32 %v1374, %v1475
      %v1604 = vadd.f32 %v1375, %v1480
      %v1605 = vadd.f32 %v1376, %v1483
      %v1606 = vadd.f32 %v1377, %v1488
      %v1607 = vadd.f32 %v1378, %v1491
      %v1608 = vadd.f32 %v1379, %v1496
      %v1609 = vadd.f32 %v1380, %v1499
      %v1610 = vadd.f32 %v1381, %v1504
      %v1611 = vadd.f32 %v1382, %v1507
      %v1612 = vadd.f32 %v1383, %v1512
      %v1613 = vadd.f32 %v1384, %v1515
      %v1614 = vadd.f32 %v1385, %v1520
      %v1615 = vadd.f32 %v1386, %v1523
      %v1616 = vadd.f32 %v1387, %v1528
      %v1617 = vadd.f32 %v1388, %v1531
      %v1618 = vadd.f32 %v1389, %v1536
      %v1619 = vadd.f32 %v1390, %v1539
      %v1620 = vadd.f32 %v1391, %v1544
      %v1621 = vadd.f32 %v1392, %v1547
      %v1622 = vadd.f32 %v1393, %v1552
      %v1623 = vadd.f32 %v1394, %v1555
      %v1624 = vadd.f32 %v1395, %v1560
      %v1625 = vadd.f32 %v1396, %v1563
      %v1626 = vadd.f32 %v1397, %v1568
      %v1627 = vadd.f32 %v1398, %v1571
      %v1628 = vadd.f32 %v1399, %v1576
      %v1629 = vadd.f32 %v1400, %v1579
      %v1630 = vadd.f32 %v1401, %v1584
      %v1631 = vadd.f32 %v1402, %v1587
      %v1632 = vadd.f32 %v1403, %v1592
      %v1633 = vadd.f32 %v1404, %v1595
      %vm1634 = vsmask.f32 6400
      %v1635 = vrot.slane %v491, 1
      %v1636 = vrot.slane %v487, 2
      %v1637 = vor.u32 %v1635, %v1636
      %v1638 = vrot.slane %v499, 1
      %v1639 = vrot.slane %v495, 2
      %v1640 = vor.u32 %v1638, %v1639
      %v1641 = vsel %vm1634, %v1637, %v1640
      %v1642 = vrot.slane %v507, 1
      %v1643 = vrot.slane %v503, 2
      %v1644 = vor.u32 %v1642, %v1643
      %v1645 = vsel %vm1634, %v1640, %v1644
      %v1646 = vrot.slane %v515, 1
      %v1647 = vrot.slane %v511, 2
      %v1648 = vor.u32 %v1646, %v1647
      %v1649 = vsel %vm1634, %v1644, %v1648
      %v1650 = vrot.slane %v523, 1
      %v1651 = vrot.slane %v519, 2
      %v1652 = vor.u32 %v1650, %v1651
      %v1653 = vsel %vm1634, %v1648, %v1652
      %v1654 = vrot.slane %v531, 1
      %v1655 = vrot.slane %v527, 2
      %v1656 = vor.u32 %v1654, %v1655
      %v1657 = vsel %vm1634, %v1652, %v1656
      %v1658 = vrot.slane %v539, 1
      %v1659 = vrot.slane %v535, 2
      %v1660 = vor.u32 %v1658, %v1659
      %v1661 = vsel %vm1634, %v1656, %v1660
      %v1662 = vrot.slane %v547, 1
      %v1663 = vrot.slane %v543, 2
      %v1664 = vor.u32 %v1662, %v1663
      %v1665 = vsel %vm1634, %v1660, %v1664
      %v1666 = vrot.slane %v555, 1
      %v1667 = vrot.slane %v551, 2
      %v1668 = vor.u32 %v1666, %v1667
      %v1669 = vsel %vm1634, %v1664, %v1668
      %v1670 = vrot.slane %v563, 1
      %v1671 = vrot.slane %v559, 2
      %v1672 = vor.u32 %v1670, %v1671
      %v1673 = vsel %vm1634, %v1668, %v1672
      %v1674 = vrot.slane %v571, 1
      %v1675 = vrot.slane %v567, 2
      %v1676 = vor.u32 %v1674, %v1675
      %v1677 = vsel %vm1634, %v1672, %v1676
      %v1678 = vrot.slane %v579, 1
      %v1679 = vrot.slane %v575, 2
      %v1680 = vor.u32 %v1678, %v1679
      %v1681 = vsel %vm1634, %v1676, %v1680
      %v1682 = vrot.slane %v587, 1
      %v1683 = vrot.slane %v583, 2
      %v1684 = vor.u32 %v1682, %v1683
      %v1685 = vsel %vm1634, %v1680, %v1684
      %v1686 = vrot.slane %v595, 1
      %v1687 = vrot.slane %v591, 2
      %v1688 = vor.u32 %v1686, %v1687
      %v1689 = vsel %vm1634, %v1684, %v1688
      %v1690 = vrot.slane %v603, 1
      %v1691 = vrot.slane %v599, 2
      %v1692 = vor.u32 %v1690, %v1691
      %v1693 = vsel %vm1634, %v1688, %v1692
      %v1694 = vrot.slane %v611, 1
      %v1695 = vrot.slane %v607, 2
      %v1696 = vor.u32 %v1694, %v1695
      %v1697 = vsel %vm1634, %v1692, %v1696
      %v1698 = vrot.slane %v619, 1
      %v1699 = vrot.slane %v615, 2
      %v1700 = vor.u32 %v1698, %v1699
      %v1701 = vsel %vm1634, %v1696, %v1700
      %v1702 = vshrl.u32 %v471, 16
      %v1704 = vrot.slane %v1702, 1
      %v1705 = vrot.slane %v623, 2
      %v1706 = vor.u32 %v1704, %v1705
      %v1707 = vsel %vm1634, %v1700, %v1706
      %v1709 = vshrl.u32 %v472, 16
      %v1711 = vrot.slane %v1709, 1
      %v1712 = vshll.u32 %v472, 16
      %v1714 = vrot.slane %v1712, 2
      %v1715 = vor.u32 %v1711, %v1714
      %v1716 = vsel %vm1634, %v1706, %v1715
      %v1717 = vrot.slane %v1407, 2
      %v1719 = vsel %vm638, %v1641, 0
      %v1722 = vsel %vm638, %v1645, 0
      %v1725 = vsel %vm638, %v1649, 0
      %v1728 = vsel %vm638, %v1653, 0
      %v1731 = vsel %vm638, %v1657, 0
      %v1734 = vsel %vm638, %v1661, 0
      %v1737 = vsel %vm638, %v1665, 0
      %v1740 = vsel %vm638, %v1669, 0
      %v1743 = vsel %vm638, %v1673, 0
      %v1746 = vsel %vm638, %v1677, 0
      %v1749 = vsel %vm638, %v1681, 0
      %v1752 = vsel %vm638, %v1685, 0
      %v1755 = vsel %vm638, %v1689, 0
      %v1758 = vsel %vm638, %v1693, 0
      %v1761 = vsel %vm638, %v1697, 0
      %v1764 = vsel %vm638, %v1701, 0
      %v1767 = vsel %vm638, %v1707, 0
      %v1770 = vsel %vm638, %v1716, 0
      %v1773 = vand.u32 %v1717, %v696
      %1775 = vmatprep.subr.bf16.mxu0 0
      %1776 = vmatpush1.bf16.msra.mxu0 %v1773
      %1777 = vmatprep.subr.bf16.mxu0 0
      %1778 = vmatpush1.bf16.msra.mxu0 0
      %1779 = vmatprep.subr.bf16.mxu0 0
      %1780 = vmatpush1.bf16.msra.mxu0 0
      %1781 = vmatprep.subr.bf16.mxu0 0
      %1782 = vmatpush1.bf16.msra.mxu0 0
      %1783 = vmatprep.subr.bf16.mxu0 0
      %1784 = vmatpush1.bf16.msra.mxu0 0
      %1785 = vmatprep.subr.bf16.mxu0 0
      %1786 = vmatpush1.bf16.msra.mxu0 0
      %1787 = vmatprep.subr.bf16.mxu0 0
      %1788 = vmatpush1.bf16.msra.mxu0 0
      %1789 = vmatprep.subr.bf16.mxu0 0
      %1790 = vmatpush1.bf16.msra.mxu0 0
      %1791 = vmatprep.subr.bf16.mxu0 0
      %1792 = vmatpush1.bf16.msra.mxu0 0
      %1793 = vmatprep.subr.bf16.mxu0 0
      %1794 = vmatpush1.bf16.msra.mxu0 0
      %1795 = vmatprep.subr.bf16.mxu0 0
      %1796 = vmatpush1.bf16.msra.mxu0 0
      %1797 = vmatprep.subr.bf16.mxu0 0
      %1798 = vmatpush1.bf16.msra.mxu0 0
      %1799 = vmatprep.subr.bf16.mxu0 0
      %1800 = vmatpush1.bf16.msra.mxu0 0
      %1801 = vmatprep.subr.bf16.mxu0 0
      %1802 = vmatpush1.bf16.msra.mxu0 0
      %1803 = vmatprep.subr.bf16.mxu0 0
      %1804 = vmatpush1.bf16.msra.mxu0 0
      %1805 = vmatprep.subr.bf16.mxu0 0
      %1806 = vmatpush1.bf16.msra.mxu0 0
      %1807 = vmatprep.mubr.bf16.mxu0 0
      %1808 = vmatmul.mubr.bf16.gmra.mrb[0].mxu0 %v1719
      %v1809 = vpop.f32.mrb[0].mxu0
      %v1810 = vadd.f32 0.0, %v1809
      %v1811 = vpop.f32.mrb[0].mxu0
      %v1812 = vpop.f32.mrb[0].mxu0
      %v1813 = vadd.f32 0.0, %v1812
      %v1814 = vpop.f32.mrb[0].mxu0
      %1815 = vmatprep.mubr.bf16.mxu0 0
      %1816 = vmatmul.mubr.bf16.gmra.mrb[0].mxu0 %v1722
      %v1817 = vpop.f32.mrb[0].mxu0
      %v1818 = vadd.f32 0.0, %v1817
      %v1819 = vpop.f32.mrb[0].mxu0
      %v1820 = vpop.f32.mrb[0].mxu0
      %v1821 = vadd.f32 0.0, %v1820
      %v1822 = vpop.f32.mrb[0].mxu0
      %1823 = vmatprep.mubr.bf16.mxu0 0
      %1824 = vmatmul.mubr.bf16.gmra.mrb[0].mxu0 %v1725
      %v1825 = vpop.f32.mrb[0].mxu0
      %v1826 = vadd.f32 0.0, %v1825
      %v1827 = vpop.f32.mrb[0].mxu0
      %v1828 = vpop.f32.mrb[0].mxu0
      %v1829 = vadd.f32 0.0, %v1828
      %v1830 = vpop.f32.mrb[0].mxu0
      %1831 = vmatprep.mubr.bf16.mxu0 0
      %1832 = vmatmul.mubr.bf16.gmra.mrb[0].mxu0 %v1728
      %v1833 = vpop.f32.mrb[0].mxu0
      %v1834 = vadd.f32 0.0, %v1833
      %v1835 = vpop.f32.mrb[0].mxu0
      %v1836 = vpop.f32.mrb[0].mxu0
      %v1837 = vadd.f32 0.0, %v1836
      %v1838 = vpop.f32.mrb[0].mxu0
      %1839 = vmatprep.mubr.bf16.mxu0 0
      %1840 = vmatmul.mubr.bf16.gmra.mrb[0].mxu0 %v1731
      %v1841 = vpop.f32.mrb[0].mxu0
      %v1842 = vadd.f32 0.0, %v1841
      %v1843 = vpop.f32.mrb[0].mxu0
      %v1844 = vpop.f32.mrb[0].mxu0
      %v1845 = vadd.f32 0.0, %v1844
      %v1846 = vpop.f32.mrb[0].mxu0
      %1847 = vmatprep.mubr.bf16.mxu0 0
      %1848 = vmatmul.mubr.bf16.gmra.mrb[0].mxu0 %v1734
      %v1849 = vpop.f32.mrb[0].mxu0
      %v1850 = vadd.f32 0.0, %v1849
      %v1851 = vpop.f32.mrb[0].mxu0
      %v1852 = vpop.f32.mrb[0].mxu0
      %v1853 = vadd.f32 0.0, %v1852
      %v1854 = vpop.f32.mrb[0].mxu0
      %1855 = vmatprep.mubr.bf16.mxu0 0
      %1856 = vmatmul.mubr.bf16.gmra.mrb[0].mxu0 %v1737
      %v1857 = vpop.f32.mrb[0].mxu0
      %v1858 = vadd.f32 0.0, %v1857
      %v1859 = vpop.f32.mrb[0].mxu0
      %v1860 = vpop.f32.mrb[0].mxu0
      %v1861 = vadd.f32 0.0, %v1860
      %v1862 = vpop.f32.mrb[0].mxu0
      %1863 = vmatprep.mubr.bf16.mxu0 0
      %1864 = vmatmul.mubr.bf16.gmra.mrb[0].mxu0 %v1740
      %v1865 = vpop.f32.mrb[0].mxu0
      %v1866 = vadd.f32 0.0, %v1865
      %v1867 = vpop.f32.mrb[0].mxu0
      %v1868 = vpop.f32.mrb[0].mxu0
      %v1869 = vadd.f32 0.0, %v1868
      %v1870 = vpop.f32.mrb[0].mxu0
      %1871 = vmatprep.mubr.bf16.mxu0 0
      %1872 = vmatmul.mubr.bf16.gmra.mrb[0].mxu0 %v1743
      %v1873 = vpop.f32.mrb[0].mxu0
      %v1874 = vadd.f32 0.0, %v1873
      %v1875 = vpop.f32.mrb[0].mxu0
      %v1876 = vpop.f32.mrb[0].mxu0
      %v1877 = vadd.f32 0.0, %v1876
      %v1878 = vpop.f32.mrb[0].mxu0
      %1879 = vmatprep.mubr.bf16.mxu0 0
      %1880 = vmatmul.mubr.bf16.gmra.mrb[0].mxu0 %v1746
      %v1881 = vpop.f32.mrb[0].mxu0
      %v1882 = vadd.f32 0.0, %v1881
      %v1883 = vpop.f32.mrb[0].mxu0
      %v1884 = vpop.f32.mrb[0].mxu0
      %v1885 = vadd.f32 0.0, %v1884
      %v1886 = vpop.f32.mrb[0].mxu0
      %1887 = vmatprep.mubr.bf16.mxu0 0
      %1888 = vmatmul.mubr.bf16.gmra.mrb[0].mxu0 %v1749
      %v1889 = vpop.f32.mrb[0].mxu0
      %v1890 = vadd.f32 0.0, %v1889
      %v1891 = vpop.f32.mrb[0].mxu0
      %v1892 = vpop.f32.mrb[0].mxu0
      %v1893 = vadd.f32 0.0, %v1892
      %v1894 = vpop.f32.mrb[0].mxu0
      %1895 = vmatprep.mubr.bf16.mxu0 0
      %1896 = vmatmul.mubr.bf16.gmra.mrb[0].mxu0 %v1752
      %v1897 = vpop.f32.mrb[0].mxu0
      %v1898 = vadd.f32 0.0, %v1897
      %v1899 = vpop.f32.mrb[0].mxu0
      %v1900 = vpop.f32.mrb[0].mxu0
      %v1901 = vadd.f32 0.0, %v1900
      %v1902 = vpop.f32.mrb[0].mxu0
      %1903 = vmatprep.mubr.bf16.mxu0 0
      %1904 = vmatmul.mubr.bf16.gmra.mrb[0].mxu0 %v1755
      %v1905 = vpop.f32.mrb[0].mxu0
      %v1906 = vadd.f32 0.0, %v1905
      %v1907 = vpop.f32.mrb[0].mxu0
      %v1908 = vpop.f32.mrb[0].mxu0
      %v1909 = vadd.f32 0.0, %v1908
      %v1910 = vpop.f32.mrb[0].mxu0
      %1911 = vmatprep.mubr.bf16.mxu0 0
      %1912 = vmatmul.mubr.bf16.gmra.mrb[0].mxu0 %v1758
      %v1913 = vpop.f32.mrb[0].mxu0
      %v1914 = vadd.f32 0.0, %v1913
      %v1915 = vpop.f32.mrb[0].mxu0
      %v1916 = vpop.f32.mrb[0].mxu0
      %v1917 = vadd.f32 0.0, %v1916
      %v1918 = vpop.f32.mrb[0].mxu0
      %1919 = vmatprep.mubr.bf16.mxu0 0
      %1920 = vmatmul.mubr.bf16.gmra.mrb[0].mxu0 %v1761
      %v1921 = vpop.f32.mrb[0].mxu0
      %v1922 = vadd.f32 0.0, %v1921
      %v1923 = vpop.f32.mrb[0].mxu0
      %v1924 = vpop.f32.mrb[0].mxu0
      %v1925 = vadd.f32 0.0, %v1924
      %v1926 = vpop.f32.mrb[0].mxu0
      %1927 = vmatprep.mubr.bf16.mxu0 0
      %1928 = vmatmul.mubr.bf16.gmra.mrb[0].mxu0 %v1764
      %v1929 = vpop.f32.mrb[0].mxu0
      %v1930 = vadd.f32 0.0, %v1929
      %v1931 = vpop.f32.mrb[0].mxu0
      %v1932 = vpop.f32.mrb[0].mxu0
      %v1933 = vadd.f32 0.0, %v1932
      %v1934 = vpop.f32.mrb[0].mxu0
      %1935 = vmatprep.mubr.bf16.mxu0 0
      %1936 = vmatmul.mubr.bf16.gmra.mrb[0].mxu0 %v1767
      %v1937 = vpop.f32.mrb[0].mxu0
      %v1938 = vadd.f32 0.0, %v1937
      %v1939 = vpop.f32.mrb[0].mxu0
      %v1940 = vpop.f32.mrb[0].mxu0
      %v1941 = vadd.f32 0.0, %v1940
      %v1942 = vpop.f32.mrb[0].mxu0
      %1943 = vmatprep.mubr.bf16.mxu0 0
      %1944 = vmatmul.mubr.bf16.gmra.mrb[0].mxu0 %v1770
      %v1945 = vpop.f32.mrb[0].mxu0
      %v1946 = vadd.f32 0.0, %v1945
      %v1947 = vpop.f32.mrb[0].mxu0
      %v1948 = vpop.f32.mrb[0].mxu0
      %v1949 = vadd.f32 0.0, %v1948
      %v1950 = vpop.f32.mrb[0].mxu0
      %1951 = vdwg.mxu0
      %v1952 = vadd.f32 %v1598, %v1810
      %v1953 = vadd.f32 %v1599, %v1813
      %v1954 = vadd.f32 %v1600, %v1818
      %v1955 = vadd.f32 %v1601, %v1821
      %v1956 = vadd.f32 %v1602, %v1826
      %v1957 = vadd.f32 %v1603, %v1829
      %v1958 = vadd.f32 %v1604, %v1834
      %v1959 = vadd.f32 %v1605, %v1837
      %v1960 = vadd.f32 %v1606, %v1842
      %v1961 = vadd.f32 %v1607, %v1845
      %v1962 = vadd.f32 %v1608, %v1850
      %v1963 = vadd.f32 %v1609, %v1853
      %v1964 = vadd.f32 %v1610, %v1858
      %v1965 = vadd.f32 %v1611, %v1861
      %v1966 = vadd.f32 %v1612, %v1866
      %v1967 = vadd.f32 %v1613, %v1869
      %v1968 = vadd.f32 %v1614, %v1874
      %v1969 = vadd.f32 %v1615, %v1877
      %v1970 = vadd.f32 %v1616, %v1882
      %v1971 = vadd.f32 %v1617, %v1885
      %v1972 = vadd.f32 %v1618, %v1890
      %v1973 = vadd.f32 %v1619, %v1893
      %v1974 = vadd.f32 %v1620, %v1898
      %v1975 = vadd.f32 %v1621, %v1901
      %v1976 = vadd.f32 %v1622, %v1906
      %v1977 = vadd.f32 %v1623, %v1909
      %v1978 = vadd.f32 %v1624, %v1914
      %v1979 = vadd.f32 %v1625, %v1917
      %v1980 = vadd.f32 %v1626, %v1922
      %v1981 = vadd.f32 %v1627, %v1925
      %v1982 = vadd.f32 %v1628, %v1930
      %v1983 = vadd.f32 %v1629, %v1933
      %v1984 = vadd.f32 %v1630, %v1938
      %v1985 = vadd.f32 %v1631, %v1941
      %v1986 = vadd.f32 %v1632, %v1946
      %v1987 = vadd.f32 %v1633, %v1949
      %vm1988 = vcmask 1045504
      %v1989 = vrot.slane %v442, 2
      %v1990 = vrot.slane %v443, 2
      %v1991 = vsel %vm1988, %v1989, %v1990
      %v1992 = vrot.slane %v444, 2
      %v1993 = vsel %vm1988, %v1990, %v1992
      %v1994 = vrot.slane %v445, 2
      %v1995 = vsel %vm1988, %v1992, %v1994
      %v1996 = vrot.slane %v446, 2
      %v1997 = vsel %vm1988, %v1994, %v1996
      %v1998 = vrot.slane %v447, 2
      %v1999 = vsel %vm1988, %v1996, %v1998
      %v2000 = vrot.slane %v448, 2
      %v2001 = vsel %vm1988, %v1998, %v2000
      %v2002 = vrot.slane %v449, 2
      %v2003 = vsel %vm1988, %v2000, %v2002
      %v2004 = vrot.slane %v450, 2
      %v2005 = vsel %vm1988, %v2002, %v2004
      %v2006 = vrot.slane %v451, 2
      %v2007 = vsel %vm1988, %v2004, %v2006
      %v2008 = vrot.slane %v452, 2
      %v2009 = vsel %vm1988, %v2006, %v2008
      %v2010 = vrot.slane %v453, 2
      %v2011 = vsel %vm1988, %v2008, %v2010
      %v2012 = vrot.slane %v454, 2
      %v2013 = vsel %vm1988, %v2010, %v2012
      %v2014 = vrot.slane %v455, 2
      %v2015 = vsel %vm1988, %v2012, %v2014
      %v2016 = vrot.slane %v456, 2
      %v2017 = vsel %vm1988, %v2014, %v2016
      %v2018 = vrot.slane %v457, 2
      %v2019 = vsel %vm1988, %v2016, %v2018
      %v2020 = vrot.slane %v458, 2
      %v2021 = vsel %vm1988, %v2018, %v2020
      %v2022 = vrot.slane %v471, 2
      %v2023 = vsel %vm1988, %v2020, %v2022
      %v2024 = vrot.slane %v472, 2
      %v2025 = vsel %vm1988, %v2022, %v2024
      %v2027 = vunpack.c.l.b16 %v476
      %v2028 = vpack.c.b16 %v2027, %v1132
      %v2030 = vshrl.u32 %v2028, 16
      %v2032 = vrot.slane %v2030, 3
      %v2033 = vshll.u32 %v2028, 16
      %v2035 = vrot.slane %v2033, 4
      %v2036 = vor.u32 %v2032, %v2035
      %v2038 = vsel %vm638, %v1991, 0
      %v2041 = vsel %vm638, %v1993, 0
      %v2044 = vsel %vm638, %v1995, 0
      %v2047 = vsel %vm638, %v1997, 0
      %v2050 = vsel %vm638, %v1999, 0
      %v2053 = vsel %vm638, %v2001, 0
      %v2056 = vsel %vm638, %v2003, 0
      %v2059 = vsel %vm638, %v2005, 0
      %v2062 = vsel %vm638, %v2007, 0
      %v2065 = vsel %vm638, %v2009, 0
      %v2068 = vsel %vm638, %v2011, 0
      %v2071 = vsel %vm638, %v2013, 0
      %v2074 = vsel %vm638, %v2015, 0
      %v2077 = vsel %vm638, %v2017, 0
      %v2080 = vsel %vm638, %v2019, 0
      %v2083 = vsel %vm638, %v2021, 0
      %v2086 = vsel %vm638, %v2023, 0
      %v2089 = vsel %vm638, %v2025, 0
      %v2092 = vand.u32 %v2036, %v696
      %2094 = vmatprep.subr.bf16.mxu0 0
      %2095 = vmatpush1.bf16.msra.mxu0 %v2092
      %2096 = vmatprep.subr.bf16.mxu0 0
      %2097 = vmatpush1.bf16.msra.mxu0 0
      %2098 = vmatprep.subr.bf16.mxu0 0
      %2099 = vmatpush1.bf16.msra.mxu0 0
      %2100 = vmatprep.subr.bf16.mxu0 0
      %2101 = vmatpush1.bf16.msra.mxu0 0
      %2102 = vmatprep.subr.bf16.mxu0 0
      %2103 = vmatpush1.bf16.msra.mxu0 0
      %2104 = vmatprep.subr.bf16.mxu0 0
      %2105 = vmatpush1.bf16.msra.mxu0 0
      %2106 = vmatprep.subr.bf16.mxu0 0
      %2107 = vmatpush1.bf16.msra.mxu0 0
      %2108 = vmatprep.subr.bf16.mxu0 0
      %2109 = vmatpush1.bf16.msra.mxu0 0
      %2110 = vmatprep.subr.bf16.mxu0 0
      %2111 = vmatpush1.bf16.msra.mxu0 0
      %2112 = vmatprep.subr.bf16.mxu0 0
      %2113 = vmatpush1.bf16.msra.mxu0 0
      %2114 = vmatprep.subr.bf16.mxu0 0
      %2115 = vmatpush1.bf16.msra.mxu0 0
      %2116 = vmatprep.subr.bf16.mxu0 0
      %2117 = vmatpush1.bf16.msra.mxu0 0
      %2118 = vmatprep.subr.bf16.mxu0 0
      %2119 = vmatpush1.bf16.msra.mxu0 0
      %2120 = vmatprep.subr.bf16.mxu0 0
      %2121 = vmatpush1.bf16.msra.mxu0 0
      %2122 = vmatprep.subr.bf16.mxu0 0
      %2123 = vmatpush1.bf16.msra.mxu0 0
      %2124 = vmatprep.subr.bf16.mxu0 0
      %2125 = vmatpush1.bf16.msra.mxu0 0
      %2126 = vmatprep.mubr.bf16.mxu0 0
      %2127 = vmatmul.mubr.bf16.gmra.mrb[0].mxu0 %v2038
      %v2128 = vpop.f32.mrb[0].mxu0
      %v2129 = vadd.f32 0.0, %v2128
      %v2130 = vpop.f32.mrb[0].mxu0
      %v2131 = vpop.f32.mrb[0].mxu0
      %v2132 = vadd.f32 0.0, %v2131
      %v2133 = vpop.f32.mrb[0].mxu0
      %2134 = vmatprep.mubr.bf16.mxu0 0
      %2135 = vmatmul.mubr.bf16.gmra.mrb[0].mxu0 %v2041
      %v2136 = vpop.f32.mrb[0].mxu0
      %v2137 = vadd.f32 0.0, %v2136
      %v2138 = vpop.f32.mrb[0].mxu0
      %v2139 = vpop.f32.mrb[0].mxu0
      %v2140 = vadd.f32 0.0, %v2139
      %v2141 = vpop.f32.mrb[0].mxu0
      %2142 = vmatprep.mubr.bf16.mxu0 0
      %2143 = vmatmul.mubr.bf16.gmra.mrb[0].mxu0 %v2044
      %v2144 = vpop.f32.mrb[0].mxu0
      %v2145 = vadd.f32 0.0, %v2144
      %v2146 = vpop.f32.mrb[0].mxu0
      %v2147 = vpop.f32.mrb[0].mxu0
      %v2148 = vadd.f32 0.0, %v2147
      %v2149 = vpop.f32.mrb[0].mxu0
      %2150 = vmatprep.mubr.bf16.mxu0 0
      %2151 = vmatmul.mubr.bf16.gmra.mrb[0].mxu0 %v2047
      %v2152 = vpop.f32.mrb[0].mxu0
      %v2153 = vadd.f32 0.0, %v2152
      %v2154 = vpop.f32.mrb[0].mxu0
      %v2155 = vpop.f32.mrb[0].mxu0
      %v2156 = vadd.f32 0.0, %v2155
      %v2157 = vpop.f32.mrb[0].mxu0
      %2158 = vmatprep.mubr.bf16.mxu0 0
      %2159 = vmatmul.mubr.bf16.gmra.mrb[0].mxu0 %v2050
      %v2160 = vpop.f32.mrb[0].mxu0
      %v2161 = vadd.f32 0.0, %v2160
      %v2162 = vpop.f32.mrb[0].mxu0
      %v2163 = vpop.f32.mrb[0].mxu0
      %v2164 = vadd.f32 0.0, %v2163
      %v2165 = vpop.f32.mrb[0].mxu0
      %2166 = vmatprep.mubr.bf16.mxu0 0
      %2167 = vmatmul.mubr.bf16.gmra.mrb[0].mxu0 %v2053
      %v2168 = vpop.f32.mrb[0].mxu0
      %v2169 = vadd.f32 0.0, %v2168
      %v2170 = vpop.f32.mrb[0].mxu0
      %v2171 = vpop.f32.mrb[0].mxu0
      %v2172 = vadd.f32 0.0, %v2171
      %v2173 = vpop.f32.mrb[0].mxu0
      %2174 = vmatprep.mubr.bf16.mxu0 0
      %2175 = vmatmul.mubr.bf16.gmra.mrb[0].mxu0 %v2056
      %v2176 = vpop.f32.mrb[0].mxu0
      %v2177 = vadd.f32 0.0, %v2176
      %v2178 = vpop.f32.mrb[0].mxu0
      %v2179 = vpop.f32.mrb[0].mxu0
      %v2180 = vadd.f32 0.0, %v2179
      %v2181 = vpop.f32.mrb[0].mxu0
      %2182 = vmatprep.mubr.bf16.mxu0 0
      %2183 = vmatmul.mubr.bf16.gmra.mrb[0].mxu0 %v2059
      %v2184 = vpop.f32.mrb[0].mxu0
      %v2185 = vadd.f32 0.0, %v2184
      %v2186 = vpop.f32.mrb[0].mxu0
      %v2187 = vpop.f32.mrb[0].mxu0
      %v2188 = vadd.f32 0.0, %v2187
      %v2189 = vpop.f32.mrb[0].mxu0
      %2190 = vmatprep.mubr.bf16.mxu0 0
      %2191 = vmatmul.mubr.bf16.gmra.mrb[0].mxu0 %v2062
      %v2192 = vpop.f32.mrb[0].mxu0
      %v2193 = vadd.f32 0.0, %v2192
      %v2194 = vpop.f32.mrb[0].mxu0
      %v2195 = vpop.f32.mrb[0].mxu0
      %v2196 = vadd.f32 0.0, %v2195
      %v2197 = vpop.f32.mrb[0].mxu0
      %2198 = vmatprep.mubr.bf16.mxu0 0
      %2199 = vmatmul.mubr.bf16.gmra.mrb[0].mxu0 %v2065
      %v2200 = vpop.f32.mrb[0].mxu0
      %v2201 = vadd.f32 0.0, %v2200
      %v2202 = vpop.f32.mrb[0].mxu0
      %v2203 = vpop.f32.mrb[0].mxu0
      %v2204 = vadd.f32 0.0, %v2203
      %v2205 = vpop.f32.mrb[0].mxu0
      %2206 = vmatprep.mubr.bf16.mxu0 0
      %2207 = vmatmul.mubr.bf16.gmra.mrb[0].mxu0 %v2068
      %v2208 = vpop.f32.mrb[0].mxu0
      %v2209 = vadd.f32 0.0, %v2208
      %v2210 = vpop.f32.mrb[0].mxu0
      %v2211 = vpop.f32.mrb[0].mxu0
      %v2212 = vadd.f32 0.0, %v2211
      %v2213 = vpop.f32.mrb[0].mxu0
      %2214 = vmatprep.mubr.bf16.mxu0 0
      %2215 = vmatmul.mubr.bf16.gmra.mrb[0].mxu0 %v2071
      %v2216 = vpop.f32.mrb[0].mxu0
      %v2217 = vadd.f32 0.0, %v2216
      %v2218 = vpop.f32.mrb[0].mxu0
      %v2219 = vpop.f32.mrb[0].mxu0
      %v2220 = vadd.f32 0.0, %v2219
      %v2221 = vpop.f32.mrb[0].mxu0
      %2222 = vmatprep.mubr.bf16.mxu0 0
      %2223 = vmatmul.mubr.bf16.gmra.mrb[0].mxu0 %v2074
      %v2224 = vpop.f32.mrb[0].mxu0
      %v2225 = vadd.f32 0.0, %v2224
      %v2226 = vpop.f32.mrb[0].mxu0
      %v2227 = vpop.f32.mrb[0].mxu0
      %v2228 = vadd.f32 0.0, %v2227
      %v2229 = vpop.f32.mrb[0].mxu0
      %2230 = vmatprep.mubr.bf16.mxu0 0
      %2231 = vmatmul.mubr.bf16.gmra.mrb[0].mxu0 %v2077
      %v2232 = vpop.f32.mrb[0].mxu0
      %v2233 = vadd.f32 0.0, %v2232
      %v2234 = vpop.f32.mrb[0].mxu0
      %v2235 = vpop.f32.mrb[0].mxu0
      %v2236 = vadd.f32 0.0, %v2235
      %v2237 = vpop.f32.mrb[0].mxu0
      %2238 = vmatprep.mubr.bf16.mxu0 0
      %2239 = vmatmul.mubr.bf16.gmra.mrb[0].mxu0 %v2080
      %v2240 = vpop.f32.mrb[0].mxu0
      %v2241 = vadd.f32 0.0, %v2240
      %v2242 = vpop.f32.mrb[0].mxu0
      %v2243 = vpop.f32.mrb[0].mxu0
      %v2244 = vadd.f32 0.0, %v2243
      %v2245 = vpop.f32.mrb[0].mxu0
      %2246 = vmatprep.mubr.bf16.mxu0 0
      %2247 = vmatmul.mubr.bf16.gmra.mrb[0].mxu0 %v2083
      %v2248 = vpop.f32.mrb[0].mxu0
      %v2249 = vadd.f32 0.0, %v2248
      %v2250 = vpop.f32.mrb[0].mxu0
      %v2251 = vpop.f32.mrb[0].mxu0
      %v2252 = vadd.f32 0.0, %v2251
      %v2253 = vpop.f32.mrb[0].mxu0
      %2254 = vmatprep.mubr.bf16.mxu0 0
      %2255 = vmatmul.mubr.bf16.gmra.mrb[0].mxu0 %v2086
      %v2256 = vpop.f32.mrb[0].mxu0
      %v2257 = vadd.f32 0.0, %v2256
      %v2258 = vpop.f32.mrb[0].mxu0
      %v2259 = vpop.f32.mrb[0].mxu0
      %v2260 = vadd.f32 0.0, %v2259
      %v2261 = vpop.f32.mrb[0].mxu0
      %2262 = vmatprep.mubr.bf16.mxu0 0
      %2263 = vmatmul.mubr.bf16.gmra.mrb[0].mxu0 %v2089
      %v2264 = vpop.f32.mrb[0].mxu0
      %v2265 = vadd.f32 0.0, %v2264
      %v2266 = vpop.f32.mrb[0].mxu0
      %v2267 = vpop.f32.mrb[0].mxu0
      %v2268 = vadd.f32 0.0, %v2267
      %v2269 = vpop.f32.mrb[0].mxu0
      %2270 = vdwg.mxu0
      %v2271 = vadd.f32 %v1952, %v2129
      %v2272 = vadd.f32 %v1953, %v2132
      %v2273 = vadd.f32 %v1954, %v2137
      %v2274 = vadd.f32 %v1955, %v2140
      %v2275 = vadd.f32 %v1956, %v2145
      %v2276 = vadd.f32 %v1957, %v2148
      %v2277 = vadd.f32 %v1958, %v2153
      %v2278 = vadd.f32 %v1959, %v2156
      %v2279 = vadd.f32 %v1960, %v2161
      %v2280 = vadd.f32 %v1961, %v2164
      %v2281 = vadd.f32 %v1962, %v2169
      %v2282 = vadd.f32 %v1963, %v2172
      %v2283 = vadd.f32 %v1964, %v2177
      %v2284 = vadd.f32 %v1965, %v2180
      %v2285 = vadd.f32 %v1966, %v2185
      %v2286 = vadd.f32 %v1967, %v2188
      %v2287 = vadd.f32 %v1968, %v2193
      %v2288 = vadd.f32 %v1969, %v2196
      %v2289 = vadd.f32 %v1970, %v2201
      %v2290 = vadd.f32 %v1971, %v2204
      %v2291 = vadd.f32 %v1972, %v2209
      %v2292 = vadd.f32 %v1973, %v2212
      %v2293 = vadd.f32 %v1974, %v2217
      %v2294 = vadd.f32 %v1975, %v2220
      %v2295 = vadd.f32 %v1976, %v2225
      %v2296 = vadd.f32 %v1977, %v2228
      %v2297 = vadd.f32 %v1978, %v2233
      %v2298 = vadd.f32 %v1979, %v2236
      %v2299 = vadd.f32 %v1980, %v2241
      %v2300 = vadd.f32 %v1981, %v2244
      %v2301 = vadd.f32 %v1982, %v2249
      %v2302 = vadd.f32 %v1983, %v2252
      %v2303 = vadd.f32 %v1984, %v2257
      %v2304 = vadd.f32 %v1985, %v2260
      %v2305 = vadd.f32 %v1986, %v2265
      %v2306 = vadd.f32 %v1987, %v2268
      %v2307 = vrot.slane %v473, 2
      %v2308 = vsel %vm1988, %v2024, %v2307
      %v2309 = vpack.c.b16 %v2027, %v2027
      %v2310 = vrot.slane %v2309, 1
      %v2312 = vsel %vm638, %v2308, 0
      %v2315 = vand.u32 %v2310, %v696
      %2317 = vmatprep.subr.bf16.mxu0 0
      %2318 = vmatpush1.bf16.msra.mxu0 %v2315
      %2319 = vmatprep.subr.bf16.mxu0 0
      %2320 = vmatpush1.bf16.msra.mxu0 0
      %2321 = vmatprep.subr.bf16.mxu0 0
      %2322 = vmatpush1.bf16.msra.mxu0 0
      %2323 = vmatprep.subr.bf16.mxu0 0
      %2324 = vmatpush1.bf16.msra.mxu0 0
      %2325 = vmatprep.subr.bf16.mxu0 0
      %2326 = vmatpush1.bf16.msra.mxu0 0
      %2327 = vmatprep.subr.bf16.mxu0 0
      %2328 = vmatpush1.bf16.msra.mxu0 0
      %2329 = vmatprep.subr.bf16.mxu0 0
      %2330 = vmatpush1.bf16.msra.mxu0 0
      %2331 = vmatprep.subr.bf16.mxu0 0
      %2332 = vmatpush1.bf16.msra.mxu0 0
      %2333 = vmatprep.subr.bf16.mxu0 0
      %2334 = vmatpush1.bf16.msra.mxu0 0
      %2335 = vmatprep.subr.bf16.mxu0 0
      %2336 = vmatpush1.bf16.msra.mxu0 0
      %2337 = vmatprep.subr.bf16.mxu0 0
      %2338 = vmatpush1.bf16.msra.mxu0 0
      %2339 = vmatprep.subr.bf16.mxu0 0
      %2340 = vmatpush1.bf16.msra.mxu0 0
      %2341 = vmatprep.subr.bf16.mxu0 0
      %2342 = vmatpush1.bf16.msra.mxu0 0
      %2343 = vmatprep.subr.bf16.mxu0 0
      %2344 = vmatpush1.bf16.msra.mxu0 0
      %2345 = vmatprep.subr.bf16.mxu0 0
      %2346 = vmatpush1.bf16.msra.mxu0 0
      %2347 = vmatprep.subr.bf16.mxu0 0
      %2348 = vmatpush1.bf16.msra.mxu0 0
      %2349 = vmatprep.mubr.bf16.mxu0 0
      %2350 = vmatmul.mubr.bf16.gmra.mrb[0].mxu0 %v2041
      %v2351 = vpop.f32.mrb[0].mxu0
      %v2352 = vadd.f32 0.0, %v2351
      %v2353 = vpop.f32.mrb[0].mxu0
      %v2354 = vpop.f32.mrb[0].mxu0
      %v2355 = vadd.f32 0.0, %v2354
      %v2356 = vpop.f32.mrb[0].mxu0
      %2357 = vmatprep.mubr.bf16.mxu0 0
      %2358 = vmatmul.mubr.bf16.gmra.mrb[0].mxu0 %v2044
      %v2359 = vpop.f32.mrb[0].mxu0
      %v2360 = vadd.f32 0.0, %v2359
      %v2361 = vpop.f32.mrb[0].mxu0
      %v2362 = vpop.f32.mrb[0].mxu0
      %v2363 = vadd.f32 0.0, %v2362
      %v2364 = vpop.f32.mrb[0].mxu0
      %2365 = vmatprep.mubr.bf16.mxu0 0
      %2366 = vmatmul.mubr.bf16.gmra.mrb[0].mxu0 %v2047
      %v2367 = vpop.f32.mrb[0].mxu0
      %v2368 = vadd.f32 0.0, %v2367
      %v2369 = vpop.f32.mrb[0].mxu0
      %v2370 = vpop.f32.mrb[0].mxu0
      %v2371 = vadd.f32 0.0, %v2370
      %v2372 = vpop.f32.mrb[0].mxu0
      %2373 = vmatprep.mubr.bf16.mxu0 0
      %2374 = vmatmul.mubr.bf16.gmra.mrb[0].mxu0 %v2050
      %v2375 = vpop.f32.mrb[0].mxu0
      %v2376 = vadd.f32 0.0, %v2375
      %v2377 = vpop.f32.mrb[0].mxu0
      %v2378 = vpop.f32.mrb[0].mxu0
      %v2379 = vadd.f32 0.0, %v2378
      %v2380 = vpop.f32.mrb[0].mxu0
      %2381 = vmatprep.mubr.bf16.mxu0 0
      %2382 = vmatmul.mubr.bf16.gmra.mrb[0].mxu0 %v2053
      %v2383 = vpop.f32.mrb[0].mxu0
      %v2384 = vadd.f32 0.0, %v2383
      %v2385 = vpop.f32.mrb[0].mxu0
      %v2386 = vpop.f32.mrb[0].mxu0
      %v2387 = vadd.f32 0.0, %v2386
      %v2388 = vpop.f32.mrb[0].mxu0
      %2389 = vmatprep.mubr.bf16.mxu0 0
      %2390 = vmatmul.mubr.bf16.gmra.mrb[0].mxu0 %v2056
      %v2391 = vpop.f32.mrb[0].mxu0
      %v2392 = vadd.f32 0.0, %v2391
      %v2393 = vpop.f32.mrb[0].mxu0
      %v2394 = vpop.f32.mrb[0].mxu0
      %v2395 = vadd.f32 0.0, %v2394
      %v2396 = vpop.f32.mrb[0].mxu0
      %2397 = vmatprep.mubr.bf16.mxu0 0
      %2398 = vmatmul.mubr.bf16.gmra.mrb[0].mxu0 %v2059
      %v2399 = vpop.f32.mrb[0].mxu0
      %v2400 = vadd.f32 0.0, %v2399
      %v2401 = vpop.f32.mrb[0].mxu0
      %v2402 = vpop.f32.mrb[0].mxu0
      %v2403 = vadd.f32 0.0, %v2402
      %v2404 = vpop.f32.mrb[0].mxu0
      %2405 = vmatprep.mubr.bf16.mxu0 0
      %2406 = vmatmul.mubr.bf16.gmra.mrb[0].mxu0 %v2062
      %v2407 = vpop.f32.mrb[0].mxu0
      %v2408 = vadd.f32 0.0, %v2407
      %v2409 = vpop.f32.mrb[0].mxu0
      %v2410 = vpop.f32.mrb[0].mxu0
      %v2411 = vadd.f32 0.0, %v2410
      %v2412 = vpop.f32.mrb[0].mxu0
      %2413 = vmatprep.mubr.bf16.mxu0 0
      %2414 = vmatmul.mubr.bf16.gmra.mrb[0].mxu0 %v2065
      %v2415 = vpop.f32.mrb[0].mxu0
      %v2416 = vadd.f32 0.0, %v2415
      %v2417 = vpop.f32.mrb[0].mxu0
      %v2418 = vpop.f32.mrb[0].mxu0
      %v2419 = vadd.f32 0.0, %v2418
      %v2420 = vpop.f32.mrb[0].mxu0
      %2421 = vmatprep.mubr.bf16.mxu0 0
      %2422 = vmatmul.mubr.bf16.gmra.mrb[0].mxu0 %v2068
      %v2423 = vpop.f32.mrb[0].mxu0
      %v2424 = vadd.f32 0.0, %v2423
      %v2425 = vpop.f32.mrb[0].mxu0
      %v2426 = vpop.f32.mrb[0].mxu0
      %v2427 = vadd.f32 0.0, %v2426
      %v2428 = vpop.f32.mrb[0].mxu0
      %2429 = vmatprep.mubr.bf16.mxu0 0
      %2430 = vmatmul.mubr.bf16.gmra.mrb[0].mxu0 %v2071
      %v2431 = vpop.f32.mrb[0].mxu0
      %v2432 = vadd.f32 0.0, %v2431
      %v2433 = vpop.f32.mrb[0].mxu0
      %v2434 = vpop.f32.mrb[0].mxu0
      %v2435 = vadd.f32 0.0, %v2434
      %v2436 = vpop.f32.mrb[0].mxu0
      %2437 = vmatprep.mubr.bf16.mxu0 0
      %2438 = vmatmul.mubr.bf16.gmra.mrb[0].mxu0 %v2074
      %v2439 = vpop.f32.mrb[0].mxu0
      %v2440 = vadd.f32 0.0, %v2439
      %v2441 = vpop.f32.mrb[0].mxu0
      %v2442 = vpop.f32.mrb[0].mxu0
      %v2443 = vadd.f32 0.0, %v2442
      %v2444 = vpop.f32.mrb[0].mxu0
      %2445 = vmatprep.mubr.bf16.mxu0 0
      %2446 = vmatmul.mubr.bf16.gmra.mrb[0].mxu0 %v2077
      %v2447 = vpop.f32.mrb[0].mxu0
      %v2448 = vadd.f32 0.0, %v2447
      %v2449 = vpop.f32.mrb[0].mxu0
      %v2450 = vpop.f32.mrb[0].mxu0
      %v2451 = vadd.f32 0.0, %v2450
      %v2452 = vpop.f32.mrb[0].mxu0
      %2453 = vmatprep.mubr.bf16.mxu0 0
      %2454 = vmatmul.mubr.bf16.gmra.mrb[0].mxu0 %v2080
      %v2455 = vpop.f32.mrb[0].mxu0
      %v2456 = vadd.f32 0.0, %v2455
      %v2457 = vpop.f32.mrb[0].mxu0
      %v2458 = vpop.f32.mrb[0].mxu0
      %v2459 = vadd.f32 0.0, %v2458
      %v2460 = vpop.f32.mrb[0].mxu0
      %2461 = vmatprep.mubr.bf16.mxu0 0
      %2462 = vmatmul.mubr.bf16.gmra.mrb[0].mxu0 %v2083
      %v2463 = vpop.f32.mrb[0].mxu0
      %v2464 = vadd.f32 0.0, %v2463
      %v2465 = vpop.f32.mrb[0].mxu0
      %v2466 = vpop.f32.mrb[0].mxu0
      %v2467 = vadd.f32 0.0, %v2466
      %v2468 = vpop.f32.mrb[0].mxu0
      %2469 = vmatprep.mubr.bf16.mxu0 0
      %2470 = vmatmul.mubr.bf16.gmra.mrb[0].mxu0 %v2086
      %v2471 = vpop.f32.mrb[0].mxu0
      %v2472 = vadd.f32 0.0, %v2471
      %v2473 = vpop.f32.mrb[0].mxu0
      %v2474 = vpop.f32.mrb[0].mxu0
      %v2475 = vadd.f32 0.0, %v2474
      %v2476 = vpop.f32.mrb[0].mxu0
      %2477 = vmatprep.mubr.bf16.mxu0 0
      %2478 = vmatmul.mubr.bf16.gmra.mrb[0].mxu0 %v2089
      %v2479 = vpop.f32.mrb[0].mxu0
      %v2480 = vadd.f32 0.0, %v2479
      %v2481 = vpop.f32.mrb[0].mxu0
      %v2482 = vpop.f32.mrb[0].mxu0
      %v2483 = vadd.f32 0.0, %v2482
      %v2484 = vpop.f32.mrb[0].mxu0
      %2485 = vmatprep.mubr.bf16.mxu0 0
      %2486 = vmatmul.mubr.bf16.gmra.mrb[0].mxu0 %v2312
      %v2487 = vpop.f32.mrb[0].mxu0
      %v2488 = vadd.f32 0.0, %v2487
      %v2489 = vpop.f32.mrb[0].mxu0
      %v2490 = vpop.f32.mrb[0].mxu0
      %v2491 = vadd.f32 0.0, %v2490
      %v2492 = vpop.f32.mrb[0].mxu0
      %2493 = vdwg.mxu0
      %v2494 = vadd.f32 %v2271, %v2352
      %v2495 = vadd.f32 %v2272, %v2355
      %v2496 = vadd.f32 %v2273, %v2360
      %v2497 = vadd.f32 %v2274, %v2363
      %v2498 = vadd.f32 %v2275, %v2368
      %v2499 = vadd.f32 %v2276, %v2371
      %v2500 = vadd.f32 %v2277, %v2376
      %v2501 = vadd.f32 %v2278, %v2379
      %v2502 = vadd.f32 %v2279, %v2384
      %v2503 = vadd.f32 %v2280, %v2387
      %v2504 = vadd.f32 %v2281, %v2392
      %v2505 = vadd.f32 %v2282, %v2395
      %v2506 = vadd.f32 %v2283, %v2400
      %v2507 = vadd.f32 %v2284, %v2403
      %v2508 = vadd.f32 %v2285, %v2408
      %v2509 = vadd.f32 %v2286, %v2411
      %v2510 = vadd.f32 %v2287, %v2416
      %v2511 = vadd.f32 %v2288, %v2419
      %v2512 = vadd.f32 %v2289, %v2424
      %v2513 = vadd.f32 %v2290, %v2427
      %v2514 = vadd.f32 %v2291, %v2432
      %v2515 = vadd.f32 %v2292, %v2435
      %v2516 = vadd.f32 %v2293, %v2440
      %v2517 = vadd.f32 %v2294, %v2443
      %v2518 = vadd.f32 %v2295, %v2448
      %v2519 = vadd.f32 %v2296, %v2451
      %v2520 = vadd.f32 %v2297, %v2456
      %v2521 = vadd.f32 %v2298, %v2459
      %v2522 = vadd.f32 %v2299, %v2464
      %v2523 = vadd.f32 %v2300, %v2467
      %v2524 = vadd.f32 %v2301, %v2472
      %v2525 = vadd.f32 %v2302, %v2475
      %v2526 = vadd.f32 %v2303, %v2480
      %v2527 = vadd.f32 %v2304, %v2483
      %v2528 = vadd.f32 %v2305, %v2488
      %v2529 = vadd.f32 %v2306, %v2491
      %vm2530 = vsmask.f32 5376
      %v2531 = vrot.slane %v499, 2
      %v2532 = vrot.slane %v495, 3
      %v2533 = vor.u32 %v2531, %v2532
      %v2534 = vrot.slane %v507, 2
      %v2535 = vrot.slane %v503, 3
      %v2536 = vor.u32 %v2534, %v2535
      %v2537 = vsel %vm2530, %v2533, %v2536
      %v2538 = vrot.slane %v515, 2
      %v2539 = vrot.slane %v511, 3
      %v2540 = vor.u32 %v2538, %v2539
      %v2541 = vsel %vm2530, %v2536, %v2540
      %v2542 = vrot.slane %v523, 2
      %v2543 = vrot.slane %v519, 3
      %v2544 = vor.u32 %v2542, %v2543
      %v2545 = vsel %vm2530, %v2540, %v2544
      %v2546 = vrot.slane %v531, 2
      %v2547 = vrot.slane %v527, 3
      %v2548 = vor.u32 %v2546, %v2547
      %v2549 = vsel %vm2530, %v2544, %v2548
      %v2550 = vrot.slane %v539, 2
      %v2551 = vrot.slane %v535, 3
      %v2552 = vor.u32 %v2550, %v2551
      %v2553 = vsel %vm2530, %v2548, %v2552
      %v2554 = vrot.slane %v547, 2
      %v2555 = vrot.slane %v543, 3
      %v2556 = vor.u32 %v2554, %v2555
      %v2557 = vsel %vm2530, %v2552, %v2556
      %v2558 = vrot.slane %v555, 2
      %v2559 = vrot.slane %v551, 3
      %v2560 = vor.u32 %v2558, %v2559
      %v2561 = vsel %vm2530, %v2556, %v2560
      %v2562 = vrot.slane %v563, 2
      %v2563 = vrot.slane %v559, 3
      %v2564 = vor.u32 %v2562, %v2563
      %v2565 = vsel %vm2530, %v2560, %v2564
      %v2566 = vrot.slane %v571, 2
      %v2567 = vrot.slane %v567, 3
      %v2568 = vor.u32 %v2566, %v2567
      %v2569 = vsel %vm2530, %v2564, %v2568
      %v2570 = vrot.slane %v579, 2
      %v2571 = vrot.slane %v575, 3
      %v2572 = vor.u32 %v2570, %v2571
      %v2573 = vsel %vm2530, %v2568, %v2572
      %v2574 = vrot.slane %v587, 2
      %v2575 = vrot.slane %v583, 3
      %v2576 = vor.u32 %v2574, %v2575
      %v2577 = vsel %vm2530, %v2572, %v2576
      %v2578 = vrot.slane %v595, 2
      %v2579 = vrot.slane %v591, 3
      %v2580 = vor.u32 %v2578, %v2579
      %v2581 = vsel %vm2530, %v2576, %v2580
      %v2582 = vrot.slane %v603, 2
      %v2583 = vrot.slane %v599, 3
      %v2584 = vor.u32 %v2582, %v2583
      %v2585 = vsel %vm2530, %v2580, %v2584
      %v2586 = vrot.slane %v611, 2
      %v2587 = vrot.slane %v607, 3
      %v2588 = vor.u32 %v2586, %v2587
      %v2589 = vsel %vm2530, %v2584, %v2588
      %v2590 = vrot.slane %v619, 2
      %v2591 = vrot.slane %v615, 3
      %v2592 = vor.u32 %v2590, %v2591
      %v2593 = vsel %vm2530, %v2588, %v2592
      %v2594 = vrot.slane %v1702, 2
      %v2595 = vrot.slane %v623, 3
      %v2596 = vor.u32 %v2594, %v2595
      %v2597 = vsel %vm2530, %v2592, %v2596
      %v2598 = vrot.slane %v1709, 2
      %v2599 = vrot.slane %v1712, 3
      %v2600 = vor.u32 %v2598, %v2599
      %v2601 = vsel %vm2530, %v2596, %v2600
      %v2603 = vshrl.u32 %v473, 16
      %v2605 = vrot.slane %v2603, 2
      %v2606 = vshll.u32 %v473, 16
      %v2608 = vrot.slane %v2606, 3
      %v2609 = vor.u32 %v2605, %v2608
      %v2610 = vsel %vm2530, %v2600, %v2609
      %v2612 = vshrl.u32 %v2309, 16
      %v2614 = vrot.slane %v2612, 2
      %v2615 = vshll.u32 %v2309, 16
      %v2617 = vrot.slane %v2615, 3
      %v2618 = vor.u32 %v2614, %v2617
      %v2620 = vsel %vm638, %v2537, 0
      %v2623 = vsel %vm638, %v2541, 0
      %v2626 = vsel %vm638, %v2545, 0
      %v2629 = vsel %vm638, %v2549, 0
      %v2632 = vsel %vm638, %v2553, 0
      %v2635 = vsel %vm638, %v2557, 0
      %v2638 = vsel %vm638, %v2561, 0
      %v2641 = vsel %vm638, %v2565, 0
      %v2644 = vsel %vm638, %v2569, 0
      %v2647 = vsel %vm638, %v2573, 0
      %v2650 = vsel %vm638, %v2577, 0
      %v2653 = vsel %vm638, %v2581, 0
      %v2656 = vsel %vm638, %v2585, 0
      %v2659 = vsel %vm638, %v2589, 0
      %v2662 = vsel %vm638, %v2593, 0
      %v2665 = vsel %vm638, %v2597, 0
      %v2668 = vsel %vm638, %v2601, 0
      %v2671 = vsel %vm638, %v2610, 0
      %v2674 = vand.u32 %v2618, %v696
      %2676 = vmatprep.subr.bf16.mxu0 0
      %2677 = vmatpush1.bf16.msra.mxu0 %v2674
      %2678 = vmatprep.subr.bf16.mxu0 0
      %2679 = vmatpush1.bf16.msra.mxu0 0
      %2680 = vmatprep.subr.bf16.mxu0 0
      %2681 = vmatpush1.bf16.msra.mxu0 0
      %2682 = vmatprep.subr.bf16.mxu0 0
      %2683 = vmatpush1.bf16.msra.mxu0 0
      %2684 = vmatprep.subr.bf16.mxu0 0
      %2685 = vmatpush1.bf16.msra.mxu0 0
      %2686 = vmatprep.subr.bf16.mxu0 0
      %2687 = vmatpush1.bf16.msra.mxu0 0
      %2688 = vmatprep.subr.bf16.mxu0 0
      %2689 = vmatpush1.bf16.msra.mxu0 0
      %2690 = vmatprep.subr.bf16.mxu0 0
      %2691 = vmatpush1.bf16.msra.mxu0 0
      %2692 = vmatprep.subr.bf16.mxu0 0
      %2693 = vmatpush1.bf16.msra.mxu0 0
      %2694 = vmatprep.subr.bf16.mxu0 0
      %2695 = vmatpush1.bf16.msra.mxu0 0
      %2696 = vmatprep.subr.bf16.mxu0 0
      %2697 = vmatpush1.bf16.msra.mxu0 0
      %2698 = vmatprep.subr.bf16.mxu0 0
      %2699 = vmatpush1.bf16.msra.mxu0 0
      %2700 = vmatprep.subr.bf16.mxu0 0
      %2701 = vmatpush1.bf16.msra.mxu0 0
      %2702 = vmatprep.subr.bf16.mxu0 0
      %2703 = vmatpush1.bf16.msra.mxu0 0
      %2704 = vmatprep.subr.bf16.mxu0 0
      %2705 = vmatpush1.bf16.msra.mxu0 0
      %2706 = vmatprep.subr.bf16.mxu0 0
      %2707 = vmatpush1.bf16.msra.mxu0 0
      %2708 = vmatprep.mubr.bf16.mxu0 0
      %2709 = vmatmul.mubr.bf16.gmra.mrb[0].mxu0 %v2620
      %v2710 = vpop.f32.mrb[0].mxu0
      %v2711 = vadd.f32 0.0, %v2710
      %v2712 = vpop.f32.mrb[0].mxu0
      %v2713 = vpop.f32.mrb[0].mxu0
      %v2714 = vadd.f32 0.0, %v2713
      %v2715 = vpop.f32.mrb[0].mxu0
      %2716 = vmatprep.mubr.bf16.mxu0 0
      %2717 = vmatmul.mubr.bf16.gmra.mrb[0].mxu0 %v2623
      %v2718 = vpop.f32.mrb[0].mxu0
      %v2719 = vadd.f32 0.0, %v2718
      %v2720 = vpop.f32.mrb[0].mxu0
      %v2721 = vpop.f32.mrb[0].mxu0
      %v2722 = vadd.f32 0.0, %v2721
      %v2723 = vpop.f32.mrb[0].mxu0
      %2724 = vmatprep.mubr.bf16.mxu0 0
      %2725 = vmatmul.mubr.bf16.gmra.mrb[0].mxu0 %v2626
      %v2726 = vpop.f32.mrb[0].mxu0
      %v2727 = vadd.f32 0.0, %v2726
      %v2728 = vpop.f32.mrb[0].mxu0
      %v2729 = vpop.f32.mrb[0].mxu0
      %v2730 = vadd.f32 0.0, %v2729
      %v2731 = vpop.f32.mrb[0].mxu0
      %2732 = vmatprep.mubr.bf16.mxu0 0
      %2733 = vmatmul.mubr.bf16.gmra.mrb[0].mxu0 %v2629
      %v2734 = vpop.f32.mrb[0].mxu0
      %v2735 = vadd.f32 0.0, %v2734
      %v2736 = vpop.f32.mrb[0].mxu0
      %v2737 = vpop.f32.mrb[0].mxu0
      %v2738 = vadd.f32 0.0, %v2737
      %v2739 = vpop.f32.mrb[0].mxu0
      %2740 = vmatprep.mubr.bf16.mxu0 0
      %2741 = vmatmul.mubr.bf16.gmra.mrb[0].mxu0 %v2632
      %v2742 = vpop.f32.mrb[0].mxu0
      %v2743 = vadd.f32 0.0, %v2742
      %v2744 = vpop.f32.mrb[0].mxu0
      %v2745 = vpop.f32.mrb[0].mxu0
      %v2746 = vadd.f32 0.0, %v2745
      %v2747 = vpop.f32.mrb[0].mxu0
      %2748 = vmatprep.mubr.bf16.mxu0 0
      %2749 = vmatmul.mubr.bf16.gmra.mrb[0].mxu0 %v2635
      %v2750 = vpop.f32.mrb[0].mxu0
      %v2751 = vadd.f32 0.0, %v2750
      %v2752 = vpop.f32.mrb[0].mxu0
      %v2753 = vpop.f32.mrb[0].mxu0
      %v2754 = vadd.f32 0.0, %v2753
      %v2755 = vpop.f32.mrb[0].mxu0
      %2756 = vmatprep.mubr.bf16.mxu0 0
      %2757 = vmatmul.mubr.bf16.gmra.mrb[0].mxu0 %v2638
      %v2758 = vpop.f32.mrb[0].mxu0
      %v2759 = vadd.f32 0.0, %v2758
      %v2760 = vpop.f32.mrb[0].mxu0
      %v2761 = vpop.f32.mrb[0].mxu0
      %v2762 = vadd.f32 0.0, %v2761
      %v2763 = vpop.f32.mrb[0].mxu0
      %2764 = vmatprep.mubr.bf16.mxu0 0
      %2765 = vmatmul.mubr.bf16.gmra.mrb[0].mxu0 %v2641
      %v2766 = vpop.f32.mrb[0].mxu0
      %v2767 = vadd.f32 0.0, %v2766
      %v2768 = vpop.f32.mrb[0].mxu0
      %v2769 = vpop.f32.mrb[0].mxu0
      %v2770 = vadd.f32 0.0, %v2769
      %v2771 = vpop.f32.mrb[0].mxu0
      %2772 = vmatprep.mubr.bf16.mxu0 0
      %2773 = vmatmul.mubr.bf16.gmra.mrb[0].mxu0 %v2644
      %v2774 = vpop.f32.mrb[0].mxu0
      %v2775 = vadd.f32 0.0, %v2774
      %v2776 = vpop.f32.mrb[0].mxu0
      %v2777 = vpop.f32.mrb[0].mxu0
      %v2778 = vadd.f32 0.0, %v2777
      %v2779 = vpop.f32.mrb[0].mxu0
      %2780 = vmatprep.mubr.bf16.mxu0 0
      %2781 = vmatmul.mubr.bf16.gmra.mrb[0].mxu0 %v2647
      %v2782 = vpop.f32.mrb[0].mxu0
      %v2783 = vadd.f32 0.0, %v2782
      %v2784 = vpop.f32.mrb[0].mxu0
      %v2785 = vpop.f32.mrb[0].mxu0
      %v2786 = vadd.f32 0.0, %v2785
      %v2787 = vpop.f32.mrb[0].mxu0
      %2788 = vmatprep.mubr.bf16.mxu0 0
      %2789 = vmatmul.mubr.bf16.gmra.mrb[0].mxu0 %v2650
      %v2790 = vpop.f32.mrb[0].mxu0
      %v2791 = vadd.f32 0.0, %v2790
      %v2792 = vpop.f32.mrb[0].mxu0
      %v2793 = vpop.f32.mrb[0].mxu0
      %v2794 = vadd.f32 0.0, %v2793
      %v2795 = vpop.f32.mrb[0].mxu0
      %2796 = vmatprep.mubr.bf16.mxu0 0
      %2797 = vmatmul.mubr.bf16.gmra.mrb[0].mxu0 %v2653
      %v2798 = vpop.f32.mrb[0].mxu0
      %v2799 = vadd.f32 0.0, %v2798
      %v2800 = vpop.f32.mrb[0].mxu0
      %v2801 = vpop.f32.mrb[0].mxu0
      %v2802 = vadd.f32 0.0, %v2801
      %v2803 = vpop.f32.mrb[0].mxu0
      %2804 = vmatprep.mubr.bf16.mxu0 0
      %2805 = vmatmul.mubr.bf16.gmra.mrb[0].mxu0 %v2656
      %v2806 = vpop.f32.mrb[0].mxu0
      %v2807 = vadd.f32 0.0, %v2806
      %v2808 = vpop.f32.mrb[0].mxu0
      %v2809 = vpop.f32.mrb[0].mxu0
      %v2810 = vadd.f32 0.0, %v2809
      %v2811 = vpop.f32.mrb[0].mxu0
      %2812 = vmatprep.mubr.bf16.mxu0 0
      %2813 = vmatmul.mubr.bf16.gmra.mrb[0].mxu0 %v2659
      %v2814 = vpop.f32.mrb[0].mxu0
      %v2815 = vadd.f32 0.0, %v2814
      %v2816 = vpop.f32.mrb[0].mxu0
      %v2817 = vpop.f32.mrb[0].mxu0
      %v2818 = vadd.f32 0.0, %v2817
      %v2819 = vpop.f32.mrb[0].mxu0
      %2820 = vmatprep.mubr.bf16.mxu0 0
      %2821 = vmatmul.mubr.bf16.gmra.mrb[0].mxu0 %v2662
      %v2822 = vpop.f32.mrb[0].mxu0
      %v2823 = vadd.f32 0.0, %v2822
      %v2824 = vpop.f32.mrb[0].mxu0
      %v2825 = vpop.f32.mrb[0].mxu0
      %v2826 = vadd.f32 0.0, %v2825
      %v2827 = vpop.f32.mrb[0].mxu0
      %2828 = vmatprep.mubr.bf16.mxu0 0
      %2829 = vmatmul.mubr.bf16.gmra.mrb[0].mxu0 %v2665
      %v2830 = vpop.f32.mrb[0].mxu0
      %v2831 = vadd.f32 0.0, %v2830
      %v2832 = vpop.f32.mrb[0].mxu0
      %v2833 = vpop.f32.mrb[0].mxu0
      %v2834 = vadd.f32 0.0, %v2833
      %v2835 = vpop.f32.mrb[0].mxu0
      %2836 = vmatprep.mubr.bf16.mxu0 0
      %2837 = vmatmul.mubr.bf16.gmra.mrb[0].mxu0 %v2668
      %v2838 = vpop.f32.mrb[0].mxu0
      %v2839 = vadd.f32 0.0, %v2838
      %v2840 = vpop.f32.mrb[0].mxu0
      %v2841 = vpop.f32.mrb[0].mxu0
      %v2842 = vadd.f32 0.0, %v2841
      %v2843 = vpop.f32.mrb[0].mxu0
      %2844 = vmatprep.mubr.bf16.mxu0 0
      %2845 = vmatmul.mubr.bf16.gmra.mrb[0].mxu0 %v2671
      %v2846 = vpop.f32.mrb[0].mxu0
      %v2847 = vadd.f32 0.0, %v2846
      %v2848 = vpop.f32.mrb[0].mxu0
      %v2849 = vpop.f32.mrb[0].mxu0
      %v2850 = vadd.f32 0.0, %v2849
      %v2851 = vpop.f32.mrb[0].mxu0
      %2852 = vdwg.mxu0
      %v2853 = vadd.f32 %v2494, %v2711
      %v2854 = vadd.f32 %v2495, %v2714
      %v2855 = vadd.f32 %v2496, %v2719
      %v2856 = vadd.f32 %v2497, %v2722
      %v2857 = vadd.f32 %v2498, %v2727
      %v2858 = vadd.f32 %v2499, %v2730
      %v2859 = vadd.f32 %v2500, %v2735
      %v2860 = vadd.f32 %v2501, %v2738
      %v2861 = vadd.f32 %v2502, %v2743
      %v2862 = vadd.f32 %v2503, %v2746
      %v2863 = vadd.f32 %v2504, %v2751
      %v2864 = vadd.f32 %v2505, %v2754
      %v2865 = vadd.f32 %v2506, %v2759
      %v2866 = vadd.f32 %v2507, %v2762
      %v2867 = vadd.f32 %v2508, %v2767
      %v2868 = vadd.f32 %v2509, %v2770
      %v2869 = vadd.f32 %v2510, %v2775
      %v2870 = vadd.f32 %v2511, %v2778
      %v2871 = vadd.f32 %v2512, %v2783
      %v2872 = vadd.f32 %v2513, %v2786
      %v2873 = vadd.f32 %v2514, %v2791
      %v2874 = vadd.f32 %v2515, %v2794
      %v2875 = vadd.f32 %v2516, %v2799
      %v2876 = vadd.f32 %v2517, %v2802
      %v2877 = vadd.f32 %v2518, %v2807
      %v2878 = vadd.f32 %v2519, %v2810
      %v2879 = vadd.f32 %v2520, %v2815
      %v2880 = vadd.f32 %v2521, %v2818
      %v2881 = vadd.f32 %v2522, %v2823
      %v2882 = vadd.f32 %v2523, %v2826
      %v2883 = vadd.f32 %v2524, %v2831
      %v2884 = vadd.f32 %v2525, %v2834
      %v2885 = vadd.f32 %v2526, %v2839
      %v2886 = vadd.f32 %v2527, %v2842
      %v2887 = vadd.f32 %v2528, %v2847
      %v2888 = vadd.f32 %v2529, %v2850
      %vm2889 = vcmask 1044480
      %v2890 = vrot.slane %v443, 3
      %v2891 = vrot.slane %v444, 3
      %v2892 = vsel %vm2889, %v2890, %v2891
      %v2893 = vrot.slane %v445, 3
      %v2894 = vsel %vm2889, %v2891, %v2893
      %v2895 = vrot.slane %v446, 3
      %v2896 = vsel %vm2889, %v2893, %v2895
      %v2897 = vrot.slane %v447, 3
      %v2898 = vsel %vm2889, %v2895, %v2897
      %v2899 = vrot.slane %v448, 3
      %v2900 = vsel %vm2889, %v2897, %v2899
      %v2901 = vrot.slane %v449, 3
      %v2902 = vsel %vm2889, %v2899, %v2901
      %v2903 = vrot.slane %v450, 3
      %v2904 = vsel %vm2889, %v2901, %v2903
      %v2905 = vrot.slane %v451, 3
      %v2906 = vsel %vm2889, %v2903, %v2905
      %v2907 = vrot.slane %v452, 3
      %v2908 = vsel %vm2889, %v2905, %v2907
      %v2909 = vrot.slane %v453, 3
      %v2910 = vsel %vm2889, %v2907, %v2909
      %v2911 = vrot.slane %v454, 3
      %v2912 = vsel %vm2889, %v2909, %v2911
      %v2913 = vrot.slane %v455, 3
      %v2914 = vsel %vm2889, %v2911, %v2913
      %v2915 = vrot.slane %v456, 3
      %v2916 = vsel %vm2889, %v2913, %v2915
      %v2917 = vrot.slane %v457, 3
      %v2918 = vsel %vm2889, %v2915, %v2917
      %v2919 = vrot.slane %v458, 3
      %v2920 = vsel %vm2889, %v2917, %v2919
      %v2921 = vrot.slane %v471, 3
      %v2922 = vsel %vm2889, %v2919, %v2921
      %v2923 = vrot.slane %v472, 3
      %v2924 = vsel %vm2889, %v2921, %v2923
      %v2925 = vrot.slane %v473, 3
      %v2926 = vsel %vm2889, %v2923, %v2925
      %v2928 = vsel %vm638, %v2892, 0
      %v2931 = vsel %vm638, %v2894, 0
      %v2934 = vsel %vm638, %v2896, 0
      %v2937 = vsel %vm638, %v2898, 0
      %v2940 = vsel %vm638, %v2900, 0
      %v2943 = vsel %vm638, %v2902, 0
      %v2946 = vsel %vm638, %v2904, 0
      %v2949 = vsel %vm638, %v2906, 0
      %v2952 = vsel %vm638, %v2908, 0
      %v2955 = vsel %vm638, %v2910, 0
      %v2958 = vsel %vm638, %v2912, 0
      %v2961 = vsel %vm638, %v2914, 0
      %v2964 = vsel %vm638, %v2916, 0
      %v2967 = vsel %vm638, %v2918, 0
      %v2970 = vsel %vm638, %v2920, 0
      %v2973 = vsel %vm638, %v2922, 0
      %v2976 = vsel %vm638, %v2924, 0
      %v2979 = vsel %vm638, %v2926, 0
      %v2982 = vand.u32 %v477, %v696
      %2984 = vmatprep.subr.bf16.mxu0 0
      %2985 = vmatpush1.bf16.msra.mxu0 %v2982
      %2986 = vmatprep.subr.bf16.mxu0 0
      %2987 = vmatpush1.bf16.msra.mxu0 0
      %2988 = vmatprep.subr.bf16.mxu0 0
      %2989 = vmatpush1.bf16.msra.mxu0 0
      %2990 = vmatprep.subr.bf16.mxu0 0
      %2991 = vmatpush1.bf16.msra.mxu0 0
      %2992 = vmatprep.subr.bf16.mxu0 0
      %2993 = vmatpush1.bf16.msra.mxu0 0
      %2994 = vmatprep.subr.bf16.mxu0 0
      %2995 = vmatpush1.bf16.msra.mxu0 0
      %2996 = vmatprep.subr.bf16.mxu0 0
      %2997 = vmatpush1.bf16.msra.mxu0 0
      %2998 = vmatprep.subr.bf16.mxu0 0
      %2999 = vmatpush1.bf16.msra.mxu0 0
      %3000 = vmatprep.subr.bf16.mxu0 0
      %3001 = vmatpush1.bf16.msra.mxu0 0
      %3002 = vmatprep.subr.bf16.mxu0 0
      %3003 = vmatpush1.bf16.msra.mxu0 0
      %3004 = vmatprep.subr.bf16.mxu0 0
      %3005 = vmatpush1.bf16.msra.mxu0 0
      %3006 = vmatprep.subr.bf16.mxu0 0
      %3007 = vmatpush1.bf16.msra.mxu0 0
      %3008 = vmatprep.subr.bf16.mxu0 0
      %3009 = vmatpush1.bf16.msra.mxu0 0
      %3010 = vmatprep.subr.bf16.mxu0 0
      %3011 = vmatpush1.bf16.msra.mxu0 0
      %3012 = vmatprep.subr.bf16.mxu0 0
      %3013 = vmatpush1.bf16.msra.mxu0 0
      %3014 = vmatprep.subr.bf16.mxu0 0
      %3015 = vmatpush1.bf16.msra.mxu0 0
      %3016 = vmatprep.mubr.bf16.mxu0 0
      %3017 = vmatmul.mubr.bf16.gmra.mrb[0].mxu0 %v2928
      %v3018 = vpop.f32.mrb[0].mxu0
      %v3019 = vadd.f32 0.0, %v3018
      %v3020 = vpop.f32.mrb[0].mxu0
      %v3021 = vpop.f32.mrb[0].mxu0
      %v3022 = vadd.f32 0.0, %v3021
      %v3023 = vpop.f32.mrb[0].mxu0
      %3024 = vmatprep.mubr.bf16.mxu0 0
      %3025 = vmatmul.mubr.bf16.gmra.mrb[0].mxu0 %v2931
      %v3026 = vpop.f32.mrb[0].mxu0
      %v3027 = vadd.f32 0.0, %v3026
      %v3028 = vpop.f32.mrb[0].mxu0
      %v3029 = vpop.f32.mrb[0].mxu0
      %v3030 = vadd.f32 0.0, %v3029
      %v3031 = vpop.f32.mrb[0].mxu0
      %3032 = vmatprep.mubr.bf16.mxu0 0
      %3033 = vmatmul.mubr.bf16.gmra.mrb[0].mxu0 %v2934
      %v3034 = vpop.f32.mrb[0].mxu0
      %v3035 = vadd.f32 0.0, %v3034
      %v3036 = vpop.f32.mrb[0].mxu0
      %v3037 = vpop.f32.mrb[0].mxu0
      %v3038 = vadd.f32 0.0, %v3037
      %v3039 = vpop.f32.mrb[0].mxu0
      %3040 = vmatprep.mubr.bf16.mxu0 0
      %3041 = vmatmul.mubr.bf16.gmra.mrb[0].mxu0 %v2937
      %v3042 = vpop.f32.mrb[0].mxu0
      %v3043 = vadd.f32 0.0, %v3042
      %v3044 = vpop.f32.mrb[0].mxu0
      %v3045 = vpop.f32.mrb[0].mxu0
      %v3046 = vadd.f32 0.0, %v3045
      %v3047 = vpop.f32.mrb[0].mxu0
      %3048 = vmatprep.mubr.bf16.mxu0 0
      %3049 = vmatmul.mubr.bf16.gmra.mrb[0].mxu0 %v2940
      %v3050 = vpop.f32.mrb[0].mxu0
      %v3051 = vadd.f32 0.0, %v3050
      %v3052 = vpop.f32.mrb[0].mxu0
      %v3053 = vpop.f32.mrb[0].mxu0
      %v3054 = vadd.f32 0.0, %v3053
      %v3055 = vpop.f32.mrb[0].mxu0
      %3056 = vmatprep.mubr.bf16.mxu0 0
      %3057 = vmatmul.mubr.bf16.gmra.mrb[0].mxu0 %v2943
      %v3058 = vpop.f32.mrb[0].mxu0
      %v3059 = vadd.f32 0.0, %v3058
      %v3060 = vpop.f32.mrb[0].mxu0
      %v3061 = vpop.f32.mrb[0].mxu0
      %v3062 = vadd.f32 0.0, %v3061
      %v3063 = vpop.f32.mrb[0].mxu0
      %3064 = vmatprep.mubr.bf16.mxu0 0
      %3065 = vmatmul.mubr.bf16.gmra.mrb[0].mxu0 %v2946
      %v3066 = vpop.f32.mrb[0].mxu0
      %v3067 = vadd.f32 0.0, %v3066
      %v3068 = vpop.f32.mrb[0].mxu0
      %v3069 = vpop.f32.mrb[0].mxu0
      %v3070 = vadd.f32 0.0, %v3069
      %v3071 = vpop.f32.mrb[0].mxu0
      %3072 = vmatprep.mubr.bf16.mxu0 0
      %3073 = vmatmul.mubr.bf16.gmra.mrb[0].mxu0 %v2949
      %v3074 = vpop.f32.mrb[0].mxu0
      %v3075 = vadd.f32 0.0, %v3074
      %v3076 = vpop.f32.mrb[0].mxu0
      %v3077 = vpop.f32.mrb[0].mxu0
      %v3078 = vadd.f32 0.0, %v3077
      %v3079 = vpop.f32.mrb[0].mxu0
      %3080 = vmatprep.mubr.bf16.mxu0 0
      %3081 = vmatmul.mubr.bf16.gmra.mrb[0].mxu0 %v2952
      %v3082 = vpop.f32.mrb[0].mxu0
      %v3083 = vadd.f32 0.0, %v3082
      %v3084 = vpop.f32.mrb[0].mxu0
      %v3085 = vpop.f32.mrb[0].mxu0
      %v3086 = vadd.f32 0.0, %v3085
      %v3087 = vpop.f32.mrb[0].mxu0
      %3088 = vmatprep.mubr.bf16.mxu0 0
      %3089 = vmatmul.mubr.bf16.gmra.mrb[0].mxu0 %v2955
      %v3090 = vpop.f32.mrb[0].mxu0
      %v3091 = vadd.f32 0.0, %v3090
      %v3092 = vpop.f32.mrb[0].mxu0
      %v3093 = vpop.f32.mrb[0].mxu0
      %v3094 = vadd.f32 0.0, %v3093
      %v3095 = vpop.f32.mrb[0].mxu0
      %3096 = vmatprep.mubr.bf16.mxu0 0
      %3097 = vmatmul.mubr.bf16.gmra.mrb[0].mxu0 %v2958
      %v3098 = vpop.f32.mrb[0].mxu0
      %v3099 = vadd.f32 0.0, %v3098
      %v3100 = vpop.f32.mrb[0].mxu0
      %v3101 = vpop.f32.mrb[0].mxu0
      %v3102 = vadd.f32 0.0, %v3101
      %v3103 = vpop.f32.mrb[0].mxu0
      %3104 = vmatprep.mubr.bf16.mxu0 0
      %3105 = vmatmul.mubr.bf16.gmra.mrb[0].mxu0 %v2961
      %v3106 = vpop.f32.mrb[0].mxu0
      %v3107 = vadd.f32 0.0, %v3106
      %v3108 = vpop.f32.mrb[0].mxu0
      %v3109 = vpop.f32.mrb[0].mxu0
      %v3110 = vadd.f32 0.0, %v3109
      %v3111 = vpop.f32.mrb[0].mxu0
      %3112 = vmatprep.mubr.bf16.mxu0 0
      %3113 = vmatmul.mubr.bf16.gmra.mrb[0].mxu0 %v2964
      %v3114 = vpop.f32.mrb[0].mxu0
      %v3115 = vadd.f32 0.0, %v3114
      %v3116 = vpop.f32.mrb[0].mxu0
      %v3117 = vpop.f32.mrb[0].mxu0
      %v3118 = vadd.f32 0.0, %v3117
      %v3119 = vpop.f32.mrb[0].mxu0
      %3120 = vmatprep.mubr.bf16.mxu0 0
      %3121 = vmatmul.mubr.bf16.gmra.mrb[0].mxu0 %v2967
      %v3122 = vpop.f32.mrb[0].mxu0
      %v3123 = vadd.f32 0.0, %v3122
      %v3124 = vpop.f32.mrb[0].mxu0
      %v3125 = vpop.f32.mrb[0].mxu0
      %v3126 = vadd.f32 0.0, %v3125
      %v3127 = vpop.f32.mrb[0].mxu0
      %3128 = vmatprep.mubr.bf16.mxu0 0
      %3129 = vmatmul.mubr.bf16.gmra.mrb[0].mxu0 %v2970
      %v3130 = vpop.f32.mrb[0].mxu0
      %v3131 = vadd.f32 0.0, %v3130
      %v3132 = vpop.f32.mrb[0].mxu0
      %v3133 = vpop.f32.mrb[0].mxu0
      %v3134 = vadd.f32 0.0, %v3133
      %v3135 = vpop.f32.mrb[0].mxu0
      %3136 = vmatprep.mubr.bf16.mxu0 0
      %3137 = vmatmul.mubr.bf16.gmra.mrb[0].mxu0 %v2973
      %v3138 = vpop.f32.mrb[0].mxu0
      %v3139 = vadd.f32 0.0, %v3138
      %v3140 = vpop.f32.mrb[0].mxu0
      %v3141 = vpop.f32.mrb[0].mxu0
      %v3142 = vadd.f32 0.0, %v3141
      %v3143 = vpop.f32.mrb[0].mxu0
      %3144 = vmatprep.mubr.bf16.mxu0 0
      %3145 = vmatmul.mubr.bf16.gmra.mrb[0].mxu0 %v2976
      %v3146 = vpop.f32.mrb[0].mxu0
      %v3147 = vadd.f32 0.0, %v3146
      %v3148 = vpop.f32.mrb[0].mxu0
      %v3149 = vpop.f32.mrb[0].mxu0
      %v3150 = vadd.f32 0.0, %v3149
      %v3151 = vpop.f32.mrb[0].mxu0
      %3152 = vmatprep.mubr.bf16.mxu0 0
      %3153 = vmatmul.mubr.bf16.gmra.mrb[0].mxu0 %v2979
      %v3154 = vpop.f32.mrb[0].mxu0
      %v3155 = vadd.f32 0.0, %v3154
      %v3156 = vpop.f32.mrb[0].mxu0
      %v3157 = vpop.f32.mrb[0].mxu0
      %v3158 = vadd.f32 0.0, %v3157
      %v3159 = vpop.f32.mrb[0].mxu0
      %3160 = vdwg.mxu0
      %v3161 = vadd.f32 %v2853, %v3019
      %v3162 = vadd.f32 %v2854, %v3022
      %v3163 = vadd.f32 %v2855, %v3027
      %v3164 = vadd.f32 %v2856, %v3030
      %v3165 = vadd.f32 %v2857, %v3035
      %v3166 = vadd.f32 %v2858, %v3038
      %v3167 = vadd.f32 %v2859, %v3043
      %v3168 = vadd.f32 %v2860, %v3046
      %v3169 = vadd.f32 %v2861, %v3051
      %v3170 = vadd.f32 %v2862, %v3054
      %v3171 = vadd.f32 %v2863, %v3059
      %v3172 = vadd.f32 %v2864, %v3062
      %v3173 = vadd.f32 %v2865, %v3067
      %v3174 = vadd.f32 %v2866, %v3070
      %v3175 = vadd.f32 %v2867, %v3075
      %v3176 = vadd.f32 %v2868, %v3078
      %v3177 = vadd.f32 %v2869, %v3083
      %v3178 = vadd.f32 %v2870, %v3086
      %v3179 = vadd.f32 %v2871, %v3091
      %v3180 = vadd.f32 %v2872, %v3094
      %v3181 = vadd.f32 %v2873, %v3099
      %v3182 = vadd.f32 %v2874, %v3102
      %v3183 = vadd.f32 %v2875, %v3107
      %v3184 = vadd.f32 %v2876, %v3110
      %v3185 = vadd.f32 %v2877, %v3115
      %v3186 = vadd.f32 %v2878, %v3118
      %v3187 = vadd.f32 %v2879, %v3123
      %v3188 = vadd.f32 %v2880, %v3126
      %v3189 = vadd.f32 %v2881, %v3131
      %v3190 = vadd.f32 %v2882, %v3134
      %v3191 = vadd.f32 %v2883, %v3139
      %v3192 = vadd.f32 %v2884, %v3142
      %v3193 = vadd.f32 %v2885, %v3147
      %v3194 = vadd.f32 %v2886, %v3150
      %v3195 = vadd.f32 %v2887, %v3155
      %v3196 = vadd.f32 %v2888, %v3158
      %v3197 = vld [vmem:[%s312] sm:$0x1]
      %v3199 = vlaneseq
      %v3200 = vshrl.u32 %v3199, 7
      %v3201 = vsub.s32 0, %v3200
      %v3202 = vrot.slane %v3197, %v3201
      %v3204 = vadd.f32 %v3161, %v3202
      %v3205 = vadd.f32 %v3162, %v3202
      %v3206 = vadd.f32 %v3163, %v3202
      %v3207 = vadd.f32 %v3164, %v3202
      %v3208 = vadd.f32 %v3165, %v3202
      %v3209 = vadd.f32 %v3166, %v3202
      %v3210 = vadd.f32 %v3167, %v3202
      %v3211 = vadd.f32 %v3168, %v3202
      %v3212 = vadd.f32 %v3169, %v3202
      %v3213 = vadd.f32 %v3170, %v3202
      %v3214 = vadd.f32 %v3171, %v3202
      %v3215 = vadd.f32 %v3172, %v3202
      %v3216 = vadd.f32 %v3173, %v3202
      %v3217 = vadd.f32 %v3174, %v3202
      %v3218 = vadd.f32 %v3175, %v3202
      %v3219 = vadd.f32 %v3176, %v3202
      %v3220 = vadd.f32 %v3177, %v3202
      %v3221 = vadd.f32 %v3178, %v3202
      %v3222 = vadd.f32 %v3179, %v3202
      %v3223 = vadd.f32 %v3180, %v3202
      %v3224 = vadd.f32 %v3181, %v3202
      %v3225 = vadd.f32 %v3182, %v3202
      %v3226 = vadd.f32 %v3183, %v3202
      %v3227 = vadd.f32 %v3184, %v3202
      %v3228 = vadd.f32 %v3185, %v3202
      %v3229 = vadd.f32 %v3186, %v3202
      %v3230 = vadd.f32 %v3187, %v3202
      %v3231 = vadd.f32 %v3188, %v3202
      %v3232 = vadd.f32 %v3189, %v3202
      %v3233 = vadd.f32 %v3190, %v3202
      %v3234 = vadd.f32 %v3191, %v3202
      %v3235 = vadd.f32 %v3192, %v3202
      %v3236 = vadd.f32 %v3193, %v3202
      %v3237 = vadd.f32 %v3194, %v3202
      %v3238 = vadd.f32 %v3195, %v3202
      %v3239 = vadd.f32 %v3196, %v3202
      %v3240 = vmax.f32 %v3204, 0.0
      %v3241 = vmax.f32 %v3205, 0.0
      %v3242 = vmax.f32 %v3206, 0.0
      %v3243 = vmax.f32 %v3207, 0.0
      %v3244 = vmax.f32 %v3208, 0.0
      %v3245 = vmax.f32 %v3209, 0.0
      %v3246 = vmax.f32 %v3210, 0.0
      %v3247 = vmax.f32 %v3211, 0.0
      %v3248 = vmax.f32 %v3212, 0.0
      %v3249 = vmax.f32 %v3213, 0.0
      %v3250 = vmax.f32 %v3214, 0.0
      %v3251 = vmax.f32 %v3215, 0.0
      %v3252 = vmax.f32 %v3216, 0.0
      %v3253 = vmax.f32 %v3217, 0.0
      %v3254 = vmax.f32 %v3218, 0.0
      %v3255 = vmax.f32 %v3219, 0.0
      %v3256 = vmax.f32 %v3220, 0.0
      %v3257 = vmax.f32 %v3221, 0.0
      %v3258 = vmax.f32 %v3222, 0.0
      %v3259 = vmax.f32 %v3223, 0.0
      %v3260 = vmax.f32 %v3224, 0.0
      %v3261 = vmax.f32 %v3225, 0.0
      %v3262 = vmax.f32 %v3226, 0.0
      %v3263 = vmax.f32 %v3227, 0.0
      %v3264 = vmax.f32 %v3228, 0.0
      %v3265 = vmax.f32 %v3229, 0.0
      %v3266 = vmax.f32 %v3230, 0.0
      %v3267 = vmax.f32 %v3231, 0.0
      %v3268 = vmax.f32 %v3232, 0.0
      %v3269 = vmax.f32 %v3233, 0.0
      %v3270 = vmax.f32 %v3234, 0.0
      %v3271 = vmax.f32 %v3235, 0.0
      %v3272 = vmax.f32 %v3236, 0.0
      %v3273 = vmax.f32 %v3237, 0.0
      %v3274 = vmax.f32 %v3238, 0.0
      %v3275 = vmax.f32 %v3239, 0.0
      %v3276 = vpack.c.bf16 %v3241, %v3240
      %v3277 = vpack.c.bf16 %v3243, %v3242
      %v3278 = vpack.c.bf16 %v3245, %v3244
      %v3279 = vpack.c.bf16 %v3247, %v3246
      %v3280 = vpack.c.bf16 %v3249, %v3248
      %v3281 = vpack.c.bf16 %v3251, %v3250
      %v3282 = vpack.c.bf16 %v3253, %v3252
      %v3283 = vpack.c.bf16 %v3255, %v3254
      %v3284 = vpack.c.bf16 %v3257, %v3256
      %v3285 = vpack.c.bf16 %v3259, %v3258
      %v3286 = vpack.c.bf16 %v3261, %v3260
      %v3287 = vpack.c.bf16 %v3263, %v3262
      %v3288 = vpack.c.bf16 %v3265, %v3264
      %v3289 = vpack.c.bf16 %v3267, %v3266
      %v3290 = vpack.c.bf16 %v3269, %v3268
      %v3291 = vpack.c.bf16 %v3271, %v3270
      %v3292 = vpack.c.bf16 %v3273, %v3272
      %v3293 = vpack.c.bf16 %v3275, %v3274
      %v3312 = vunpack.c.l.b16 %v3276
      %v3313 = vunpack.c.h.b16 %v3276
      %v3314 = vunpack.c.l.b16 %v3277
      %v3315 = vunpack.c.h.b16 %v3277
      %v3316 = vunpack.c.l.b16 %v3278
      %v3317 = vunpack.c.h.b16 %v3278
      %v3318 = vunpack.c.l.b16 %v3279
      %v3319 = vunpack.c.h.b16 %v3279
      %v3320 = vunpack.c.l.b16 %v3280
      %v3321 = vunpack.c.h.b16 %v3280
      %v3322 = vunpack.c.l.b16 %v3281
      %v3323 = vunpack.c.h.b16 %v3281
      %v3324 = vunpack.c.l.b16 %v3282
      %v3325 = vunpack.c.h.b16 %v3282
      %v3326 = vunpack.c.l.b16 %v3283
      %v3327 = vunpack.c.h.b16 %v3283
      %v3328 = vunpack.c.l.b16 %v3284
      %v3329 = vunpack.c.h.b16 %v3284
      %v3330 = vunpack.c.l.b16 %v3285
      %v3331 = vunpack.c.h.b16 %v3285
      %v3332 = vunpack.c.l.b16 %v3286
      %v3333 = vunpack.c.h.b16 %v3286
      %v3334 = vunpack.c.l.b16 %v3287
      %v3335 = vunpack.c.h.b16 %v3287
      %v3336 = vunpack.c.l.b16 %v3288
      %v3337 = vunpack.c.h.b16 %v3288
      %v3338 = vunpack.c.l.b16 %v3289
      %v3339 = vunpack.c.h.b16 %v3289
      %v3340 = vunpack.c.l.b16 %v3290
      %v3341 = vunpack.c.h.b16 %v3290
      %v3342 = vunpack.c.l.b16 %v3291
      %v3343 = vunpack.c.h.b16 %v3291
      %v3344 = vunpack.c.l.b16 %v3292
      %v3345 = vunpack.c.h.b16 %v3292
      %v3346 = vunpack.c.l.b16 %v3293
      %v3347 = vunpack.c.h.b16 %v3293
      %v3348 = vpack.c.b16 %v3312, %v3312
      %v3349 = vpack.c.b16 %v3313, %v3313
      %v3350 = vpack.c.b16 %v3314, %v3314
      %v3351 = vpack.c.b16 %v3315, %v3315
      %v3352 = vpack.c.b16 %v3316, %v3316
      %v3353 = vpack.c.b16 %v3317, %v3317
      %v3354 = vpack.c.b16 %v3318, %v3318
      %v3355 = vpack.c.b16 %v3319, %v3319
      %v3356 = vpack.c.b16 %v3320, %v3320
      %v3357 = vpack.c.b16 %v3321, %v3321
      %v3358 = vpack.c.b16 %v3322, %v3322
      %v3359 = vpack.c.b16 %v3323, %v3323
      %v3360 = vpack.c.b16 %v3324, %v3324
      %v3361 = vpack.c.b16 %v3325, %v3325
      %v3362 = vpack.c.b16 %v3326, %v3326
      %v3363 = vpack.c.b16 %v3327, %v3327
      %v3364 = vpack.c.b16 %v3328, %v3328
      %v3365 = vpack.c.b16 %v3329, %v3329
      %v3366 = vpack.c.b16 %v3330, %v3330
      %v3367 = vpack.c.b16 %v3331, %v3331
      %v3368 = vpack.c.b16 %v3332, %v3332
      %v3369 = vpack.c.b16 %v3333, %v3333
      %v3370 = vpack.c.b16 %v3334, %v3334
      %v3371 = vpack.c.b16 %v3335, %v3335
      %v3372 = vpack.c.b16 %v3336, %v3336
      %v3373 = vpack.c.b16 %v3337, %v3337
      %v3374 = vpack.c.b16 %v3338, %v3338
      %v3375 = vpack.c.b16 %v3339, %v3339
      %v3376 = vpack.c.b16 %v3340, %v3340
      %v3377 = vpack.c.b16 %v3341, %v3341
      %v3378 = vpack.c.b16 %v3342, %v3342
      %v3379 = vpack.c.b16 %v3343, %v3343
      %v3380 = vpack.c.b16 %v3344, %v3344
      %v3381 = vpack.c.b16 %v3345, %v3345
      %v3382 = vpack.c.b16 %v3346, %v3346
      %v3383 = vpack.c.b16 %v3347, %v3347
      %vm3420 = vcmask 519168
      %3421 = vst.msk [vmem:[%s324] sm:$0xf] %vm3420, %v3348
      %3422 = vst.msk [vmem:[%s324 + $0x4] sm:$0xf] %vm3420, %v3349
      %3423 = vst.msk [vmem:[%s324 + $0x8] sm:$0xf] %vm3420, %v3350
      %3424 = vst.msk [vmem:[%s324 + $0xc] sm:$0xf] %vm3420, %v3351
      %3425 = vst.msk [vmem:[%s324 + $0x10] sm:$0xf] %vm3420, %v3352
      %3426 = vst.msk [vmem:[%s324 + $0x14] sm:$0xf] %vm3420, %v3353
      %3427 = vst.msk [vmem:[%s324 + $0x18] sm:$0xf] %vm3420, %v3354
      %3428 = vst.msk [vmem:[%s324 + $0x1c] sm:$0xf] %vm3420, %v3355
      %3429 = vst.msk [vmem:[%s324 + $0x20] sm:$0xf] %vm3420, %v3356
      %3430 = vst.msk [vmem:[%s324 + $0x24] sm:$0xf] %vm3420, %v3357
      %3431 = vst.msk [vmem:[%s324 + $0x28] sm:$0xf] %vm3420, %v3358
      %3432 = vst.msk [vmem:[%s324 + $0x2c] sm:$0xf] %vm3420, %v3359
      %3433 = vst.msk [vmem:[%s324 + $0x30] sm:$0xf] %vm3420, %v3360
      %3434 = vst.msk [vmem:[%s324 + $0x34] sm:$0xf] %vm3420, %v3361
      %3435 = vst.msk [vmem:[%s324 + $0x38] sm:$0xf] %vm3420, %v3362
      %3436 = vst.msk [vmem:[%s324 + $0x3c] sm:$0xf] %vm3420, %v3363
      %3437 = vst.msk [vmem:[%s324 + $0x40] sm:$0xf] %vm3420, %v3364
      %3438 = vst.msk [vmem:[%s324 + $0x44] sm:$0xf] %vm3420, %v3365
      %3439 = vst.msk [vmem:[%s324 + $0x48] sm:$0xf] %vm3420, %v3366
      %3440 = vst.msk [vmem:[%s324 + $0x4c] sm:$0xf] %vm3420, %v3367
      %3441 = vst.msk [vmem:[%s324 + $0x50] sm:$0xf] %vm3420, %v3368
      %3442 = vst.msk [vmem:[%s324 + $0x54] sm:$0xf] %vm3420, %v3369
      %3443 = vst.msk [vmem:[%s324 + $0x58] sm:$0xf] %vm3420, %v3370
      %3444 = vst.msk [vmem:[%s324 + $0x5c] sm:$0xf] %vm3420, %v3371
      %3445 = vst.msk [vmem:[%s324 + $0x60] sm:$0xf] %vm3420, %v3372
      %3446 = vst.msk [vmem:[%s324 + $0x64] sm:$0xf] %vm3420, %v3373
      %3447 = vst.msk [vmem:[%s324 + $0x68] sm:$0xf] %vm3420, %v3374
      %3448 = vst.msk [vmem:[%s324 + $0x6c] sm:$0xf] %vm3420, %v3375
      %3449 = vst.msk [vmem:[%s324 + $0x70] sm:$0xf] %vm3420, %v3376
      %3450 = vst.msk [vmem:[%s324 + $0x74] sm:$0xf] %vm3420, %v3377
      %3451 = vst.msk [vmem:[%s324 + $0x78] sm:$0xf] %vm3420, %v3378
      %3452 = vst.msk [vmem:[%s324 + $0x7c] sm:$0xf] %vm3420, %v3379
      %3453 = vst.msk [vmem:[%s324 + $0x80] sm:$0xf] %vm3420, %v3380
      %3454 = vst.msk [vmem:[%s324 + $0x84] sm:$0xf] %vm3420, %v3381
      %3455 = vst.msk [vmem:[%s324 + $0x88] sm:$0xf] %vm3420, %v3382
      %3456 = vst.msk [vmem:[%s324 + $0x8c] sm:$0xf] %vm3420, %v3383
      %s3457 = smul.u32 36, %s21
      %p3458 = scmp.lt.s32.totalorder %s20, 1
      %s3459 = scalar_select %p3458, %s20, 1
      %p3460 = scmp.lt.s32.totalorder %s3457, 35
      %s3461 = scalar_select %p3460, %s3457, 35
      %p3462 = scmp.lt.s32.totalorder %s22, 0
      %s3463 = scalar_select %p3462, %s22, 0
      %s3464 = sadd.s32 %s3463, %s3461
      %s3465 = smul.addr %s3459, 36
      %s3466 = sadd.s32 %s3464, %s3465
      %s3467 = smul.addr %s3466, 4
      %s3468 = scalar_lea.vmem %s4, %s3467
      // Predicated region
      $region37: #{tpu_custom_call.1} parent=35 // pred_check
        %p3469 = pneg %p166
      $region38: #{tpu_custom_call.1} parent=35 // pred_check_branch
        %3471 = sbr.rel (%p3469) target = $region40
      $region39: #{tpu_custom_call.1} parent=35 // pred_region
        %s3472 = smul.u32 36, %s21
      $region40: #{tpu_custom_call.1} parent=35 // pred_fallthru
        _
    $region36: #{tpu_custom_call.1} parent=5 // pred_fallthru
      _
    %p3473 = scmp.le.s32.totalorder 2, %s10
    // Predicated region
    $region41: #{tpu_custom_call.1} parent=5 // pred_check
      %p3474 = pneg %p3473
    $region42: #{tpu_custom_call.1} parent=5 // pred_check_branch
      %3476 = sbr.rel (%p3474) target = $region44
    $region43: #{tpu_custom_call.1} parent=5 // pred_region
      %s3477 = ssub.s32 %s10, 2
      // Predicated region
      $region45: #{tpu_custom_call.1} parent=43 // pred_check
        %p3478 = pneg %p172
      $region46: #{tpu_custom_call.1} parent=43 // pred_check_branch
        %3480 = sbr.rel (%p3478) target = $region48
      $region47: #{tpu_custom_call.1} parent=43 // pred_region
        %s3481 = smul.u32 36, %s24
        %p3482 = scmp.lt.s32.totalorder %s23, 1
        %s3483 = scalar_select %p3482, %s23, 1
        %p3484 = scmp.lt.s32.totalorder %s3481, 35
        %s3485 = scalar_select %p3484, %s3481, 35
        %p3486 = scmp.lt.s32.totalorder %s25, 0
        %s3487 = scalar_select %p3486, %s25, 0
        %s3488 = sadd.s32 %s3487, %s3485
        %s3489 = smul.addr %s3483, 36
        %s3490 = sadd.s32 %s3488, %s3489
        %s3491 = smul.addr %s3490, 4
        %s3492 = scalar_lea.vmem %s4, %s3491
      $region48: #{tpu_custom_call.1} parent=43 // pred_fallthru
        _
    $region44: #{tpu_custom_call.1} parent=5 // pred_fallthru
      _
  $region6: #{tpu_custom_call.1} parent=0 // loop_footer
    %s14 = sadd.s32 1, %s10
  $region7: #{tpu_custom_call.1} parent=0 // loop_footer_branch
    %9 = sbr.rel target = $region3
  $region8: #{tpu_custom_call.1} parent=0 // loop_exit
    _

</llo_original>
